<compile_context>
chip_gen: v7x
topology: tpu7x:2x2x1
jax: 0.10.0
libtpu: 0.0.40
codegen_flags: <defaults>
</compile_context>

<pallas_src>
import jax
import jax.numpy as jnp
from jax.experimental import pallas as pl
from jax.experimental.pallas import tpu as pltpu

# ----------------------- hyper-parameters (small) --------------------------
P = 16        # window
M = 8         # data_m  (number of series)
HID_R = 32    # hidRNN
HID_C = 16    # hidCNN
HID_S = 4     # hidSkip
CK = 3        # CNN_kernel
SKIP = 4      # skip
HW = 4        # highway_window
B = 8         # batch size (fills the 8 f32 sublanes -> full-tile recurrence dots)

T = P - CK + 1            # conv output length            (14)
PT = (P - CK) // SKIP     # skip-GRU time steps           (3)
T0 = T - PT * SKIP        # first conv-time of skip path  (2)
N_SKIP = B * SKIP         # skip-GRU batch                (32)
G1 = 3 * HID_R            # GRU1 gate lanes               (96)
GS = 3 * HID_S            # skip gate lanes               (12)


# --------------------------- fused forward kernel ---------------------------
def _lstnet_kernel(xt_ref, cw_ref, cb_ref, win_ref, bin_ref,
                   whh1_ref, b1hn_ref, whhs_ref, bshn_ref,
                   wlr_ref, wls_ref, blin_ref, hww_ref, hwb_ref,
                   o_ref):
    xt = xt_ref[...]                                      # (P, B, M), time-major

    # ----------- conv1 (single im2col dot) + ReLU; rows t-major (t*B + b) ---
    # slab[t*B + b, k*M + m] = x[b, t+k, m]
    slab = jnp.concatenate(
        [xt[k:k + T].reshape(T * B, M) for k in range(CK)], axis=1)   # (T*B, CK*M)
    c_all = jnp.maximum(
        jnp.dot(slab, cw_ref[...], preferred_element_type=jnp.float32)
        + cb_ref[...], 0.0)                                           # (T*B, HID_C)

    # -------- hoisted fused input projections for BOTH GRUs (one dot) -------
    # lanes [0:96]   = GRU1 gates  (r|z|n), each HID_R wide  (b_hr/b_hz folded in)
    # lanes [96:108] = skip gates  (r|z|n), each HID_S wide  (b_hr/b_hz folded in)
    gi_all = (jnp.dot(c_all, win_ref[...], preferred_element_type=jnp.float32)
              + bin_ref[...])                                         # (T*B, 108)

    whh1 = whh1_ref[...]                                  # (HID_R, 3*HID_R)
    b1hn = b1hn_ref[...]                                  # (1, HID_R)
    whhs = whhs_ref[...]                                  # (HID_S, 3*HID_S)
    bshn = bshn_ref[...]                                  # (1, HID_S)

    # -------- GRU1 recurrence: one fused (B,32)@(32,96) dot per step --------
    H = HID_R
    h = jnp.zeros((B, HID_R), jnp.float32)
    for t in range(T):
        gi = gi_all[t * B:(t + 1) * B, :]                 # static sublane slice
        gh = jnp.dot(h, whh1, preferred_element_type=jnp.float32)     # (B, 96)
        r = jax.nn.sigmoid(gi[:, 0:H] + gh[:, 0:H])
        z = jax.nn.sigmoid(gi[:, H:2 * H] + gh[:, H:2 * H])
        n = jnp.tanh(gi[:, 2 * H:3 * H] + r * (gh[:, 2 * H:3 * H] + b1hn))
        h = (1.0 - z) * n + z * h                         # (B, HID_R)

    # -------- skip GRU: rows j-major within a step (row = j*B + b) ----------
    HS = HID_S
    hs = jnp.zeros((N_SKIP, HID_S), jnp.float32)
    for i in range(PT):
        lo = (T0 + i * SKIP) * B
        gi = gi_all[lo:lo + N_SKIP, :]                    # contiguous sublane block
        gh = jnp.dot(hs, whhs, preferred_element_type=jnp.float32)    # (N_SKIP, 12)
        r = jax.nn.sigmoid(gi[:, G1:G1 + HS] + gh[:, 0:HS])
        z = jax.nn.sigmoid(gi[:, G1 + HS:G1 + 2 * HS] + gh[:, HS:2 * HS])
        n = jnp.tanh(gi[:, G1 + 2 * HS:G1 + 3 * HS]
                     + r * (gh[:, 2 * HS:3 * HS] + bshn))
        hs = (1.0 - z) * n + z * hs                       # (N_SKIP, HID_S)

    # -------- linear1 on [r | s]; skip slots are static sublane slices ------
    res = (jnp.dot(h, wlr_ref[...], preferred_element_type=jnp.float32)
           + blin_ref[...])
    for j in range(SKIP):
        res = res + jnp.dot(hs[j * B:(j + 1) * B, :], wls_ref[j],
                            preferred_element_type=jnp.float32)

    # -------- highway term: scalar-weighted row adds (SMEM scalars) ---------
    hw = xt[P - HW] * hww_ref[0]
    for k in range(1, HW):
        hw = hw + xt[P - HW + k] * hww_ref[k]

    # output_fun is None -> identity
    o_ref[...] = res + hw + hwb_ref[0]


def lstnet_forward(x, kp):
    """Single fused pallas_call for the whole LSTNet forward pass.

    x: (B, P, M) float32.  The wrapper transposes to (P, B, M) so in-kernel
    rows are time-major sublane tiles (pure layout plumbing, no compute).
    """
    xt = jnp.transpose(x, (1, 0, 2))                      # (P, B, M)
    vmem = pl.BlockSpec(memory_space=pltpu.MemorySpace.VMEM)
    smem = pl.BlockSpec(memory_space=pltpu.MemorySpace.SMEM)
    return pl.pallas_call(
        _lstnet_kernel,
        out_shape=jax.ShapeDtypeStruct((x.shape[0], M), jnp.float32),
        in_specs=[vmem] * 12 + [smem, smem],
        out_specs=vmem,
    )(xt, kp['cw'], kp['cb'], kp['win'], kp['bin'],
      kp['whh1'], kp['b1hn'], kp['whhs'], kp['bshn'],
      kp['wlr'], kp['wls'], kp['blin'], kp['hww'], kp['hwb'])


# --------------------------- parameters (PyTorch-like) ----------------------
def init_params(key):
    ks = jax.random.split(key, 14)
    s = 0.1
    p = {}
    # BayesConv2d(1, hidC, (Ck, m)) -> mean weight (hidC, 1, Ck, m), squeezed
    p['conv_w'] = s * jax.random.normal(ks[0], (HID_C, CK, M), jnp.float32)
    p['conv_b'] = s * jax.random.normal(ks[1], (HID_C,), jnp.float32)
    # GRU1(hidC -> hidR), PyTorch layout (3H, in), gate order (r, z, n)
    p['gru1_wih'] = s * jax.random.normal(ks[2], (3 * HID_R, HID_C), jnp.float32)
    p['gru1_whh'] = s * jax.random.normal(ks[3], (3 * HID_R, HID_R), jnp.float32)
    p['gru1_bih'] = s * jax.random.normal(ks[4], (3 * HID_R,), jnp.float32)
    p['gru1_bhh'] = s * jax.random.normal(ks[5], (3 * HID_R,), jnp.float32)
    # GRUskip(hidC -> hidS)
    p['grus_wih'] = s * jax.random.normal(ks[6], (3 * HID_S, HID_C), jnp.float32)
    p['grus_whh'] = s * jax.random.normal(ks[7], (3 * HID_S, HID_S), jnp.float32)
    p['grus_bih'] = s * jax.random.normal(ks[8], (3 * HID_S,), jnp.float32)
    p['grus_bhh'] = s * jax.random.normal(ks[9], (3 * HID_S,), jnp.float32)
    # BayesLinear(hidR + skip*hidS -> m)
    f_in = HID_R + SKIP * HID_S
    p['lin1_w'] = s * jax.random.normal(ks[10], (M, f_in), jnp.float32)
    p['lin1_b'] = s * jax.random.normal(ks[11], (M,), jnp.float32)
    # highway BayesLinear(hw -> 1)
    p['hw_w'] = s * jax.random.normal(ks[12], (1, HW), jnp.float32)
    p['hw_b'] = s * jax.random.normal(ks[13], (1,), jnp.float32)
    return p


def prepare_kernel_params(p):
    """One-time host-side weight re-layout: im2col conv weight, lane-packed
    fused gate weights (r|z|n), folded r/z hidden biases, split linear1."""
    def gates_w(w, h):   # (3h, in) PyTorch -> [(in, h)] * 3, gate order r,z,n
        return [w[g * h:(g + 1) * h, :].T for g in range(3)]

    def gates_b(b, h):
        return [b[g * h:(g + 1) * h] for g in range(3)]

    kp = {}
    # conv im2col: cw[k*M + m, ch] = conv_w[ch, k, m]
    kp['cw'] = p['conv_w'].reshape(HID_C, CK * M).T                   # (CK*M, HID_C)
    kp['cb'] = p['conv_b'].reshape(1, HID_C)

    w1 = gates_w(p['gru1_wih'], HID_R)                                # 3 x (HID_C, HID_R)
    ws = gates_w(p['grus_wih'], HID_S)                                # 3 x (HID_C, HID_S)
    kp['win'] = jnp.concatenate(w1 + ws, axis=1)                      # (HID_C, 108)

    b1i = gates_b(p['gru1_bih'], HID_R)
    b1h = gates_b(p['gru1_bhh'], HID_R)
    bsi = gates_b(p['grus_bih'], HID_S)
    bsh = gates_b(p['grus_bhh'], HID_S)
    # fold b_hr / b_hz into the input-side bias; b_hn must stay inside r*(gh_n+b_hn)
    kp['bin'] = jnp.concatenate(
        [b1i[0] + b1h[0], b1i[1] + b1h[1], b1i[2],
         bsi[0] + bsh[0], bsi[1] + bsh[1], bsi[2]]).reshape(1, G1 + GS)

    kp['whh1'] = jnp.concatenate(gates_w(p['gru1_whh'], HID_R), axis=1)  # (32, 96)
    kp['b1hn'] = b1h[2].reshape(1, HID_R)
    kp['whhs'] = jnp.concatenate(gates_w(p['grus_whh'], HID_S), axis=1)  # (4, 12)
    kp['bshn'] = bsh[2].reshape(1, HID_S)

    # linear1 split into the r-part and per-skip-slot s-parts
    kp['wlr'] = p['lin1_w'][:, :HID_R].T                              # (HID_R, M)
    kp['wls'] = jnp.stack(
        [p['lin1_w'][:, HID_R + j * HID_S: HID_R + (j + 1) * HID_S].T
         for j in range(SKIP)], axis=0)                               # (SKIP, HID_S, M)
    kp['blin'] = p['lin1_b'].reshape(1, M)

    # highway weights as SMEM scalars
    kp['hww'] = p['hw_w'].reshape(HW)                                 # (HW,)
    kp['hwb'] = p['hw_b'].reshape(1)                                  # (1,)
    return kp


# --------------------------- pure-JAX reference -----------------------------
def lstnet_reference(x, p):
    """Straightforward JAX port of the PyTorch forward (eval mode)."""
    hp = jax.lax.Precision.HIGHEST
    bx = x.shape[0]
    # conv1 + ReLU
    slab = jnp.concatenate([x[:, k:k + T, :] for k in range(CK)], axis=2)  # (B,T,CK*M)
    cw = p['conv_w'].reshape(HID_C, CK * M)
    c = jax.nn.relu(jnp.einsum('btk,ck->btc', slab, cw, precision=hp)
                    + p['conv_b'])                                         # (B,T,HID_C)

    def gru_cell(h, xin, wih, whh, bih, bhh, hd):
        gi = jnp.dot(xin, wih.T, precision=hp) + bih
        gh = jnp.dot(h, whh.T, precision=hp) + bhh
        r = jax.nn.sigmoid(gi[:, :hd] + gh[:, :hd])
        z = jax.nn.sigmoid(gi[:, hd:2 * hd] + gh[:, hd:2 * hd])
        n = jnp.tanh(gi[:, 2 * hd:] + r * gh[:, 2 * hd:])
        return (1.0 - z) * n + z * h

    h = jnp.zeros((bx, HID_R), jnp.float32)
    for t in range(T):
        h = gru_cell(h, c[:, t, :], p['gru1_wih'], p['gru1_whh'],
                     p['gru1_bih'], p['gru1_bhh'], HID_R)

    hs = jnp.zeros((bx * SKIP, HID_S), jnp.float32)
    for i in range(PT):
        xin = jnp.stack([c[b, T0 + i * SKIP + j, :]
                         for b in range(bx) for j in range(SKIP)], axis=0)
        hs = gru_cell(hs, xin, p['grus_wih'], p['grus_whh'],
                      p['grus_bih'], p['grus_bhh'], HID_S)
    s = hs.reshape(bx, SKIP * HID_S)

    rcat = jnp.concatenate([h, s], axis=1)
    res = jnp.dot(rcat, p['lin1_w'].T, precision=hp) + p['lin1_b']
    zhw = jnp.einsum('bkm,k->bm', x[:, P - HW:, :], p['hw_w'][0],
                     precision=hp) + p['hw_b'][0]
    return res + zhw


if __name__ == "__main__":
    key = jax.random.PRNGKey(0)
    kx, kparam = jax.random.split(key)
    x = jax.random.normal(kx, (B, P, M), dtype=jnp.float32)
    params = init_params(kparam)
    kparams = prepare_kernel_params(params)     # one-time weight re-layout

    out = lstnet_forward(x, kparams)
    out = jax.block_until_ready(out)
    assert out.shape == (B, M) and out.dtype == jnp.float32
    assert bool(jnp.all(jnp.isfinite(out)))

    ref = lstnet_reference(x, params)
    err = float(jnp.max(jnp.abs(out - ref)))
    assert err < 5e-3, f"kernel/reference mismatch: max abs err = {err}"
    print("KERNEL_OK")
</pallas_src>

<mosaic_0001>
module attributes {stable_mosaic.version = 11 : i64} {
  func.func @_lstnet_kernel(%arg0: memref<16x8x8xf32, #tpu.memory_space<vmem>>, %arg1: memref<24x16xf32, #tpu.memory_space<vmem>>, %arg2: memref<1x16xf32, #tpu.memory_space<vmem>>, %arg3: memref<16x108xf32, #tpu.memory_space<vmem>>, %arg4: memref<1x108xf32, #tpu.memory_space<vmem>>, %arg5: memref<32x96xf32, #tpu.memory_space<vmem>>, %arg6: memref<1x32xf32, #tpu.memory_space<vmem>>, %arg7: memref<4x12xf32, #tpu.memory_space<vmem>>, %arg8: memref<1x4xf32, #tpu.memory_space<vmem>>, %arg9: memref<32x8xf32, #tpu.memory_space<vmem>>, %arg10: memref<4x4x8xf32, #tpu.memory_space<vmem>>, %arg11: memref<1x8xf32, #tpu.memory_space<vmem>>, %arg12: memref<4xf32, #tpu.memory_space<smem>>, %arg13: memref<1xf32, #tpu.memory_space<smem>>, %arg14: memref<8x8xf32, #tpu.memory_space<vmem>>) attributes {dimension_semantics = [], scalar_prefetch = 0 : i64, scratch_operands = 0 : i64, tpu.core_type = #tpu.core_type<tc>} {
    %c0 = arith.constant 0 : index
    %c0_0 = arith.constant 0 : index
    %c0_1 = arith.constant 0 : index
    %0 = vector.load %arg0[%c0, %c0_0, %c0_1] : memref<16x8x8xf32, #tpu.memory_space<vmem>>, vector<16x8x8xf32>
    %1 = vector.extract_strided_slice %0 {offsets = [0, 0, 0], sizes = [14, 8, 8], strides = [1, 1, 1]} : vector<16x8x8xf32> to vector<14x8x8xf32>
    %2 = vector.shape_cast %1 : vector<14x8x8xf32> to vector<112x8xf32>
    %3 = vector.extract_strided_slice %0 {offsets = [1, 0, 0], sizes = [14, 8, 8], strides = [1, 1, 1]} : vector<16x8x8xf32> to vector<14x8x8xf32>
    %4 = vector.shape_cast %3 : vector<14x8x8xf32> to vector<112x8xf32>
    %5 = vector.extract_strided_slice %0 {offsets = [2, 0, 0], sizes = [14, 8, 8], strides = [1, 1, 1]} : vector<16x8x8xf32> to vector<14x8x8xf32>
    %6 = vector.shape_cast %5 : vector<14x8x8xf32> to vector<112x8xf32>
    %7 = tpu.concatenate %2, %4, %6 in 1 : vector<112x8xf32>, vector<112x8xf32>, vector<112x8xf32> -> vector<112x24xf32>
    %c0_2 = arith.constant 0 : index
    %c0_3 = arith.constant 0 : index
    %8 = vector.load %arg1[%c0_2, %c0_3] : memref<24x16xf32, #tpu.memory_space<vmem>>, vector<24x16xf32>
    %cst = arith.constant dense<0.000000e+00> : vector<112x16xf32>
    %9 = tpu.matmul %7, %8, %cst {dimension_numbers = #tpu.dot_dimension_numbers<[1], [0], [0], [1], [0, 0, 1, 1], [], []>} : vector<112x24xf32>, vector<24x16xf32>, vector<112x16xf32> -> vector<112x16xf32>
    %c0_4 = arith.constant 0 : index
    %c0_5 = arith.constant 0 : index
    %10 = vector.load %arg2[%c0_4, %c0_5] : memref<1x16xf32, #tpu.memory_space<vmem>>, vector<1x16xf32>
    %11 = vector.broadcast %10 : vector<1x16xf32> to vector<112x16xf32>
    %12 = arith.addf %9, %11 : vector<112x16xf32>
    %cst_6 = arith.constant 0.000000e+00 : f32
    %13 = vector.broadcast %cst_6 : f32 to vector<112x16xf32>
    %14 = arith.maximumf %12, %13 : vector<112x16xf32>
    %c0_7 = arith.constant 0 : index
    %c0_8 = arith.constant 0 : index
    %15 = vector.load %arg3[%c0_7, %c0_8] : memref<16x108xf32, #tpu.memory_space<vmem>>, vector<16x108xf32>
    %cst_9 = arith.constant dense<0.000000e+00> : vector<112x108xf32>
    %16 = tpu.matmul %14, %15, %cst_9 {dimension_numbers = #tpu.dot_dimension_numbers<[1], [0], [0], [1], [0, 0, 1, 1], [], []>} : vector<112x16xf32>, vector<16x108xf32>, vector<112x108xf32> -> vector<112x108xf32>
    %c0_10 = arith.constant 0 : index
    %c0_11 = arith.constant 0 : index
    %17 = vector.load %arg4[%c0_10, %c0_11] : memref<1x108xf32, #tpu.memory_space<vmem>>, vector<1x108xf32>
    %18 = vector.broadcast %17 : vector<1x108xf32> to vector<112x108xf32>
    %19 = arith.addf %16, %18 : vector<112x108xf32>
    %c0_12 = arith.constant 0 : index
    %c0_13 = arith.constant 0 : index
    %20 = vector.load %arg5[%c0_12, %c0_13] : memref<32x96xf32, #tpu.memory_space<vmem>>, vector<32x96xf32>
    %c0_14 = arith.constant 0 : index
    %c0_15 = arith.constant 0 : index
    %21 = vector.load %arg6[%c0_14, %c0_15] : memref<1x32xf32, #tpu.memory_space<vmem>>, vector<1x32xf32>
    %c0_16 = arith.constant 0 : index
    %c0_17 = arith.constant 0 : index
    %22 = vector.load %arg7[%c0_16, %c0_17] : memref<4x12xf32, #tpu.memory_space<vmem>>, vector<4x12xf32>
    %c0_18 = arith.constant 0 : index
    %c0_19 = arith.constant 0 : index
    %23 = vector.load %arg8[%c0_18, %c0_19] : memref<1x4xf32, #tpu.memory_space<vmem>>, vector<1x4xf32>
    %cst_20 = arith.constant 0.000000e+00 : f32
    %24 = vector.broadcast %cst_20 : f32 to vector<8x32xf32>
    %25 = vector.extract_strided_slice %19 {offsets = [0, 0], sizes = [8, 108], strides = [1, 1]} : vector<112x108xf32> to vector<8x108xf32>
    %cst_21 = arith.constant dense<0.000000e+00> : vector<8x96xf32>
    %26 = tpu.matmul %24, %20, %cst_21 {dimension_numbers = #tpu.dot_dimension_numbers<[1], [0], [0], [1], [0, 0, 1, 1], [], []>} : vector<8x32xf32>, vector<32x96xf32>, vector<8x96xf32> -> vector<8x96xf32>
    %27 = vector.extract_strided_slice %25 {offsets = [0, 0], sizes = [8, 32], strides = [1, 1]} : vector<8x108xf32> to vector<8x32xf32>
    %28 = vector.extract_strided_slice %26 {offsets = [0, 0], sizes = [8, 32], strides = [1, 1]} : vector<8x96xf32> to vector<8x32xf32>
    %29 = arith.addf %27, %28 : vector<8x32xf32>
    %30 = arith.negf %29 : vector<8x32xf32>
    %31 = math.exp %30 : vector<8x32xf32>
    %cst_22 = arith.constant 1.000000e+00 : f32
    %32 = vector.broadcast %cst_22 : f32 to vector<8x32xf32>
    %33 = arith.addf %32, %31 : vector<8x32xf32>
    %34 = arith.divf %32, %33 : vector<8x32xf32>
    %35 = vector.extract_strided_slice %25 {offsets = [0, 32], sizes = [8, 32], strides = [1, 1]} : vector<8x108xf32> to vector<8x32xf32>
    %36 = vector.extract_strided_slice %26 {offsets = [0, 32], sizes = [8, 32], strides = [1, 1]} : vector<8x96xf32> to vector<8x32xf32>
    %37 = arith.addf %35, %36 : vector<8x32xf32>
    %38 = arith.negf %37 : vector<8x32xf32>
    %39 = math.exp %38 : vector<8x32xf32>
    %cst_23 = arith.constant 1.000000e+00 : f32
    %40 = vector.broadcast %cst_23 : f32 to vector<8x32xf32>
    %41 = arith.addf %40, %39 : vector<8x32xf32>
    %42 = arith.divf %40, %41 : vector<8x32xf32>
    %43 = vector.extract_strided_slice %25 {offsets = [0, 64], sizes = [8, 32], strides = [1, 1]} : vector<8x108xf32> to vector<8x32xf32>
    %44 = vector.extract_strided_slice %26 {offsets = [0, 64], sizes = [8, 32], strides = [1, 1]} : vector<8x96xf32> to vector<8x32xf32>
    %45 = vector.broadcast %21 : vector<1x32xf32> to vector<8x32xf32>
    %46 = arith.addf %44, %45 : vector<8x32xf32>
    %47 = arith.mulf %34, %46 : vector<8x32xf32>
    %48 = arith.addf %43, %47 : vector<8x32xf32>
    %49 = math.tanh %48 : vector<8x32xf32>
    %cst_24 = arith.constant 1.000000e+00 : f32
    %50 = vector.broadcast %cst_24 : f32 to vector<8x32xf32>
    %51 = arith.subf %50, %42 : vector<8x32xf32>
    %52 = arith.mulf %51, %49 : vector<8x32xf32>
    %53 = arith.mulf %42, %24 : vector<8x32xf32>
    %54 = arith.addf %52, %53 : vector<8x32xf32>
    %55 = vector.extract_strided_slice %19 {offsets = [8, 0], sizes = [8, 108], strides = [1, 1]} : vector<112x108xf32> to vector<8x108xf32>
    %cst_25 = arith.constant dense<0.000000e+00> : vector<8x96xf32>
    %56 = tpu.matmul %54, %20, %cst_25 {dimension_numbers = #tpu.dot_dimension_numbers<[1], [0], [0], [1], [0, 0, 1, 1], [], []>} : vector<8x32xf32>, vector<32x96xf32>, vector<8x96xf32> -> vector<8x96xf32>
    %57 = vector.extract_strided_slice %55 {offsets = [0, 0], sizes = [8, 32], strides = [1, 1]} : vector<8x108xf32> to vector<8x32xf32>
    %58 = vector.extract_strided_slice %56 {offsets = [0, 0], sizes = [8, 32], strides = [1, 1]} : vector<8x96xf32> to vector<8x32xf32>
    %59 = arith.addf %57, %58 : vector<8x32xf32>
    %60 = arith.negf %59 : vector<8x32xf32>
    %61 = math.exp %60 : vector<8x32xf32>
    %cst_26 = arith.constant 1.000000e+00 : f32
    %62 = vector.broadcast %cst_26 : f32 to vector<8x32xf32>
    %63 = arith.addf %62, %61 : vector<8x32xf32>
    %64 = arith.divf %62, %63 : vector<8x32xf32>
    %65 = vector.extract_strided_slice %55 {offsets = [0, 32], sizes = [8, 32], strides = [1, 1]} : vector<8x108xf32> to vector<8x32xf32>
    %66 = vector.extract_strided_slice %56 {offsets = [0, 32], sizes = [8, 32], strides = [1, 1]} : vector<8x96xf32> to vector<8x32xf32>
    %67 = arith.addf %65, %66 : vector<8x32xf32>
    %68 = arith.negf %67 : vector<8x32xf32>
    %69 = math.exp %68 : vector<8x32xf32>
    %cst_27 = arith.constant 1.000000e+00 : f32
    %70 = vector.broadcast %cst_27 : f32 to vector<8x32xf32>
    %71 = arith.addf %70, %69 : vector<8x32xf32>
    %72 = arith.divf %70, %71 : vector<8x32xf32>
    %73 = vector.extract_strided_slice %55 {offsets = [0, 64], sizes = [8, 32], strides = [1, 1]} : vector<8x108xf32> to vector<8x32xf32>
    %74 = vector.extract_strided_slice %56 {offsets = [0, 64], sizes = [8, 32], strides = [1, 1]} : vector<8x96xf32> to vector<8x32xf32>
    %75 = vector.broadcast %21 : vector<1x32xf32> to vector<8x32xf32>
    %76 = arith.addf %74, %75 : vector<8x32xf32>
    %77 = arith.mulf %64, %76 : vector<8x32xf32>
    %78 = arith.addf %73, %77 : vector<8x32xf32>
    %79 = math.tanh %78 : vector<8x32xf32>
    %cst_28 = arith.constant 1.000000e+00 : f32
    %80 = vector.broadcast %cst_28 : f32 to vector<8x32xf32>
    %81 = arith.subf %80, %72 : vector<8x32xf32>
    %82 = arith.mulf %81, %79 : vector<8x32xf32>
    %83 = arith.mulf %72, %54 : vector<8x32xf32>
    %84 = arith.addf %82, %83 : vector<8x32xf32>
    %85 = vector.extract_strided_slice %19 {offsets = [16, 0], sizes = [8, 108], strides = [1, 1]} : vector<112x108xf32> to vector<8x108xf32>
    %cst_29 = arith.constant dense<0.000000e+00> : vector<8x96xf32>
    %86 = tpu.matmul %84, %20, %cst_29 {dimension_numbers = #tpu.dot_dimension_numbers<[1], [0], [0], [1], [0, 0, 1, 1], [], []>} : vector<8x32xf32>, vector<32x96xf32>, vector<8x96xf32> -> vector<8x96xf32>
    %87 = vector.extract_strided_slice %85 {offsets = [0, 0], sizes = [8, 32], strides = [1, 1]} : vector<8x108xf32> to vector<8x32xf32>
    %88 = vector.extract_strided_slice %86 {offsets = [0, 0], sizes = [8, 32], strides = [1, 1]} : vector<8x96xf32> to vector<8x32xf32>
    %89 = arith.addf %87, %88 : vector<8x32xf32>
    %90 = arith.negf %89 : vector<8x32xf32>
    %91 = math.exp %90 : vector<8x32xf32>
    %cst_30 = arith.constant 1.000000e+00 : f32
    %92 = vector.broadcast %cst_30 : f32 to vector<8x32xf32>
    %93 = arith.addf %92, %91 : vector<8x32xf32>
    %94 = arith.divf %92, %93 : vector<8x32xf32>
    %95 = vector.extract_strided_slice %85 {offsets = [0, 32], sizes = [8, 32], strides = [1, 1]} : vector<8x108xf32> to vector<8x32xf32>
    %96 = vector.extract_strided_slice %86 {offsets = [0, 32], sizes = [8, 32], strides = [1, 1]} : vector<8x96xf32> to vector<8x32xf32>
    %97 = arith.addf %95, %96 : vector<8x32xf32>
    %98 = arith.negf %97 : vector<8x32xf32>
    %99 = math.exp %98 : vector<8x32xf32>
    %cst_31 = arith.constant 1.000000e+00 : f32
    %100 = vector.broadcast %cst_31 : f32 to vector<8x32xf32>
    %101 = arith.addf %100, %99 : vector<8x32xf32>
    %102 = arith.divf %100, %101 : vector<8x32xf32>
    %103 = vector.extract_strided_slice %85 {offsets = [0, 64], sizes = [8, 32], strides = [1, 1]} : vector<8x108xf32> to vector<8x32xf32>
    %104 = vector.extract_strided_slice %86 {offsets = [0, 64], sizes = [8, 32], strides = [1, 1]} : vector<8x96xf32> to vector<8x32xf32>
    %105 = vector.broadcast %21 : vector<1x32xf32> to vector<8x32xf32>
    %106 = arith.addf %104, %105 : vector<8x32xf32>
    %107 = arith.mulf %94, %106 : vector<8x32xf32>
    %108 = arith.addf %103, %107 : vector<8x32xf32>
    %109 = math.tanh %108 : vector<8x32xf32>
    %cst_32 = arith.constant 1.000000e+00 : f32
    %110 = vector.broadcast %cst_32 : f32 to vector<8x32xf32>
    %111 = arith.subf %110, %102 : vector<8x32xf32>
    %112 = arith.mulf %111, %109 : vector<8x32xf32>
    %113 = arith.mulf %102, %84 : vector<8x32xf32>
    %114 = arith.addf %112, %113 : vector<8x32xf32>
    %115 = vector.extract_strided_slice %19 {offsets = [24, 0], sizes = [8, 108], strides = [1, 1]} : vector<112x108xf32> to vector<8x108xf32>
    %cst_33 = arith.constant dense<0.000000e+00> : vector<8x96xf32>
    %116 = tpu.matmul %114, %20, %cst_33 {dimension_numbers = #tpu.dot_dimension_numbers<[1], [0], [0], [1], [0, 0, 1, 1], [], []>} : vector<8x32xf32>, vector<32x96xf32>, vector<8x96xf32> -> vector<8x96xf32>
    %117 = vector.extract_strided_slice %115 {offsets = [0, 0], sizes = [8, 32], strides = [1, 1]} : vector<8x108xf32> to vector<8x32xf32>
    %118 = vector.extract_strided_slice %116 {offsets = [0, 0], sizes = [8, 32], strides = [1, 1]} : vector<8x96xf32> to vector<8x32xf32>
    %119 = arith.addf %117, %118 : vector<8x32xf32>
    %120 = arith.negf %119 : vector<8x32xf32>
    %121 = math.exp %120 : vector<8x32xf32>
    %cst_34 = arith.constant 1.000000e+00 : f32
    %122 = vector.broadcast %cst_34 : f32 to vector<8x32xf32>
    %123 = arith.addf %122, %121 : vector<8x32xf32>
    %124 = arith.divf %122, %123 : vector<8x32xf32>
    %125 = vector.extract_strided_slice %115 {offsets = [0, 32], sizes = [8, 32], strides = [1, 1]} : vector<8x108xf32> to vector<8x32xf32>
    %126 = vector.extract_strided_slice %116 {offsets = [0, 32], sizes = [8, 32], strides = [1, 1]} : vector<8x96xf32> to vector<8x32xf32>
    %127 = arith.addf %125, %126 : vector<8x32xf32>
    %128 = arith.negf %127 : vector<8x32xf32>
    %129 = math.exp %128 : vector<8x32xf32>
    %cst_35 = arith.constant 1.000000e+00 : f32
    %130 = vector.broadcast %cst_35 : f32 to vector<8x32xf32>
    %131 = arith.addf %130, %129 : vector<8x32xf32>
    %132 = arith.divf %130, %131 : vector<8x32xf32>
    %133 = vector.extract_strided_slice %115 {offsets = [0, 64], sizes = [8, 32], strides = [1, 1]} : vector<8x108xf32> to vector<8x32xf32>
    %134 = vector.extract_strided_slice %116 {offsets = [0, 64], sizes = [8, 32], strides = [1, 1]} : vector<8x96xf32> to vector<8x32xf32>
    %135 = vector.broadcast %21 : vector<1x32xf32> to vector<8x32xf32>
    %136 = arith.addf %134, %135 : vector<8x32xf32>
    %137 = arith.mulf %124, %136 : vector<8x32xf32>
    %138 = arith.addf %133, %137 : vector<8x32xf32>
    %139 = math.tanh %138 : vector<8x32xf32>
    %cst_36 = arith.constant 1.000000e+00 : f32
    %140 = vector.broadcast %cst_36 : f32 to vector<8x32xf32>
    %141 = arith.subf %140, %132 : vector<8x32xf32>
    %142 = arith.mulf %141, %139 : vector<8x32xf32>
    %143 = arith.mulf %132, %114 : vector<8x32xf32>
    %144 = arith.addf %142, %143 : vector<8x32xf32>
    %145 = vector.extract_strided_slice %19 {offsets = [32, 0], sizes = [8, 108], strides = [1, 1]} : vector<112x108xf32> to vector<8x108xf32>
    %cst_37 = arith.constant dense<0.000000e+00> : vector<8x96xf32>
    %146 = tpu.matmul %144, %20, %cst_37 {dimension_numbers = #tpu.dot_dimension_numbers<[1], [0], [0], [1], [0, 0, 1, 1], [], []>} : vector<8x32xf32>, vector<32x96xf32>, vector<8x96xf32> -> vector<8x96xf32>
    %147 = vector.extract_strided_slice %145 {offsets = [0, 0], sizes = [8, 32], strides = [1, 1]} : vector<8x108xf32> to vector<8x32xf32>
    %148 = vector.extract_strided_slice %146 {offsets = [0, 0], sizes = [8, 32], strides = [1, 1]} : vector<8x96xf32> to vector<8x32xf32>
    %149 = arith.addf %147, %148 : vector<8x32xf32>
    %150 = arith.negf %149 : vector<8x32xf32>
    %151 = math.exp %150 : vector<8x32xf32>
    %cst_38 = arith.constant 1.000000e+00 : f32
    %152 = vector.broadcast %cst_38 : f32 to vector<8x32xf32>
    %153 = arith.addf %152, %151 : vector<8x32xf32>
    %154 = arith.divf %152, %153 : vector<8x32xf32>
    %155 = vector.extract_strided_slice %145 {offsets = [0, 32], sizes = [8, 32], strides = [1, 1]} : vector<8x108xf32> to vector<8x32xf32>
    %156 = vector.extract_strided_slice %146 {offsets = [0, 32], sizes = [8, 32], strides = [1, 1]} : vector<8x96xf32> to vector<8x32xf32>
    %157 = arith.addf %155, %156 : vector<8x32xf32>
    %158 = arith.negf %157 : vector<8x32xf32>
    %159 = math.exp %158 : vector<8x32xf32>
    %cst_39 = arith.constant 1.000000e+00 : f32
    %160 = vector.broadcast %cst_39 : f32 to vector<8x32xf32>
    %161 = arith.addf %160, %159 : vector<8x32xf32>
    %162 = arith.divf %160, %161 : vector<8x32xf32>
    %163 = vector.extract_strided_slice %145 {offsets = [0, 64], sizes = [8, 32], strides = [1, 1]} : vector<8x108xf32> to vector<8x32xf32>
    %164 = vector.extract_strided_slice %146 {offsets = [0, 64], sizes = [8, 32], strides = [1, 1]} : vector<8x96xf32> to vector<8x32xf32>
    %165 = vector.broadcast %21 : vector<1x32xf32> to vector<8x32xf32>
    %166 = arith.addf %164, %165 : vector<8x32xf32>
    %167 = arith.mulf %154, %166 : vector<8x32xf32>
    %168 = arith.addf %163, %167 : vector<8x32xf32>
    %169 = math.tanh %168 : vector<8x32xf32>
    %cst_40 = arith.constant 1.000000e+00 : f32
    %170 = vector.broadcast %cst_40 : f32 to vector<8x32xf32>
    %171 = arith.subf %170, %162 : vector<8x32xf32>
    %172 = arith.mulf %171, %169 : vector<8x32xf32>
    %173 = arith.mulf %162, %144 : vector<8x32xf32>
    %174 = arith.addf %172, %173 : vector<8x32xf32>
    %175 = vector.extract_strided_slice %19 {offsets = [40, 0], sizes = [8, 108], strides = [1, 1]} : vector<112x108xf32> to vector<8x108xf32>
    %cst_41 = arith.constant dense<0.000000e+00> : vector<8x96xf32>
    %176 = tpu.matmul %174, %20, %cst_41 {dimension_numbers = #tpu.dot_dimension_numbers<[1], [0], [0], [1], [0, 0, 1, 1], [], []>} : vector<8x32xf32>, vector<32x96xf32>, vector<8x96xf32> -> vector<8x96xf32>
    %177 = vector.extract_strided_slice %175 {offsets = [0, 0], sizes = [8, 32], strides = [1, 1]} : vector<8x108xf32> to vector<8x32xf32>
    %178 = vector.extract_strided_slice %176 {offsets = [0, 0], sizes = [8, 32], strides = [1, 1]} : vector<8x96xf32> to vector<8x32xf32>
    %179 = arith.addf %177, %178 : vector<8x32xf32>
    %180 = arith.negf %179 : vector<8x32xf32>
    %181 = math.exp %180 : vector<8x32xf32>
    %cst_42 = arith.constant 1.000000e+00 : f32
    %182 = vector.broadcast %cst_42 : f32 to vector<8x32xf32>
    %183 = arith.addf %182, %181 : vector<8x32xf32>
    %184 = arith.divf %182, %183 : vector<8x32xf32>
    %185 = vector.extract_strided_slice %175 {offsets = [0, 32], sizes = [8, 32], strides = [1, 1]} : vector<8x108xf32> to vector<8x32xf32>
    %186 = vector.extract_strided_slice %176 {offsets = [0, 32], sizes = [8, 32], strides = [1, 1]} : vector<8x96xf32> to vector<8x32xf32>
    %187 = arith.addf %185, %186 : vector<8x32xf32>
    %188 = arith.negf %187 : vector<8x32xf32>
    %189 = math.exp %188 : vector<8x32xf32>
    %cst_43 = arith.constant 1.000000e+00 : f32
    %190 = vector.broadcast %cst_43 : f32 to vector<8x32xf32>
    %191 = arith.addf %190, %189 : vector<8x32xf32>
    %192 = arith.divf %190, %191 : vector<8x32xf32>
    %193 = vector.extract_strided_slice %175 {offsets = [0, 64], sizes = [8, 32], strides = [1, 1]} : vector<8x108xf32> to vector<8x32xf32>
    %194 = vector.extract_strided_slice %176 {offsets = [0, 64], sizes = [8, 32], strides = [1, 1]} : vector<8x96xf32> to vector<8x32xf32>
    %195 = vector.broadcast %21 : vector<1x32xf32> to vector<8x32xf32>
    %196 = arith.addf %194, %195 : vector<8x32xf32>
    %197 = arith.mulf %184, %196 : vector<8x32xf32>
    %198 = arith.addf %193, %197 : vector<8x32xf32>
    %199 = math.tanh %198 : vector<8x32xf32>
    %cst_44 = arith.constant 1.000000e+00 : f32
    %200 = vector.broadcast %cst_44 : f32 to vector<8x32xf32>
    %201 = arith.subf %200, %192 : vector<8x32xf32>
    %202 = arith.mulf %201, %199 : vector<8x32xf32>
    %203 = arith.mulf %192, %174 : vector<8x32xf32>
    %204 = arith.addf %202, %203 : vector<8x32xf32>
    %205 = vector.extract_strided_slice %19 {offsets = [48, 0], sizes = [8, 108], strides = [1, 1]} : vector<112x108xf32> to vector<8x108xf32>
    %cst_45 = arith.constant dense<0.000000e+00> : vector<8x96xf32>
    %206 = tpu.matmul %204, %20, %cst_45 {dimension_numbers = #tpu.dot_dimension_numbers<[1], [0], [0], [1], [0, 0, 1, 1], [], []>} : vector<8x32xf32>, vector<32x96xf32>, vector<8x96xf32> -> vector<8x96xf32>
    %207 = vector.extract_strided_slice %205 {offsets = [0, 0], sizes = [8, 32], strides = [1, 1]} : vector<8x108xf32> to vector<8x32xf32>
    %208 = vector.extract_strided_slice %206 {offsets = [0, 0], sizes = [8, 32], strides = [1, 1]} : vector<8x96xf32> to vector<8x32xf32>
    %209 = arith.addf %207, %208 : vector<8x32xf32>
    %210 = arith.negf %209 : vector<8x32xf32>
    %211 = math.exp %210 : vector<8x32xf32>
    %cst_46 = arith.constant 1.000000e+00 : f32
    %212 = vector.broadcast %cst_46 : f32 to vector<8x32xf32>
    %213 = arith.addf %212, %211 : vector<8x32xf32>
    %214 = arith.divf %212, %213 : vector<8x32xf32>
    %215 = vector.extract_strided_slice %205 {offsets = [0, 32], sizes = [8, 32], strides = [1, 1]} : vector<8x108xf32> to vector<8x32xf32>
    %216 = vector.extract_strided_slice %206 {offsets = [0, 32], sizes = [8, 32], strides = [1, 1]} : vector<8x96xf32> to vector<8x32xf32>
    %217 = arith.addf %215, %216 : vector<8x32xf32>
    %218 = arith.negf %217 : vector<8x32xf32>
    %219 = math.exp %218 : vector<8x32xf32>
    %cst_47 = arith.constant 1.000000e+00 : f32
    %220 = vector.broadcast %cst_47 : f32 to vector<8x32xf32>
    %221 = arith.addf %220, %219 : vector<8x32xf32>
    %222 = arith.divf %220, %221 : vector<8x32xf32>
    %223 = vector.extract_strided_slice %205 {offsets = [0, 64], sizes = [8, 32], strides = [1, 1]} : vector<8x108xf32> to vector<8x32xf32>
    %224 = vector.extract_strided_slice %206 {offsets = [0, 64], sizes = [8, 32], strides = [1, 1]} : vector<8x96xf32> to vector<8x32xf32>
    %225 = vector.broadcast %21 : vector<1x32xf32> to vector<8x32xf32>
    %226 = arith.addf %224, %225 : vector<8x32xf32>
    %227 = arith.mulf %214, %226 : vector<8x32xf32>
    %228 = arith.addf %223, %227 : vector<8x32xf32>
    %229 = math.tanh %228 : vector<8x32xf32>
    %cst_48 = arith.constant 1.000000e+00 : f32
    %230 = vector.broadcast %cst_48 : f32 to vector<8x32xf32>
    %231 = arith.subf %230, %222 : vector<8x32xf32>
    %232 = arith.mulf %231, %229 : vector<8x32xf32>
    %233 = arith.mulf %222, %204 : vector<8x32xf32>
    %234 = arith.addf %232, %233 : vector<8x32xf32>
    %235 = vector.extract_strided_slice %19 {offsets = [56, 0], sizes = [8, 108], strides = [1, 1]} : vector<112x108xf32> to vector<8x108xf32>
    %cst_49 = arith.constant dense<0.000000e+00> : vector<8x96xf32>
    %236 = tpu.matmul %234, %20, %cst_49 {dimension_numbers = #tpu.dot_dimension_numbers<[1], [0], [0], [1], [0, 0, 1, 1], [], []>} : vector<8x32xf32>, vector<32x96xf32>, vector<8x96xf32> -> vector<8x96xf32>
    %237 = vector.extract_strided_slice %235 {offsets = [0, 0], sizes = [8, 32], strides = [1, 1]} : vector<8x108xf32> to vector<8x32xf32>
    %238 = vector.extract_strided_slice %236 {offsets = [0, 0], sizes = [8, 32], strides = [1, 1]} : vector<8x96xf32> to vector<8x32xf32>
    %239 = arith.addf %237, %238 : vector<8x32xf32>
    %240 = arith.negf %239 : vector<8x32xf32>
    %241 = math.exp %240 : vector<8x32xf32>
    %cst_50 = arith.constant 1.000000e+00 : f32
    %242 = vector.broadcast %cst_50 : f32 to vector<8x32xf32>
    %243 = arith.addf %242, %241 : vector<8x32xf32>
    %244 = arith.divf %242, %243 : vector<8x32xf32>
    %245 = vector.extract_strided_slice %235 {offsets = [0, 32], sizes = [8, 32], strides = [1, 1]} : vector<8x108xf32> to vector<8x32xf32>
    %246 = vector.extract_strided_slice %236 {offsets = [0, 32], sizes = [8, 32], strides = [1, 1]} : vector<8x96xf32> to vector<8x32xf32>
    %247 = arith.addf %245, %246 : vector<8x32xf32>
    %248 = arith.negf %247 : vector<8x32xf32>
    %249 = math.exp %248 : vector<8x32xf32>
    %cst_51 = arith.constant 1.000000e+00 : f32
    %250 = vector.broadcast %cst_51 : f32 to vector<8x32xf32>
    %251 = arith.addf %250, %249 : vector<8x32xf32>
    %252 = arith.divf %250, %251 : vector<8x32xf32>
    %253 = vector.extract_strided_slice %235 {offsets = [0, 64], sizes = [8, 32], strides = [1, 1]} : vector<8x108xf32> to vector<8x32xf32>
    %254 = vector.extract_strided_slice %236 {offsets = [0, 64], sizes = [8, 32], strides = [1, 1]} : vector<8x96xf32> to vector<8x32xf32>
    %255 = vector.broadcast %21 : vector<1x32xf32> to vector<8x32xf32>
    %256 = arith.addf %254, %255 : vector<8x32xf32>
    %257 = arith.mulf %244, %256 : vector<8x32xf32>
    %258 = arith.addf %253, %257 : vector<8x32xf32>
    %259 = math.tanh %258 : vector<8x32xf32>
    %cst_52 = arith.constant 1.000000e+00 : f32
    %260 = vector.broadcast %cst_52 : f32 to vector<8x32xf32>
    %261 = arith.subf %260, %252 : vector<8x32xf32>
    %262 = arith.mulf %261, %259 : vector<8x32xf32>
    %263 = arith.mulf %252, %234 : vector<8x32xf32>
    %264 = arith.addf %262, %263 : vector<8x32xf32>
    %265 = vector.extract_strided_slice %19 {offsets = [64, 0], sizes = [8, 108], strides = [1, 1]} : vector<112x108xf32> to vector<8x108xf32>
    %cst_53 = arith.constant dense<0.000000e+00> : vector<8x96xf32>
    %266 = tpu.matmul %264, %20, %cst_53 {dimension_numbers = #tpu.dot_dimension_numbers<[1], [0], [0], [1], [0, 0, 1, 1], [], []>} : vector<8x32xf32>, vector<32x96xf32>, vector<8x96xf32> -> vector<8x96xf32>
    %267 = vector.extract_strided_slice %265 {offsets = [0, 0], sizes = [8, 32], strides = [1, 1]} : vector<8x108xf32> to vector<8x32xf32>
    %268 = vector.extract_strided_slice %266 {offsets = [0, 0], sizes = [8, 32], strides = [1, 1]} : vector<8x96xf32> to vector<8x32xf32>
    %269 = arith.addf %267, %268 : vector<8x32xf32>
    %270 = arith.negf %269 : vector<8x32xf32>
    %271 = math.exp %270 : vector<8x32xf32>
    %cst_54 = arith.constant 1.000000e+00 : f32
    %272 = vector.broadcast %cst_54 : f32 to vector<8x32xf32>
    %273 = arith.addf %272, %271 : vector<8x32xf32>
    %274 = arith.divf %272, %273 : vector<8x32xf32>
    %275 = vector.extract_strided_slice %265 {offsets = [0, 32], sizes = [8, 32], strides = [1, 1]} : vector<8x108xf32> to vector<8x32xf32>
    %276 = vector.extract_strided_slice %266 {offsets = [0, 32], sizes = [8, 32], strides = [1, 1]} : vector<8x96xf32> to vector<8x32xf32>
    %277 = arith.addf %275, %276 : vector<8x32xf32>
    %278 = arith.negf %277 : vector<8x32xf32>
    %279 = math.exp %278 : vector<8x32xf32>
    %cst_55 = arith.constant 1.000000e+00 : f32
    %280 = vector.broadcast %cst_55 : f32 to vector<8x32xf32>
    %281 = arith.addf %280, %279 : vector<8x32xf32>
    %282 = arith.divf %280, %281 : vector<8x32xf32>
    %283 = vector.extract_strided_slice %265 {offsets = [0, 64], sizes = [8, 32], strides = [1, 1]} : vector<8x108xf32> to vector<8x32xf32>
    %284 = vector.extract_strided_slice %266 {offsets = [0, 64], sizes = [8, 32], strides = [1, 1]} : vector<8x96xf32> to vector<8x32xf32>
    %285 = vector.broadcast %21 : vector<1x32xf32> to vector<8x32xf32>
    %286 = arith.addf %284, %285 : vector<8x32xf32>
    %287 = arith.mulf %274, %286 : vector<8x32xf32>
    %288 = arith.addf %283, %287 : vector<8x32xf32>
    %289 = math.tanh %288 : vector<8x32xf32>
    %cst_56 = arith.constant 1.000000e+00 : f32
    %290 = vector.broadcast %cst_56 : f32 to vector<8x32xf32>
    %291 = arith.subf %290, %282 : vector<8x32xf32>
    %292 = arith.mulf %291, %289 : vector<8x32xf32>
    %293 = arith.mulf %282, %264 : vector<8x32xf32>
    %294 = arith.addf %292, %293 : vector<8x32xf32>
    %295 = vector.extract_strided_slice %19 {offsets = [72, 0], sizes = [8, 108], strides = [1, 1]} : vector<112x108xf32> to vector<8x108xf32>
    %cst_57 = arith.constant dense<0.000000e+00> : vector<8x96xf32>
    %296 = tpu.matmul %294, %20, %cst_57 {dimension_numbers = #tpu.dot_dimension_numbers<[1], [0], [0], [1], [0, 0, 1, 1], [], []>} : vector<8x32xf32>, vector<32x96xf32>, vector<8x96xf32> -> vector<8x96xf32>
    %297 = vector.extract_strided_slice %295 {offsets = [0, 0], sizes = [8, 32], strides = [1, 1]} : vector<8x108xf32> to vector<8x32xf32>
    %298 = vector.extract_strided_slice %296 {offsets = [0, 0], sizes = [8, 32], strides = [1, 1]} : vector<8x96xf32> to vector<8x32xf32>
    %299 = arith.addf %297, %298 : vector<8x32xf32>
    %300 = arith.negf %299 : vector<8x32xf32>
    %301 = math.exp %300 : vector<8x32xf32>
    %cst_58 = arith.constant 1.000000e+00 : f32
    %302 = vector.broadcast %cst_58 : f32 to vector<8x32xf32>
    %303 = arith.addf %302, %301 : vector<8x32xf32>
    %304 = arith.divf %302, %303 : vector<8x32xf32>
    %305 = vector.extract_strided_slice %295 {offsets = [0, 32], sizes = [8, 32], strides = [1, 1]} : vector<8x108xf32> to vector<8x32xf32>
    %306 = vector.extract_strided_slice %296 {offsets = [0, 32], sizes = [8, 32], strides = [1, 1]} : vector<8x96xf32> to vector<8x32xf32>
    %307 = arith.addf %305, %306 : vector<8x32xf32>
    %308 = arith.negf %307 : vector<8x32xf32>
    %309 = math.exp %308 : vector<8x32xf32>
    %cst_59 = arith.constant 1.000000e+00 : f32
    %310 = vector.broadcast %cst_59 : f32 to vector<8x32xf32>
    %311 = arith.addf %310, %309 : vector<8x32xf32>
    %312 = arith.divf %310, %311 : vector<8x32xf32>
    %313 = vector.extract_strided_slice %295 {offsets = [0, 64], sizes = [8, 32], strides = [1, 1]} : vector<8x108xf32> to vector<8x32xf32>
    %314 = vector.extract_strided_slice %296 {offsets = [0, 64], sizes = [8, 32], strides = [1, 1]} : vector<8x96xf32> to vector<8x32xf32>
    %315 = vector.broadcast %21 : vector<1x32xf32> to vector<8x32xf32>
    %316 = arith.addf %314, %315 : vector<8x32xf32>
    %317 = arith.mulf %304, %316 : vector<8x32xf32>
    %318 = arith.addf %313, %317 : vector<8x32xf32>
    %319 = math.tanh %318 : vector<8x32xf32>
    %cst_60 = arith.constant 1.000000e+00 : f32
    %320 = vector.broadcast %cst_60 : f32 to vector<8x32xf32>
    %321 = arith.subf %320, %312 : vector<8x32xf32>
    %322 = arith.mulf %321, %319 : vector<8x32xf32>
    %323 = arith.mulf %312, %294 : vector<8x32xf32>
    %324 = arith.addf %322, %323 : vector<8x32xf32>
    %325 = vector.extract_strided_slice %19 {offsets = [80, 0], sizes = [8, 108], strides = [1, 1]} : vector<112x108xf32> to vector<8x108xf32>
    %cst_61 = arith.constant dense<0.000000e+00> : vector<8x96xf32>
    %326 = tpu.matmul %324, %20, %cst_61 {dimension_numbers = #tpu.dot_dimension_numbers<[1], [0], [0], [1], [0, 0, 1, 1], [], []>} : vector<8x32xf32>, vector<32x96xf32>, vector<8x96xf32> -> vector<8x96xf32>
    %327 = vector.extract_strided_slice %325 {offsets = [0, 0], sizes = [8, 32], strides = [1, 1]} : vector<8x108xf32> to vector<8x32xf32>
    %328 = vector.extract_strided_slice %326 {offsets = [0, 0], sizes = [8, 32], strides = [1, 1]} : vector<8x96xf32> to vector<8x32xf32>
    %329 = arith.addf %327, %328 : vector<8x32xf32>
    %330 = arith.negf %329 : vector<8x32xf32>
    %331 = math.exp %330 : vector<8x32xf32>
    %cst_62 = arith.constant 1.000000e+00 : f32
    %332 = vector.broadcast %cst_62 : f32 to vector<8x32xf32>
    %333 = arith.addf %332, %331 : vector<8x32xf32>
    %334 = arith.divf %332, %333 : vector<8x32xf32>
    %335 = vector.extract_strided_slice %325 {offsets = [0, 32], sizes = [8, 32], strides = [1, 1]} : vector<8x108xf32> to vector<8x32xf32>
    %336 = vector.extract_strided_slice %326 {offsets = [0, 32], sizes = [8, 32], strides = [1, 1]} : vector<8x96xf32> to vector<8x32xf32>
    %337 = arith.addf %335, %336 : vector<8x32xf32>
    %338 = arith.negf %337 : vector<8x32xf32>
    %339 = math.exp %338 : vector<8x32xf32>
    %cst_63 = arith.constant 1.000000e+00 : f32
    %340 = vector.broadcast %cst_63 : f32 to vector<8x32xf32>
    %341 = arith.addf %340, %339 : vector<8x32xf32>
    %342 = arith.divf %340, %341 : vector<8x32xf32>
    %343 = vector.extract_strided_slice %325 {offsets = [0, 64], sizes = [8, 32], strides = [1, 1]} : vector<8x108xf32> to vector<8x32xf32>
    %344 = vector.extract_strided_slice %326 {offsets = [0, 64], sizes = [8, 32], strides = [1, 1]} : vector<8x96xf32> to vector<8x32xf32>
    %345 = vector.broadcast %21 : vector<1x32xf32> to vector<8x32xf32>
    %346 = arith.addf %344, %345 : vector<8x32xf32>
    %347 = arith.mulf %334, %346 : vector<8x32xf32>
    %348 = arith.addf %343, %347 : vector<8x32xf32>
    %349 = math.tanh %348 : vector<8x32xf32>
    %cst_64 = arith.constant 1.000000e+00 : f32
    %350 = vector.broadcast %cst_64 : f32 to vector<8x32xf32>
    %351 = arith.subf %350, %342 : vector<8x32xf32>
    %352 = arith.mulf %351, %349 : vector<8x32xf32>
    %353 = arith.mulf %342, %324 : vector<8x32xf32>
    %354 = arith.addf %352, %353 : vector<8x32xf32>
    %355 = vector.extract_strided_slice %19 {offsets = [88, 0], sizes = [8, 108], strides = [1, 1]} : vector<112x108xf32> to vector<8x108xf32>
    %cst_65 = arith.constant dense<0.000000e+00> : vector<8x96xf32>
    %356 = tpu.matmul %354, %20, %cst_65 {dimension_numbers = #tpu.dot_dimension_numbers<[1], [0], [0], [1], [0, 0, 1, 1], [], []>} : vector<8x32xf32>, vector<32x96xf32>, vector<8x96xf32> -> vector<8x96xf32>
    %357 = vector.extract_strided_slice %355 {offsets = [0, 0], sizes = [8, 32], strides = [1, 1]} : vector<8x108xf32> to vector<8x32xf32>
    %358 = vector.extract_strided_slice %356 {offsets = [0, 0], sizes = [8, 32], strides = [1, 1]} : vector<8x96xf32> to vector<8x32xf32>
    %359 = arith.addf %357, %358 : vector<8x32xf32>
    %360 = arith.negf %359 : vector<8x32xf32>
    %361 = math.exp %360 : vector<8x32xf32>
    %cst_66 = arith.constant 1.000000e+00 : f32
    %362 = vector.broadcast %cst_66 : f32 to vector<8x32xf32>
    %363 = arith.addf %362, %361 : vector<8x32xf32>
    %364 = arith.divf %362, %363 : vector<8x32xf32>
    %365 = vector.extract_strided_slice %355 {offsets = [0, 32], sizes = [8, 32], strides = [1, 1]} : vector<8x108xf32> to vector<8x32xf32>
    %366 = vector.extract_strided_slice %356 {offsets = [0, 32], sizes = [8, 32], strides = [1, 1]} : vector<8x96xf32> to vector<8x32xf32>
    %367 = arith.addf %365, %366 : vector<8x32xf32>
    %368 = arith.negf %367 : vector<8x32xf32>
    %369 = math.exp %368 : vector<8x32xf32>
    %cst_67 = arith.constant 1.000000e+00 : f32
    %370 = vector.broadcast %cst_67 : f32 to vector<8x32xf32>
    %371 = arith.addf %370, %369 : vector<8x32xf32>
    %372 = arith.divf %370, %371 : vector<8x32xf32>
    %373 = vector.extract_strided_slice %355 {offsets = [0, 64], sizes = [8, 32], strides = [1, 1]} : vector<8x108xf32> to vector<8x32xf32>
    %374 = vector.extract_strided_slice %356 {offsets = [0, 64], sizes = [8, 32], strides = [1, 1]} : vector<8x96xf32> to vector<8x32xf32>
    %375 = vector.broadcast %21 : vector<1x32xf32> to vector<8x32xf32>
    %376 = arith.addf %374, %375 : vector<8x32xf32>
    %377 = arith.mulf %364, %376 : vector<8x32xf32>
    %378 = arith.addf %373, %377 : vector<8x32xf32>
    %379 = math.tanh %378 : vector<8x32xf32>
    %cst_68 = arith.constant 1.000000e+00 : f32
    %380 = vector.broadcast %cst_68 : f32 to vector<8x32xf32>
    %381 = arith.subf %380, %372 : vector<8x32xf32>
    %382 = arith.mulf %381, %379 : vector<8x32xf32>
    %383 = arith.mulf %372, %354 : vector<8x32xf32>
    %384 = arith.addf %382, %383 : vector<8x32xf32>
    %385 = vector.extract_strided_slice %19 {offsets = [96, 0], sizes = [8, 108], strides = [1, 1]} : vector<112x108xf32> to vector<8x108xf32>
    %cst_69 = arith.constant dense<0.000000e+00> : vector<8x96xf32>
    %386 = tpu.matmul %384, %20, %cst_69 {dimension_numbers = #tpu.dot_dimension_numbers<[1], [0], [0], [1], [0, 0, 1, 1], [], []>} : vector<8x32xf32>, vector<32x96xf32>, vector<8x96xf32> -> vector<8x96xf32>
    %387 = vector.extract_strided_slice %385 {offsets = [0, 0], sizes = [8, 32], strides = [1, 1]} : vector<8x108xf32> to vector<8x32xf32>
    %388 = vector.extract_strided_slice %386 {offsets = [0, 0], sizes = [8, 32], strides = [1, 1]} : vector<8x96xf32> to vector<8x32xf32>
    %389 = arith.addf %387, %388 : vector<8x32xf32>
    %390 = arith.negf %389 : vector<8x32xf32>
    %391 = math.exp %390 : vector<8x32xf32>
    %cst_70 = arith.constant 1.000000e+00 : f32
    %392 = vector.broadcast %cst_70 : f32 to vector<8x32xf32>
    %393 = arith.addf %392, %391 : vector<8x32xf32>
    %394 = arith.divf %392, %393 : vector<8x32xf32>
    %395 = vector.extract_strided_slice %385 {offsets = [0, 32], sizes = [8, 32], strides = [1, 1]} : vector<8x108xf32> to vector<8x32xf32>
    %396 = vector.extract_strided_slice %386 {offsets = [0, 32], sizes = [8, 32], strides = [1, 1]} : vector<8x96xf32> to vector<8x32xf32>
    %397 = arith.addf %395, %396 : vector<8x32xf32>
    %398 = arith.negf %397 : vector<8x32xf32>
    %399 = math.exp %398 : vector<8x32xf32>
    %cst_71 = arith.constant 1.000000e+00 : f32
    %400 = vector.broadcast %cst_71 : f32 to vector<8x32xf32>
    %401 = arith.addf %400, %399 : vector<8x32xf32>
    %402 = arith.divf %400, %401 : vector<8x32xf32>
    %403 = vector.extract_strided_slice %385 {offsets = [0, 64], sizes = [8, 32], strides = [1, 1]} : vector<8x108xf32> to vector<8x32xf32>
    %404 = vector.extract_strided_slice %386 {offsets = [0, 64], sizes = [8, 32], strides = [1, 1]} : vector<8x96xf32> to vector<8x32xf32>
    %405 = vector.broadcast %21 : vector<1x32xf32> to vector<8x32xf32>
    %406 = arith.addf %404, %405 : vector<8x32xf32>
    %407 = arith.mulf %394, %406 : vector<8x32xf32>
    %408 = arith.addf %403, %407 : vector<8x32xf32>
    %409 = math.tanh %408 : vector<8x32xf32>
    %cst_72 = arith.constant 1.000000e+00 : f32
    %410 = vector.broadcast %cst_72 : f32 to vector<8x32xf32>
    %411 = arith.subf %410, %402 : vector<8x32xf32>
    %412 = arith.mulf %411, %409 : vector<8x32xf32>
    %413 = arith.mulf %402, %384 : vector<8x32xf32>
    %414 = arith.addf %412, %413 : vector<8x32xf32>
    %415 = vector.extract_strided_slice %19 {offsets = [104, 0], sizes = [8, 108], strides = [1, 1]} : vector<112x108xf32> to vector<8x108xf32>
    %cst_73 = arith.constant dense<0.000000e+00> : vector<8x96xf32>
    %416 = tpu.matmul %414, %20, %cst_73 {dimension_numbers = #tpu.dot_dimension_numbers<[1], [0], [0], [1], [0, 0, 1, 1], [], []>} : vector<8x32xf32>, vector<32x96xf32>, vector<8x96xf32> -> vector<8x96xf32>
    %417 = vector.extract_strided_slice %415 {offsets = [0, 0], sizes = [8, 32], strides = [1, 1]} : vector<8x108xf32> to vector<8x32xf32>
    %418 = vector.extract_strided_slice %416 {offsets = [0, 0], sizes = [8, 32], strides = [1, 1]} : vector<8x96xf32> to vector<8x32xf32>
    %419 = arith.addf %417, %418 : vector<8x32xf32>
    %420 = arith.negf %419 : vector<8x32xf32>
    %421 = math.exp %420 : vector<8x32xf32>
    %cst_74 = arith.constant 1.000000e+00 : f32
    %422 = vector.broadcast %cst_74 : f32 to vector<8x32xf32>
    %423 = arith.addf %422, %421 : vector<8x32xf32>
    %424 = arith.divf %422, %423 : vector<8x32xf32>
    %425 = vector.extract_strided_slice %415 {offsets = [0, 32], sizes = [8, 32], strides = [1, 1]} : vector<8x108xf32> to vector<8x32xf32>
    %426 = vector.extract_strided_slice %416 {offsets = [0, 32], sizes = [8, 32], strides = [1, 1]} : vector<8x96xf32> to vector<8x32xf32>
    %427 = arith.addf %425, %426 : vector<8x32xf32>
    %428 = arith.negf %427 : vector<8x32xf32>
    %429 = math.exp %428 : vector<8x32xf32>
    %cst_75 = arith.constant 1.000000e+00 : f32
    %430 = vector.broadcast %cst_75 : f32 to vector<8x32xf32>
    %431 = arith.addf %430, %429 : vector<8x32xf32>
    %432 = arith.divf %430, %431 : vector<8x32xf32>
    %433 = vector.extract_strided_slice %415 {offsets = [0, 64], sizes = [8, 32], strides = [1, 1]} : vector<8x108xf32> to vector<8x32xf32>
    %434 = vector.extract_strided_slice %416 {offsets = [0, 64], sizes = [8, 32], strides = [1, 1]} : vector<8x96xf32> to vector<8x32xf32>
    %435 = vector.broadcast %21 : vector<1x32xf32> to vector<8x32xf32>
    %436 = arith.addf %434, %435 : vector<8x32xf32>
    %437 = arith.mulf %424, %436 : vector<8x32xf32>
    %438 = arith.addf %433, %437 : vector<8x32xf32>
    %439 = math.tanh %438 : vector<8x32xf32>
    %cst_76 = arith.constant 1.000000e+00 : f32
    %440 = vector.broadcast %cst_76 : f32 to vector<8x32xf32>
    %441 = arith.subf %440, %432 : vector<8x32xf32>
    %442 = arith.mulf %441, %439 : vector<8x32xf32>
    %443 = arith.mulf %432, %414 : vector<8x32xf32>
    %444 = arith.addf %442, %443 : vector<8x32xf32>
    %cst_77 = arith.constant 0.000000e+00 : f32
    %445 = vector.broadcast %cst_77 : f32 to vector<32x4xf32>
    %446 = vector.extract_strided_slice %19 {offsets = [16, 0], sizes = [32, 108], strides = [1, 1]} : vector<112x108xf32> to vector<32x108xf32>
    %cst_78 = arith.constant dense<0.000000e+00> : vector<32x12xf32>
    %447 = tpu.matmul %445, %22, %cst_78 {dimension_numbers = #tpu.dot_dimension_numbers<[1], [0], [0], [1], [0, 0, 1, 1], [], []>} : vector<32x4xf32>, vector<4x12xf32>, vector<32x12xf32> -> vector<32x12xf32>
    %448 = vector.extract_strided_slice %446 {offsets = [0, 96], sizes = [32, 4], strides = [1, 1]} : vector<32x108xf32> to vector<32x4xf32>
    %449 = vector.extract_strided_slice %447 {offsets = [0, 0], sizes = [32, 4], strides = [1, 1]} : vector<32x12xf32> to vector<32x4xf32>
    %450 = arith.addf %448, %449 : vector<32x4xf32>
    %451 = arith.negf %450 : vector<32x4xf32>
    %452 = math.exp %451 : vector<32x4xf32>
    %cst_79 = arith.constant 1.000000e+00 : f32
    %453 = vector.broadcast %cst_79 : f32 to vector<32x4xf32>
    %454 = arith.addf %453, %452 : vector<32x4xf32>
    %455 = arith.divf %453, %454 : vector<32x4xf32>
    %456 = vector.extract_strided_slice %446 {offsets = [0, 100], sizes = [32, 4], strides = [1, 1]} : vector<32x108xf32> to vector<32x4xf32>
    %457 = vector.extract_strided_slice %447 {offsets = [0, 4], sizes = [32, 4], strides = [1, 1]} : vector<32x12xf32> to vector<32x4xf32>
    %458 = arith.addf %456, %457 : vector<32x4xf32>
    %459 = arith.negf %458 : vector<32x4xf32>
    %460 = math.exp %459 : vector<32x4xf32>
    %cst_80 = arith.constant 1.000000e+00 : f32
    %461 = vector.broadcast %cst_80 : f32 to vector<32x4xf32>
    %462 = arith.addf %461, %460 : vector<32x4xf32>
    %463 = arith.divf %461, %462 : vector<32x4xf32>
    %464 = vector.extract_strided_slice %446 {offsets = [0, 104], sizes = [32, 4], strides = [1, 1]} : vector<32x108xf32> to vector<32x4xf32>
    %465 = vector.extract_strided_slice %447 {offsets = [0, 8], sizes = [32, 4], strides = [1, 1]} : vector<32x12xf32> to vector<32x4xf32>
    %466 = vector.broadcast %23 : vector<1x4xf32> to vector<32x4xf32>
    %467 = arith.addf %465, %466 : vector<32x4xf32>
    %468 = arith.mulf %455, %467 : vector<32x4xf32>
    %469 = arith.addf %464, %468 : vector<32x4xf32>
    %470 = math.tanh %469 : vector<32x4xf32>
    %cst_81 = arith.constant 1.000000e+00 : f32
    %471 = vector.broadcast %cst_81 : f32 to vector<32x4xf32>
    %472 = arith.subf %471, %463 : vector<32x4xf32>
    %473 = arith.mulf %472, %470 : vector<32x4xf32>
    %474 = arith.mulf %463, %445 : vector<32x4xf32>
    %475 = arith.addf %473, %474 : vector<32x4xf32>
    %476 = vector.extract_strided_slice %19 {offsets = [48, 0], sizes = [32, 108], strides = [1, 1]} : vector<112x108xf32> to vector<32x108xf32>
    %cst_82 = arith.constant dense<0.000000e+00> : vector<32x12xf32>
    %477 = tpu.matmul %475, %22, %cst_82 {dimension_numbers = #tpu.dot_dimension_numbers<[1], [0], [0], [1], [0, 0, 1, 1], [], []>} : vector<32x4xf32>, vector<4x12xf32>, vector<32x12xf32> -> vector<32x12xf32>
    %478 = vector.extract_strided_slice %476 {offsets = [0, 96], sizes = [32, 4], strides = [1, 1]} : vector<32x108xf32> to vector<32x4xf32>
    %479 = vector.extract_strided_slice %477 {offsets = [0, 0], sizes = [32, 4], strides = [1, 1]} : vector<32x12xf32> to vector<32x4xf32>
    %480 = arith.addf %478, %479 : vector<32x4xf32>
    %481 = arith.negf %480 : vector<32x4xf32>
    %482 = math.exp %481 : vector<32x4xf32>
    %cst_83 = arith.constant 1.000000e+00 : f32
    %483 = vector.broadcast %cst_83 : f32 to vector<32x4xf32>
    %484 = arith.addf %483, %482 : vector<32x4xf32>
    %485 = arith.divf %483, %484 : vector<32x4xf32>
    %486 = vector.extract_strided_slice %476 {offsets = [0, 100], sizes = [32, 4], strides = [1, 1]} : vector<32x108xf32> to vector<32x4xf32>
    %487 = vector.extract_strided_slice %477 {offsets = [0, 4], sizes = [32, 4], strides = [1, 1]} : vector<32x12xf32> to vector<32x4xf32>
    %488 = arith.addf %486, %487 : vector<32x4xf32>
    %489 = arith.negf %488 : vector<32x4xf32>
    %490 = math.exp %489 : vector<32x4xf32>
    %cst_84 = arith.constant 1.000000e+00 : f32
    %491 = vector.broadcast %cst_84 : f32 to vector<32x4xf32>
    %492 = arith.addf %491, %490 : vector<32x4xf32>
    %493 = arith.divf %491, %492 : vector<32x4xf32>
    %494 = vector.extract_strided_slice %476 {offsets = [0, 104], sizes = [32, 4], strides = [1, 1]} : vector<32x108xf32> to vector<32x4xf32>
    %495 = vector.extract_strided_slice %477 {offsets = [0, 8], sizes = [32, 4], strides = [1, 1]} : vector<32x12xf32> to vector<32x4xf32>
    %496 = vector.broadcast %23 : vector<1x4xf32> to vector<32x4xf32>
    %497 = arith.addf %495, %496 : vector<32x4xf32>
    %498 = arith.mulf %485, %497 : vector<32x4xf32>
    %499 = arith.addf %494, %498 : vector<32x4xf32>
    %500 = math.tanh %499 : vector<32x4xf32>
    %cst_85 = arith.constant 1.000000e+00 : f32
    %501 = vector.broadcast %cst_85 : f32 to vector<32x4xf32>
    %502 = arith.subf %501, %493 : vector<32x4xf32>
    %503 = arith.mulf %502, %500 : vector<32x4xf32>
    %504 = arith.mulf %493, %475 : vector<32x4xf32>
    %505 = arith.addf %503, %504 : vector<32x4xf32>
    %506 = vector.extract_strided_slice %19 {offsets = [80, 0], sizes = [32, 108], strides = [1, 1]} : vector<112x108xf32> to vector<32x108xf32>
    %cst_86 = arith.constant dense<0.000000e+00> : vector<32x12xf32>
    %507 = tpu.matmul %505, %22, %cst_86 {dimension_numbers = #tpu.dot_dimension_numbers<[1], [0], [0], [1], [0, 0, 1, 1], [], []>} : vector<32x4xf32>, vector<4x12xf32>, vector<32x12xf32> -> vector<32x12xf32>
    %508 = vector.extract_strided_slice %506 {offsets = [0, 96], sizes = [32, 4], strides = [1, 1]} : vector<32x108xf32> to vector<32x4xf32>
    %509 = vector.extract_strided_slice %507 {offsets = [0, 0], sizes = [32, 4], strides = [1, 1]} : vector<32x12xf32> to vector<32x4xf32>
    %510 = arith.addf %508, %509 : vector<32x4xf32>
    %511 = arith.negf %510 : vector<32x4xf32>
    %512 = math.exp %511 : vector<32x4xf32>
    %cst_87 = arith.constant 1.000000e+00 : f32
    %513 = vector.broadcast %cst_87 : f32 to vector<32x4xf32>
    %514 = arith.addf %513, %512 : vector<32x4xf32>
    %515 = arith.divf %513, %514 : vector<32x4xf32>
    %516 = vector.extract_strided_slice %506 {offsets = [0, 100], sizes = [32, 4], strides = [1, 1]} : vector<32x108xf32> to vector<32x4xf32>
    %517 = vector.extract_strided_slice %507 {offsets = [0, 4], sizes = [32, 4], strides = [1, 1]} : vector<32x12xf32> to vector<32x4xf32>
    %518 = arith.addf %516, %517 : vector<32x4xf32>
    %519 = arith.negf %518 : vector<32x4xf32>
    %520 = math.exp %519 : vector<32x4xf32>
    %cst_88 = arith.constant 1.000000e+00 : f32
    %521 = vector.broadcast %cst_88 : f32 to vector<32x4xf32>
    %522 = arith.addf %521, %520 : vector<32x4xf32>
    %523 = arith.divf %521, %522 : vector<32x4xf32>
    %524 = vector.extract_strided_slice %506 {offsets = [0, 104], sizes = [32, 4], strides = [1, 1]} : vector<32x108xf32> to vector<32x4xf32>
    %525 = vector.extract_strided_slice %507 {offsets = [0, 8], sizes = [32, 4], strides = [1, 1]} : vector<32x12xf32> to vector<32x4xf32>
    %526 = vector.broadcast %23 : vector<1x4xf32> to vector<32x4xf32>
    %527 = arith.addf %525, %526 : vector<32x4xf32>
    %528 = arith.mulf %515, %527 : vector<32x4xf32>
    %529 = arith.addf %524, %528 : vector<32x4xf32>
    %530 = math.tanh %529 : vector<32x4xf32>
    %cst_89 = arith.constant 1.000000e+00 : f32
    %531 = vector.broadcast %cst_89 : f32 to vector<32x4xf32>
    %532 = arith.subf %531, %523 : vector<32x4xf32>
    %533 = arith.mulf %532, %530 : vector<32x4xf32>
    %534 = arith.mulf %523, %505 : vector<32x4xf32>
    %535 = arith.addf %533, %534 : vector<32x4xf32>
    %c0_90 = arith.constant 0 : index
    %c0_91 = arith.constant 0 : index
    %536 = vector.load %arg9[%c0_90, %c0_91] : memref<32x8xf32, #tpu.memory_space<vmem>>, vector<32x8xf32>
    %cst_92 = arith.constant dense<0.000000e+00> : vector<8x8xf32>
    %537 = tpu.matmul %444, %536, %cst_92 {dimension_numbers = #tpu.dot_dimension_numbers<[1], [0], [0], [1], [0, 0, 1, 1], [], []>} : vector<8x32xf32>, vector<32x8xf32>, vector<8x8xf32> -> vector<8x8xf32>
    %c0_93 = arith.constant 0 : index
    %c0_94 = arith.constant 0 : index
    %538 = vector.load %arg11[%c0_93, %c0_94] : memref<1x8xf32, #tpu.memory_space<vmem>>, vector<1x8xf32>
    %539 = vector.broadcast %538 : vector<1x8xf32> to vector<8x8xf32>
    %540 = arith.addf %537, %539 : vector<8x8xf32>
    %541 = vector.extract_strided_slice %535 {offsets = [0, 0], sizes = [8, 4], strides = [1, 1]} : vector<32x4xf32> to vector<8x4xf32>
    %c0_95 = arith.constant 0 : index
    %c0_96 = arith.constant 0 : index
    %c0_97 = arith.constant 0 : index
    %542 = vector.load %arg10[%c0_95, %c0_96, %c0_97] : memref<4x4x8xf32, #tpu.memory_space<vmem>>, vector<1x4x8xf32>
    %543 = vector.shape_cast %542 : vector<1x4x8xf32> to vector<4x8xf32>
    %cst_98 = arith.constant dense<0.000000e+00> : vector<8x8xf32>
    %544 = tpu.matmul %541, %543, %cst_98 {dimension_numbers = #tpu.dot_dimension_numbers<[1], [0], [0], [1], [0, 0, 1, 1], [], []>} : vector<8x4xf32>, vector<4x8xf32>, vector<8x8xf32> -> vector<8x8xf32>
    %545 = arith.addf %540, %544 : vector<8x8xf32>
    %546 = vector.extract_strided_slice %535 {offsets = [8, 0], sizes = [8, 4], strides = [1, 1]} : vector<32x4xf32> to vector<8x4xf32>
    %c1 = arith.constant 1 : index
    %c0_99 = arith.constant 0 : index
    %c0_100 = arith.constant 0 : index
    %547 = vector.load %arg10[%c1, %c0_99, %c0_100] : memref<4x4x8xf32, #tpu.memory_space<vmem>>, vector<1x4x8xf32>
    %548 = vector.shape_cast %547 : vector<1x4x8xf32> to vector<4x8xf32>
    %cst_101 = arith.constant dense<0.000000e+00> : vector<8x8xf32>
    %549 = tpu.matmul %546, %548, %cst_101 {dimension_numbers = #tpu.dot_dimension_numbers<[1], [0], [0], [1], [0, 0, 1, 1], [], []>} : vector<8x4xf32>, vector<4x8xf32>, vector<8x8xf32> -> vector<8x8xf32>
    %550 = arith.addf %545, %549 : vector<8x8xf32>
    %551 = vector.extract_strided_slice %535 {offsets = [16, 0], sizes = [8, 4], strides = [1, 1]} : vector<32x4xf32> to vector<8x4xf32>
    %c2 = arith.constant 2 : index
    %c0_102 = arith.constant 0 : index
    %c0_103 = arith.constant 0 : index
    %552 = vector.load %arg10[%c2, %c0_102, %c0_103] : memref<4x4x8xf32, #tpu.memory_space<vmem>>, vector<1x4x8xf32>
    %553 = vector.shape_cast %552 : vector<1x4x8xf32> to vector<4x8xf32>
    %cst_104 = arith.constant dense<0.000000e+00> : vector<8x8xf32>
    %554 = tpu.matmul %551, %553, %cst_104 {dimension_numbers = #tpu.dot_dimension_numbers<[1], [0], [0], [1], [0, 0, 1, 1], [], []>} : vector<8x4xf32>, vector<4x8xf32>, vector<8x8xf32> -> vector<8x8xf32>
    %555 = arith.addf %550, %554 : vector<8x8xf32>
    %556 = vector.extract_strided_slice %535 {offsets = [24, 0], sizes = [8, 4], strides = [1, 1]} : vector<32x4xf32> to vector<8x4xf32>
    %c3 = arith.constant 3 : index
    %c0_105 = arith.constant 0 : index
    %c0_106 = arith.constant 0 : index
    %557 = vector.load %arg10[%c3, %c0_105, %c0_106] : memref<4x4x8xf32, #tpu.memory_space<vmem>>, vector<1x4x8xf32>
    %558 = vector.shape_cast %557 : vector<1x4x8xf32> to vector<4x8xf32>
    %cst_107 = arith.constant dense<0.000000e+00> : vector<8x8xf32>
    %559 = tpu.matmul %556, %558, %cst_107 {dimension_numbers = #tpu.dot_dimension_numbers<[1], [0], [0], [1], [0, 0, 1, 1], [], []>} : vector<8x4xf32>, vector<4x8xf32>, vector<8x8xf32> -> vector<8x8xf32>
    %560 = arith.addf %555, %559 : vector<8x8xf32>
    %561 = vector.extract_strided_slice %0 {offsets = [12, 0, 0], sizes = [1, 8, 8], strides = [1, 1, 1]} : vector<16x8x8xf32> to vector<1x8x8xf32>
    %562 = vector.shape_cast %561 : vector<1x8x8xf32> to vector<8x8xf32>
    %c0_108 = arith.constant 0 : index
    %563 = memref.load %arg12[%c0_108] : memref<4xf32, #tpu.memory_space<smem>>
    %564 = vector.broadcast %563 : f32 to vector<8x8xf32>
    %565 = arith.mulf %562, %564 : vector<8x8xf32>
    %566 = vector.extract_strided_slice %0 {offsets = [13, 0, 0], sizes = [1, 8, 8], strides = [1, 1, 1]} : vector<16x8x8xf32> to vector<1x8x8xf32>
    %567 = vector.shape_cast %566 : vector<1x8x8xf32> to vector<8x8xf32>
    %c1_109 = arith.constant 1 : index
    %568 = memref.load %arg12[%c1_109] : memref<4xf32, #tpu.memory_space<smem>>
    %569 = vector.broadcast %568 : f32 to vector<8x8xf32>
    %570 = arith.mulf %567, %569 : vector<8x8xf32>
    %571 = arith.addf %565, %570 : vector<8x8xf32>
    %572 = vector.extract_strided_slice %0 {offsets = [14, 0, 0], sizes = [1, 8, 8], strides = [1, 1, 1]} : vector<16x8x8xf32> to vector<1x8x8xf32>
    %573 = vector.shape_cast %572 : vector<1x8x8xf32> to vector<8x8xf32>
    %c2_110 = arith.constant 2 : index
    %574 = memref.load %arg12[%c2_110] : memref<4xf32, #tpu.memory_space<smem>>
    %575 = vector.broadcast %574 : f32 to vector<8x8xf32>
    %576 = arith.mulf %573, %575 : vector<8x8xf32>
    %577 = arith.addf %571, %576 : vector<8x8xf32>
    %578 = vector.extract_strided_slice %0 {offsets = [15, 0, 0], sizes = [1, 8, 8], strides = [1, 1, 1]} : vector<16x8x8xf32> to vector<1x8x8xf32>
    %579 = vector.shape_cast %578 : vector<1x8x8xf32> to vector<8x8xf32>
    %c3_111 = arith.constant 3 : index
    %580 = memref.load %arg12[%c3_111] : memref<4xf32, #tpu.memory_space<smem>>
    %581 = vector.broadcast %580 : f32 to vector<8x8xf32>
    %582 = arith.mulf %579, %581 : vector<8x8xf32>
    %583 = arith.addf %577, %582 : vector<8x8xf32>
    %584 = arith.addf %560, %583 : vector<8x8xf32>
    %c0_112 = arith.constant 0 : index
    %585 = memref.load %arg13[%c0_112] : memref<1xf32, #tpu.memory_space<smem>>
    %586 = vector.broadcast %585 : f32 to vector<8x8xf32>
    %587 = arith.addf %584, %586 : vector<8x8xf32>
    %c0_113 = arith.constant 0 : index
    %c0_114 = arith.constant 0 : index
    %588 = vector.load %arg14[%c0_113, %c0_114] : memref<8x8xf32, #tpu.memory_space<vmem>>, vector<8x8xf32>
    tpu.vector_store %arg14[%c0_113, %c0_114], %587 {strides = array<i32>} : memref<8x8xf32, #tpu.memory_space<vmem>>, vector<8x8xf32>,
    return
  }
}

</mosaic_0001>

<llo_original>
// kernel: tpu_custom_call.1
$region0: #{tpu_custom_call.1}
  #allocation0 [shape = 'u32[]', space=smem, size = 0x4, offset = 0x4, fixed_abs, tag = 'smem constant byte address 0x4 - core index']
  #allocation1 [shape = 'u32[144,128]{1,0:T(1,128)}', space=vmem, size = 0x12000, scoped, tag = 'internal scratch']
  #allocation2 [shape = 'f32[1]{0:T(128)S(6)}', space=smem, size = 0x200, scoped, tag = 'scoped memory for tpu_custom_call.1']
  %s0 = inlined_call_operand.vmem [shape: f32[16,8,8], index: 0, kind: input, shape index: {}]
  %s1 = inlined_call_operand.vmem [shape: f32[24,16], index: 1, kind: input, shape index: {}]
  %s2 = inlined_call_operand.vmem [shape: f32[1,16], index: 2, kind: input, shape index: {}]
  %s3 = inlined_call_operand.vmem [shape: f32[16,108], index: 3, kind: input, shape index: {}]
  %s4 = inlined_call_operand.vmem [shape: f32[1,108], index: 4, kind: input, shape index: {}]
  %s5 = inlined_call_operand.vmem [shape: f32[32,96], index: 5, kind: input, shape index: {}]
  %s6 = inlined_call_operand.vmem [shape: f32[1,32], index: 6, kind: input, shape index: {}]
  %s7 = inlined_call_operand.vmem [shape: f32[4,12], index: 7, kind: input, shape index: {}]
  %s8 = inlined_call_operand.vmem [shape: f32[1,4], index: 8, kind: input, shape index: {}]
  %s9 = inlined_call_operand.vmem [shape: f32[32,8], index: 9, kind: input, shape index: {}]
  %s10 = inlined_call_operand.vmem [shape: f32[4,4,8], index: 10, kind: input, shape index: {}]
  %s11 = inlined_call_operand.vmem [shape: f32[1,8], index: 11, kind: input, shape index: {}]
  %s12 = inlined_call_operand.vmem [shape: f32[4], index: 12, kind: input, shape index: {}]
  %s13 = inlined_call_operand.<no memory space> [shape: f32[1], index: 13, kind: input, shape index: {}]
  %s14 = inlined_call_operand.hbm [shape: f32[8,8], index: 14, kind: output, shape index: {}]
  %s15 = sld [smem:[#allocation0]]
  $region70: #{tpu_custom_call.1} parent=0
    _
  %s17 = ssub.s32 1, %s15
  %s18 = scalar_select 0, %s17, %s15
  %19 = sst [smem:[#allocation2]] %s13
  $region1: #{tpu_custom_call.1} parent=0
    #allocation3 [shape = 'u8[512]{0}', space=smem, size = 0x200, scoped, tag = 'input window, operand 12, single buffered']
    #allocation4 [shape = 's32[1]{0}', space=sflag, size = 0x4, scoped, tag = 'scoped memory for tpu_custom_call.1']
    #allocation5 [shape = 's32[1]{0}', space=sflag, size = 0x4, scoped, tag = 'scoped memory for tpu_custom_call.1']
    #allocation6 [shape = 'u8[4096]{0}', space=vmem, size = 0x1000, scoped, tag = 'output window, operand 0, single buffered']
    %20 = vsyncpa [#allocation5], 0
    %21 = vsyncpa [#allocation4], 0
    // Predicated region
    $region2: #{tpu_custom_call.1} parent=1 // pred_check
      _
    $region3: #{tpu_custom_call.1} parent=1 // pred_check_branch
      %23 = sbr.rel (0) target = $region5
    $region4: #{tpu_custom_call.1} parent=1 // pred_region
      _
    $region5: #{tpu_custom_call.1} parent=1 // pred_fallthru
      _
    // Predicated region
    $region6: #{tpu_custom_call.1} parent=1 // pred_check
      _
    $region7: #{tpu_custom_call.1} parent=1 // pred_check_branch
      %25 = sbr.rel (0) target = $region9
    $region8: #{tpu_custom_call.1} parent=1 // pred_region
      _
    $region9: #{tpu_custom_call.1} parent=1 // pred_fallthru
      _
    // Predicated region
    $region10: #{tpu_custom_call.1} parent=1 // pred_check
      _
    $region11: #{tpu_custom_call.1} parent=1 // pred_check_branch
      %27 = sbr.rel (0) target = $region13
    $region12: #{tpu_custom_call.1} parent=1 // pred_region
      _
    $region13: #{tpu_custom_call.1} parent=1 // pred_fallthru
      _
    // Predicated region
    $region14: #{tpu_custom_call.1} parent=1 // pred_check
      _
    $region15: #{tpu_custom_call.1} parent=1 // pred_check_branch
      %29 = sbr.rel (0) target = $region17
    $region16: #{tpu_custom_call.1} parent=1 // pred_region
      _
    $region17: #{tpu_custom_call.1} parent=1 // pred_fallthru
      _
    // Predicated region
    $region18: #{tpu_custom_call.1} parent=1 // pred_check
      _
    $region19: #{tpu_custom_call.1} parent=1 // pred_check_branch
      %31 = sbr.rel (0) target = $region21
    $region20: #{tpu_custom_call.1} parent=1 // pred_region
      _
    $region21: #{tpu_custom_call.1} parent=1 // pred_fallthru
      _
    // Predicated region
    $region22: #{tpu_custom_call.1} parent=1 // pred_check
      _
    $region23: #{tpu_custom_call.1} parent=1 // pred_check_branch
      %33 = sbr.rel (0) target = $region25
    $region24: #{tpu_custom_call.1} parent=1 // pred_region
      _
    $region25: #{tpu_custom_call.1} parent=1 // pred_fallthru
      _
    // Predicated region
    $region26: #{tpu_custom_call.1} parent=1 // pred_check
      _
    $region27: #{tpu_custom_call.1} parent=1 // pred_check_branch
      %35 = sbr.rel (0) target = $region29
    $region28: #{tpu_custom_call.1} parent=1 // pred_region
      _
    $region29: #{tpu_custom_call.1} parent=1 // pred_fallthru
      _
    // Predicated region
    $region30: #{tpu_custom_call.1} parent=1 // pred_check
      _
    $region31: #{tpu_custom_call.1} parent=1 // pred_check_branch
      %37 = sbr.rel (0) target = $region33
    $region32: #{tpu_custom_call.1} parent=1 // pred_region
      _
    $region33: #{tpu_custom_call.1} parent=1 // pred_fallthru
      _
    // Predicated region
    $region34: #{tpu_custom_call.1} parent=1 // pred_check
      _
    $region35: #{tpu_custom_call.1} parent=1 // pred_check_branch
      %39 = sbr.rel (0) target = $region37
    $region36: #{tpu_custom_call.1} parent=1 // pred_region
      _
    $region37: #{tpu_custom_call.1} parent=1 // pred_fallthru
      _
    // Predicated region
    $region38: #{tpu_custom_call.1} parent=1 // pred_check
      _
    $region39: #{tpu_custom_call.1} parent=1 // pred_check_branch
      %41 = sbr.rel (0) target = $region41
    $region40: #{tpu_custom_call.1} parent=1 // pred_region
      _
    $region41: #{tpu_custom_call.1} parent=1 // pred_fallthru
      _
    // Predicated region
    $region42: #{tpu_custom_call.1} parent=1 // pred_check
      _
    $region43: #{tpu_custom_call.1} parent=1 // pred_check_branch
      %43 = sbr.rel (0) target = $region45
    $region44: #{tpu_custom_call.1} parent=1 // pred_region
      _
    $region45: #{tpu_custom_call.1} parent=1 // pred_fallthru
      _
    // Predicated region
    $region46: #{tpu_custom_call.1} parent=1 // pred_check
      _
    $region47: #{tpu_custom_call.1} parent=1 // pred_check_branch
      %45 = sbr.rel (0) target = $region49
    $region48: #{tpu_custom_call.1} parent=1 // pred_region
      _
    $region49: #{tpu_custom_call.1} parent=1 // pred_fallthru
      _
    // Predicated region
    $region50: #{tpu_custom_call.1} parent=1 // pred_check
      _
    $region51: #{tpu_custom_call.1} parent=1 // pred_check_branch
      %47 = sbr.rel (0) target = $region53
    $region52: #{tpu_custom_call.1} parent=1 // pred_region
      %s49 = ssub.s32 16, 16
      %50 = vsyncadd [#allocation5], %s49
      %s52 = sshll.u32 %s12, 4
      %s53 = int_to_ptr.vmem [resolvable:$true] %s52
      %55 = dma.vmem_to_smem %s53, 16, [#allocation3], [#allocation5]
    $region53: #{tpu_custom_call.1} parent=1 // pred_fallthru
      _
    // Predicated region
    $region54: #{tpu_custom_call.1} parent=1 // pred_check
      _
    $region55: #{tpu_custom_call.1} parent=1 // pred_check_branch
      %57 = sbr.rel (0) target = $region57
    $region56: #{tpu_custom_call.1} parent=1 // pred_region
      _
    $region57: #{tpu_custom_call.1} parent=1 // pred_fallthru
      _
    // Predicated region
    $region58: #{tpu_custom_call.1} parent=1 // pred_check
      _
    $region59: #{tpu_custom_call.1} parent=1 // pred_check_branch
      %59 = sbr.rel (0) target = $region61
    $region60: #{tpu_custom_call.1} parent=1 // pred_region
      %60 = dma.done [#allocation5], 16
    $region61: #{tpu_custom_call.1} parent=1 // pred_fallthru
      _
    %61 = sfence
    %v62 = vld [vmem:[%s0] sm:$0xff]
    %v63 = vld [vmem:[%s0 + $0x8] sm:$0xff]
    %v64 = vld [vmem:[%s0 + $0x10] sm:$0xff]
    %v65 = vld [vmem:[%s0 + $0x18] sm:$0xff]
    %v66 = vld [vmem:[%s0 + $0x20] sm:$0xff]
    %v67 = vld [vmem:[%s0 + $0x28] sm:$0xff]
    %v68 = vld [vmem:[%s0 + $0x30] sm:$0xff]
    %v69 = vld [vmem:[%s0 + $0x38] sm:$0xff]
    %v70 = vld [vmem:[%s0 + $0x40] sm:$0xff]
    %v71 = vld [vmem:[%s0 + $0x48] sm:$0xff]
    %v72 = vld [vmem:[%s0 + $0x50] sm:$0xff]
    %v73 = vld [vmem:[%s0 + $0x58] sm:$0xff]
    %v74 = vld [vmem:[%s0 + $0x60] sm:$0xff]
    %v75 = vld [vmem:[%s0 + $0x68] sm:$0xff]
    %v76 = vld [vmem:[%s0 + $0x70] sm:$0xff]
    %v77 = vld [vmem:[%s0 + $0x78] sm:$0xff]
    %92 = vrot.lane.b32.xlu0 %v63, 8
    %v93 = vpop.permute.xlu0 %92
    %94 = vrot.lane.b32.xlu0 %v64, 8
    %v95 = vpop.permute.xlu0 %94
    %96 = vrot.lane.b32.xlu0 %v65, 8
    %v97 = vpop.permute.xlu0 %96
    %98 = vrot.lane.b32.xlu0 %v66, 8
    %v99 = vpop.permute.xlu0 %98
    %100 = vrot.lane.b32.xlu0 %v67, 8
    %v101 = vpop.permute.xlu0 %100
    %102 = vrot.lane.b32.xlu0 %v68, 8
    %v103 = vpop.permute.xlu0 %102
    %104 = vrot.lane.b32.xlu0 %v69, 8
    %v105 = vpop.permute.xlu0 %104
    %106 = vrot.lane.b32.xlu0 %v70, 8
    %v107 = vpop.permute.xlu0 %106
    %108 = vrot.lane.b32.xlu0 %v71, 8
    %v109 = vpop.permute.xlu0 %108
    %110 = vrot.lane.b32.xlu0 %v72, 8
    %v111 = vpop.permute.xlu0 %110
    %112 = vrot.lane.b32.xlu0 %v73, 8
    %v113 = vpop.permute.xlu0 %112
    %114 = vrot.lane.b32.xlu0 %v74, 8
    %v115 = vpop.permute.xlu0 %114
    %116 = vrot.lane.b32.xlu0 %v75, 8
    %v117 = vpop.permute.xlu0 %116
    %118 = vrot.lane.b32.xlu0 %v76, 8
    %v119 = vpop.permute.xlu0 %118
    %135 = vrot.lane.b32.xlu0 %v64, 16
    %v136 = vpop.permute.xlu0 %135
    %137 = vrot.lane.b32.xlu0 %v65, 16
    %v138 = vpop.permute.xlu0 %137
    %139 = vrot.lane.b32.xlu0 %v66, 16
    %v140 = vpop.permute.xlu0 %139
    %141 = vrot.lane.b32.xlu0 %v67, 16
    %v142 = vpop.permute.xlu0 %141
    %143 = vrot.lane.b32.xlu0 %v68, 16
    %v144 = vpop.permute.xlu0 %143
    %145 = vrot.lane.b32.xlu0 %v69, 16
    %v146 = vpop.permute.xlu0 %145
    %147 = vrot.lane.b32.xlu0 %v70, 16
    %v148 = vpop.permute.xlu0 %147
    %149 = vrot.lane.b32.xlu0 %v71, 16
    %v150 = vpop.permute.xlu0 %149
    %151 = vrot.lane.b32.xlu0 %v72, 16
    %v152 = vpop.permute.xlu0 %151
    %153 = vrot.lane.b32.xlu0 %v73, 16
    %v154 = vpop.permute.xlu0 %153
    %155 = vrot.lane.b32.xlu0 %v74, 16
    %v156 = vpop.permute.xlu0 %155
    %157 = vrot.lane.b32.xlu0 %v75, 16
    %v158 = vpop.permute.xlu0 %157
    %159 = vrot.lane.b32.xlu0 %v76, 16
    %v160 = vpop.permute.xlu0 %159
    %161 = vrot.lane.b32.xlu0 %v77, 16
    %v162 = vpop.permute.xlu0 %161
    %vm177 = vcmask 64512
    %v178 = vsel %vm177, %v62, %v93
    %v179 = vsel %vm177, %v63, %v95
    %v180 = vsel %vm177, %v64, %v97
    %v181 = vsel %vm177, %v65, %v99
    %v182 = vsel %vm177, %v66, %v101
    %v183 = vsel %vm177, %v67, %v103
    %v184 = vsel %vm177, %v68, %v105
    %v185 = vsel %vm177, %v69, %v107
    %v186 = vsel %vm177, %v70, %v109
    %v187 = vsel %vm177, %v71, %v111
    %v188 = vsel %vm177, %v72, %v113
    %v189 = vsel %vm177, %v73, %v115
    %v190 = vsel %vm177, %v74, %v117
    %v191 = vsel %vm177, %v75, %v119
    %vm192 = vcmask 130048
    %v193 = vsel %vm192, %v178, %v136
    %v194 = vsel %vm192, %v179, %v138
    %v195 = vsel %vm192, %v180, %v140
    %v196 = vsel %vm192, %v181, %v142
    %v197 = vsel %vm192, %v182, %v144
    %v198 = vsel %vm192, %v183, %v146
    %v199 = vsel %vm192, %v184, %v148
    %v200 = vsel %vm192, %v185, %v150
    %v201 = vsel %vm192, %v186, %v152
    %v202 = vsel %vm192, %v187, %v154
    %v203 = vsel %vm192, %v188, %v156
    %v204 = vsel %vm192, %v189, %v158
    %v205 = vsel %vm192, %v190, %v160
    %v206 = vsel %vm192, %v191, %v162
    %v207 = vld [vmem:[%s1] sm:$0xff]
    %v208 = vld [vmem:[%s1 + $0x8] sm:$0xff]
    %v209 = vld [vmem:[%s1 + $0x10] sm:$0xff]
    %v210 = vld [vmem:[%s2] sm:$0x1]
    %v212 = vlaneseq
    %v213 = vshrl.u32 %v212, 7
    %v214 = vsub.s32 0, %v213
    %v215 = vrot.slane %v210, %v214
    %vm217 = vcmask 195584
    %v219 = vsel %vm217, %v193, 0
    %v222 = vsel %vm217, %v194, 0
    %v225 = vsel %vm217, %v195, 0
    %v228 = vsel %vm217, %v196, 0
    %v231 = vsel %vm217, %v197, 0
    %v234 = vsel %vm217, %v198, 0
    %v237 = vsel %vm217, %v199, 0
    %v240 = vsel %vm217, %v200, 0
    %v243 = vsel %vm217, %v201, 0
    %v246 = vsel %vm217, %v202, 0
    %v249 = vsel %vm217, %v203, 0
    %v252 = vsel %vm217, %v204, 0
    %v255 = vsel %vm217, %v205, 0
    %v258 = vsel %vm217, %v206, 0
    %260 = vmatprep.subr.mxu0 0.0
    %261 = vmatpush1.msra.mxu0 %v207
    %262 = vmatprep.subr.mxu0 0.0
    %263 = vmatpush1.msra.mxu0 %v208
    %264 = vmatprep.subr.mxu0 0.0
    %265 = vmatpush1.msra.mxu0 %v209
    %266 = vmatprep.subr.mxu0 0.0
    %267 = vmatpush1.msra.mxu0 0.0
    %268 = vmatprep.subr.mxu0 0.0
    %269 = vmatpush1.msra.mxu0 0.0
    %270 = vmatprep.subr.mxu0 0.0
    %271 = vmatpush1.msra.mxu0 0.0
    %272 = vmatprep.subr.mxu0 0.0
    %273 = vmatpush1.msra.mxu0 0.0
    %274 = vmatprep.subr.mxu0 0.0
    %275 = vmatpush1.msra.mxu0 0.0
    %276 = vmatprep.subr.mxu0 0.0
    %277 = vmatpush1.msra.mxu0 0.0
    %278 = vmatprep.subr.mxu0 0.0
    %279 = vmatpush1.msra.mxu0 0.0
    %280 = vmatprep.subr.mxu0 0.0
    %281 = vmatpush1.msra.mxu0 0.0
    %282 = vmatprep.subr.mxu0 0.0
    %283 = vmatpush1.msra.mxu0 0.0
    %284 = vmatprep.subr.mxu0 0.0
    %285 = vmatpush1.msra.mxu0 0.0
    %286 = vmatprep.subr.mxu0 0.0
    %287 = vmatpush1.msra.mxu0 0.0
    %288 = vmatprep.subr.mxu0 0.0
    %289 = vmatpush1.msra.mxu0 0.0
    %290 = vmatprep.subr.mxu0 0.0
    %291 = vmatpush1.msra.mxu0 0.0
    %292 = vmatprep.subr.mxu0 0.0
    %293 = vmatpush1.msra.mxu0 0.0
    %294 = vmatprep.subr.mxu0 0.0
    %295 = vmatpush1.msra.mxu0 0.0
    %296 = vmatprep.subr.mxu0 0.0
    %297 = vmatpush1.msra.mxu0 0.0
    %298 = vmatprep.subr.mxu0 0.0
    %299 = vmatpush1.msra.mxu0 0.0
    %300 = vmatprep.subr.mxu0 0.0
    %301 = vmatpush1.msra.mxu0 0.0
    %302 = vmatprep.subr.mxu0 0.0
    %303 = vmatpush1.msra.mxu0 0.0
    %304 = vmatprep.subr.mxu0 0.0
    %305 = vmatpush1.msra.mxu0 0.0
    %306 = vmatprep.subr.mxu0 0.0
    %307 = vmatpush1.msra.mxu0 0.0
    %308 = vmatprep.subr.mxu0 0.0
    %309 = vmatpush1.msra.mxu0 0.0
    %310 = vmatprep.subr.mxu0 0.0
    %311 = vmatpush1.msra.mxu0 0.0
    %312 = vmatprep.subr.mxu0 0.0
    %313 = vmatpush1.msra.mxu0 0.0
    %314 = vmatprep.subr.mxu0 0.0
    %315 = vmatpush1.msra.mxu0 0.0
    %316 = vmatprep.subr.mxu0 0.0
    %317 = vmatpush1.msra.mxu0 0.0
    %318 = vmatprep.subr.mxu0 0.0
    %319 = vmatpush1.msra.mxu0 0.0
    %320 = vmatprep.subr.mxu0 0.0
    %321 = vmatpush1.msra.mxu0 0.0
    %322 = vmatprep.subr.mxu0 0.0
    %323 = vmatpush1.msra.mxu0 0.0
    %324 = vmatprep.mubr.f32.mxu0 0.0
    %325 = vmatmul.mubr.f32.gmra.mrb[0].mxu0 %v219
    %v326 = vpop.f32.mrb[0].mxu0
    %v327 = vadd.f32 %v215, %v326
    %v328 = vpop.f32.mrb[0].mxu0
    %329 = vmatprep.mubr.f32.mxu0 0.0
    %330 = vmatmul.mubr.f32.gmra.mrb[0].mxu0 %v222
    %v331 = vpop.f32.mrb[0].mxu0
    %v332 = vadd.f32 %v215, %v331
    %v333 = vpop.f32.mrb[0].mxu0
    %334 = vmatprep.mubr.f32.mxu0 0.0
    %335 = vmatmul.mubr.f32.gmra.mrb[0].mxu0 %v225
    %v336 = vpop.f32.mrb[0].mxu0
    %v337 = vadd.f32 %v215, %v336
    %v338 = vpop.f32.mrb[0].mxu0
    %339 = vmatprep.mubr.f32.mxu0 0.0
    %340 = vmatmul.mubr.f32.gmra.mrb[0].mxu0 %v228
    %v341 = vpop.f32.mrb[0].mxu0
    %v342 = vadd.f32 %v215, %v341
    %v343 = vpop.f32.mrb[0].mxu0
    %344 = vmatprep.mubr.f32.mxu0 0.0
    %345 = vmatmul.mubr.f32.gmra.mrb[0].mxu0 %v231
    %v346 = vpop.f32.mrb[0].mxu0
    %v347 = vadd.f32 %v215, %v346
    %v348 = vpop.f32.mrb[0].mxu0
    %349 = vmatprep.mubr.f32.mxu0 0.0
    %350 = vmatmul.mubr.f32.gmra.mrb[0].mxu0 %v234
    %v351 = vpop.f32.mrb[0].mxu0
    %v352 = vadd.f32 %v215, %v351
    %v353 = vpop.f32.mrb[0].mxu0
    %354 = vmatprep.mubr.f32.mxu0 0.0
    %355 = vmatmul.mubr.f32.gmra.mrb[0].mxu0 %v237
    %v356 = vpop.f32.mrb[0].mxu0
    %v357 = vadd.f32 %v215, %v356
    %v358 = vpop.f32.mrb[0].mxu0
    %359 = vmatprep.mubr.f32.mxu0 0.0
    %360 = vmatmul.mubr.f32.gmra.mrb[0].mxu0 %v240
    %v361 = vpop.f32.mrb[0].mxu0
    %v362 = vadd.f32 %v215, %v361
    %v363 = vpop.f32.mrb[0].mxu0
    %364 = vmatprep.mubr.f32.mxu0 0.0
    %365 = vmatmul.mubr.f32.gmra.mrb[0].mxu0 %v243
    %v366 = vpop.f32.mrb[0].mxu0
    %v367 = vadd.f32 %v215, %v366
    %v368 = vpop.f32.mrb[0].mxu0
    %369 = vmatprep.mubr.f32.mxu0 0.0
    %370 = vmatmul.mubr.f32.gmra.mrb[0].mxu0 %v246
    %v371 = vpop.f32.mrb[0].mxu0
    %v372 = vadd.f32 %v215, %v371
    %v373 = vpop.f32.mrb[0].mxu0
    %374 = vmatprep.mubr.f32.mxu0 0.0
    %375 = vmatmul.mubr.f32.gmra.mrb[0].mxu0 %v249
    %v376 = vpop.f32.mrb[0].mxu0
    %v377 = vadd.f32 %v215, %v376
    %v378 = vpop.f32.mrb[0].mxu0
    %379 = vmatprep.mubr.f32.mxu0 0.0
    %380 = vmatmul.mubr.f32.gmra.mrb[0].mxu0 %v252
    %v381 = vpop.f32.mrb[0].mxu0
    %v382 = vadd.f32 %v215, %v381
    %v383 = vpop.f32.mrb[0].mxu0
    %384 = vmatprep.mubr.f32.mxu0 0.0
    %385 = vmatmul.mubr.f32.gmra.mrb[0].mxu0 %v255
    %v386 = vpop.f32.mrb[0].mxu0
    %v387 = vadd.f32 %v215, %v386
    %v388 = vpop.f32.mrb[0].mxu0
    %389 = vmatprep.mubr.f32.mxu0 0.0
    %390 = vmatmul.mubr.f32.gmra.mrb[0].mxu0 %v258
    %v391 = vpop.f32.mrb[0].mxu0
    %v392 = vadd.f32 %v215, %v391
    %v393 = vpop.f32.mrb[0].mxu0
    %394 = vdwg.mxu0
    %v395 = vmax.f32 %v327, 0.0
    %v396 = vmax.f32 %v332, 0.0
    %v397 = vmax.f32 %v337, 0.0
    %v398 = vmax.f32 %v342, 0.0
    %v399 = vmax.f32 %v347, 0.0
    %v400 = vmax.f32 %v352, 0.0
    %v401 = vmax.f32 %v357, 0.0
    %v402 = vmax.f32 %v362, 0.0
    %v403 = vmax.f32 %v367, 0.0
    %v404 = vmax.f32 %v372, 0.0
    %v405 = vmax.f32 %v377, 0.0
    %v406 = vmax.f32 %v382, 0.0
    %v407 = vmax.f32 %v387, 0.0
    %v408 = vmax.f32 %v392, 0.0
    %v409 = vld [vmem:[%s3] sm:$0xff]
    %v410 = vld [vmem:[%s3 + $0x8] sm:$0xff]
    %v411 = vld [vmem:[%s4] sm:$0x1]
    %v413 = vlaneseq
    %v414 = vshrl.u32 %v413, 7
    %v415 = vsub.s32 0, %v414
    %v416 = vrot.slane %v411, %v415
    %v419 = vsel %vm192, %v395, 0
    %v422 = vsel %vm192, %v396, 0
    %v425 = vsel %vm192, %v397, 0
    %v428 = vsel %vm192, %v398, 0
    %v431 = vsel %vm192, %v399, 0
    %v434 = vsel %vm192, %v400, 0
    %v437 = vsel %vm192, %v401, 0
    %v440 = vsel %vm192, %v402, 0
    %v443 = vsel %vm192, %v403, 0
    %v446 = vsel %vm192, %v404, 0
    %v449 = vsel %vm192, %v405, 0
    %v452 = vsel %vm192, %v406, 0
    %v455 = vsel %vm192, %v407, 0
    %v458 = vsel %vm192, %v408, 0
    %460 = vmatprep.subr.mxu0 0.0
    %461 = vmatpush1.msra.mxu0 %v409
    %462 = vmatprep.subr.mxu0 0.0
    %463 = vmatpush1.msra.mxu0 %v410
    %464 = vmatprep.subr.mxu0 0.0
    %465 = vmatpush1.msra.mxu0 0.0
    %466 = vmatprep.subr.mxu0 0.0
    %467 = vmatpush1.msra.mxu0 0.0
    %468 = vmatprep.subr.mxu0 0.0
    %469 = vmatpush1.msra.mxu0 0.0
    %470 = vmatprep.subr.mxu0 0.0
    %471 = vmatpush1.msra.mxu0 0.0
    %472 = vmatprep.subr.mxu0 0.0
    %473 = vmatpush1.msra.mxu0 0.0
    %474 = vmatprep.subr.mxu0 0.0
    %475 = vmatpush1.msra.mxu0 0.0
    %476 = vmatprep.subr.mxu0 0.0
    %477 = vmatpush1.msra.mxu0 0.0
    %478 = vmatprep.subr.mxu0 0.0
    %479 = vmatpush1.msra.mxu0 0.0
    %480 = vmatprep.subr.mxu0 0.0
    %481 = vmatpush1.msra.mxu0 0.0
    %482 = vmatprep.subr.mxu0 0.0
    %483 = vmatpush1.msra.mxu0 0.0
    %484 = vmatprep.subr.mxu0 0.0
    %485 = vmatpush1.msra.mxu0 0.0
    %486 = vmatprep.subr.mxu0 0.0
    %487 = vmatpush1.msra.mxu0 0.0
    %488 = vmatprep.subr.mxu0 0.0
    %489 = vmatpush1.msra.mxu0 0.0
    %490 = vmatprep.subr.mxu0 0.0
    %491 = vmatpush1.msra.mxu0 0.0
    %492 = vmatprep.subr.mxu0 0.0
    %493 = vmatpush1.msra.mxu0 0.0
    %494 = vmatprep.subr.mxu0 0.0
    %495 = vmatpush1.msra.mxu0 0.0
    %496 = vmatprep.subr.mxu0 0.0
    %497 = vmatpush1.msra.mxu0 0.0
    %498 = vmatprep.subr.mxu0 0.0
    %499 = vmatpush1.msra.mxu0 0.0
    %500 = vmatprep.subr.mxu0 0.0
    %501 = vmatpush1.msra.mxu0 0.0
    %502 = vmatprep.subr.mxu0 0.0
    %503 = vmatpush1.msra.mxu0 0.0
    %504 = vmatprep.subr.mxu0 0.0
    %505 = vmatpush1.msra.mxu0 0.0
    %506 = vmatprep.subr.mxu0 0.0
    %507 = vmatpush1.msra.mxu0 0.0
    %508 = vmatprep.subr.mxu0 0.0
    %509 = vmatpush1.msra.mxu0 0.0
    %510 = vmatprep.subr.mxu0 0.0
    %511 = vmatpush1.msra.mxu0 0.0
    %512 = vmatprep.subr.mxu0 0.0
    %513 = vmatpush1.msra.mxu0 0.0
    %514 = vmatprep.subr.mxu0 0.0
    %515 = vmatpush1.msra.mxu0 0.0
    %516 = vmatprep.subr.mxu0 0.0
    %517 = vmatpush1.msra.mxu0 0.0
    %518 = vmatprep.subr.mxu0 0.0
    %519 = vmatpush1.msra.mxu0 0.0
    %520 = vmatprep.subr.mxu0 0.0
    %521 = vmatpush1.msra.mxu0 0.0
    %522 = vmatprep.subr.mxu0 0.0
    %523 = vmatpush1.msra.mxu0 0.0
    %524 = vmatprep.mubr.f32.mxu0 0.0
    %525 = vmatmul.mubr.f32.gmra.mrb[0].mxu0 %v419
    %v526 = vpop.f32.mrb[0].mxu0
    %v527 = vadd.f32 %v416, %v526
    %v528 = vpop.f32.mrb[0].mxu0
    %529 = vmatprep.mubr.f32.mxu0 0.0
    %530 = vmatmul.mubr.f32.gmra.mrb[0].mxu0 %v422
    %v531 = vpop.f32.mrb[0].mxu0
    %v532 = vadd.f32 %v416, %v531
    %v533 = vpop.f32.mrb[0].mxu0
    %534 = vmatprep.mubr.f32.mxu0 0.0
    %535 = vmatmul.mubr.f32.gmra.mrb[0].mxu0 %v425
    %v536 = vpop.f32.mrb[0].mxu0
    %v537 = vadd.f32 %v416, %v536
    %v538 = vpop.f32.mrb[0].mxu0
    %539 = vmatprep.mubr.f32.mxu0 0.0
    %540 = vmatmul.mubr.f32.gmra.mrb[0].mxu0 %v428
    %v541 = vpop.f32.mrb[0].mxu0
    %v542 = vadd.f32 %v416, %v541
    %v543 = vpop.f32.mrb[0].mxu0
    %544 = vmatprep.mubr.f32.mxu0 0.0
    %545 = vmatmul.mubr.f32.gmra.mrb[0].mxu0 %v431
    %v546 = vpop.f32.mrb[0].mxu0
    %v547 = vadd.f32 %v416, %v546
    %v548 = vpop.f32.mrb[0].mxu0
    %549 = vmatprep.mubr.f32.mxu0 0.0
    %550 = vmatmul.mubr.f32.gmra.mrb[0].mxu0 %v434
    %v551 = vpop.f32.mrb[0].mxu0
    %v552 = vadd.f32 %v416, %v551
    %v553 = vpop.f32.mrb[0].mxu0
    %554 = vmatprep.mubr.f32.mxu0 0.0
    %555 = vmatmul.mubr.f32.gmra.mrb[0].mxu0 %v437
    %v556 = vpop.f32.mrb[0].mxu0
    %v557 = vadd.f32 %v416, %v556
    %v558 = vpop.f32.mrb[0].mxu0
    %559 = vmatprep.mubr.f32.mxu0 0.0
    %560 = vmatmul.mubr.f32.gmra.mrb[0].mxu0 %v440
    %v561 = vpop.f32.mrb[0].mxu0
    %v562 = vadd.f32 %v416, %v561
    %v563 = vpop.f32.mrb[0].mxu0
    %564 = vmatprep.mubr.f32.mxu0 0.0
    %565 = vmatmul.mubr.f32.gmra.mrb[0].mxu0 %v443
    %v566 = vpop.f32.mrb[0].mxu0
    %v567 = vadd.f32 %v416, %v566
    %v568 = vpop.f32.mrb[0].mxu0
    %569 = vmatprep.mubr.f32.mxu0 0.0
    %570 = vmatmul.mubr.f32.gmra.mrb[0].mxu0 %v446
    %v571 = vpop.f32.mrb[0].mxu0
    %v572 = vadd.f32 %v416, %v571
    %v573 = vpop.f32.mrb[0].mxu0
    %574 = vmatprep.mubr.f32.mxu0 0.0
    %575 = vmatmul.mubr.f32.gmra.mrb[0].mxu0 %v449
    %v576 = vpop.f32.mrb[0].mxu0
    %v577 = vadd.f32 %v416, %v576
    %v578 = vpop.f32.mrb[0].mxu0
    %579 = vmatprep.mubr.f32.mxu0 0.0
    %580 = vmatmul.mubr.f32.gmra.mrb[0].mxu0 %v452
    %v581 = vpop.f32.mrb[0].mxu0
    %v582 = vadd.f32 %v416, %v581
    %v583 = vpop.f32.mrb[0].mxu0
    %584 = vmatprep.mubr.f32.mxu0 0.0
    %585 = vmatmul.mubr.f32.gmra.mrb[0].mxu0 %v455
    %v586 = vpop.f32.mrb[0].mxu0
    %v587 = vadd.f32 %v416, %v586
    %v588 = vpop.f32.mrb[0].mxu0
    %589 = vmatprep.mubr.f32.mxu0 0.0
    %590 = vmatmul.mubr.f32.gmra.mrb[0].mxu0 %v458
    %v591 = vpop.f32.mrb[0].mxu0
    %v592 = vadd.f32 %v416, %v591
    %v593 = vpop.f32.mrb[0].mxu0
    %594 = vdwg.mxu0
    %v595 = vld [vmem:[%s5] sm:$0xff]
    %v596 = vld [vmem:[%s5 + $0x8] sm:$0xff]
    %v597 = vld [vmem:[%s5 + $0x10] sm:$0xff]
    %v598 = vld [vmem:[%s5 + $0x18] sm:$0xff]
    %v599 = vld [vmem:[%s6] sm:$0x1]
    %v600 = vld [vmem:[%s7] sm:$0xf]
    %v601 = vld [vmem:[%s8] sm:$0x1]
    %vm602 = vcmask 261120
    %v604 = vsel %vm602, 0.0, 0
    %606 = vmatprep.subr.mxu0 0.0
    %607 = vmatpush1.msra.mxu0 %v595
    %608 = vmatprep.subr.mxu0 0.0
    %609 = vmatpush1.msra.mxu0 %v596
    %610 = vmatprep.subr.mxu0 0.0
    %611 = vmatpush1.msra.mxu0 %v597
    %612 = vmatprep.subr.mxu0 0.0
    %613 = vmatpush1.msra.mxu0 %v598
    %614 = vmatprep.subr.mxu0 0.0
    %615 = vmatpush1.msra.mxu0 0.0
    %616 = vmatprep.subr.mxu0 0.0
    %617 = vmatpush1.msra.mxu0 0.0
    %618 = vmatprep.subr.mxu0 0.0
    %619 = vmatpush1.msra.mxu0 0.0
    %620 = vmatprep.subr.mxu0 0.0
    %621 = vmatpush1.msra.mxu0 0.0
    %622 = vmatprep.subr.mxu0 0.0
    %623 = vmatpush1.msra.mxu0 0.0
    %624 = vmatprep.subr.mxu0 0.0
    %625 = vmatpush1.msra.mxu0 0.0
    %626 = vmatprep.subr.mxu0 0.0
    %627 = vmatpush1.msra.mxu0 0.0
    %628 = vmatprep.subr.mxu0 0.0
    %629 = vmatpush1.msra.mxu0 0.0
    %630 = vmatprep.subr.mxu0 0.0
    %631 = vmatpush1.msra.mxu0 0.0
    %632 = vmatprep.subr.mxu0 0.0
    %633 = vmatpush1.msra.mxu0 0.0
    %634 = vmatprep.subr.mxu0 0.0
    %635 = vmatpush1.msra.mxu0 0.0
    %636 = vmatprep.subr.mxu0 0.0
    %637 = vmatpush1.msra.mxu0 0.0
    %638 = vmatprep.subr.mxu0 0.0
    %639 = vmatpush1.msra.mxu0 0.0
    %640 = vmatprep.subr.mxu0 0.0
    %641 = vmatpush1.msra.mxu0 0.0
    %642 = vmatprep.subr.mxu0 0.0
    %643 = vmatpush1.msra.mxu0 0.0
    %644 = vmatprep.subr.mxu0 0.0
    %645 = vmatpush1.msra.mxu0 0.0
    %646 = vmatprep.subr.mxu0 0.0
    %647 = vmatpush1.msra.mxu0 0.0
    %648 = vmatprep.subr.mxu0 0.0
    %649 = vmatpush1.msra.mxu0 0.0
    %650 = vmatprep.subr.mxu0 0.0
    %651 = vmatpush1.msra.mxu0 0.0
    %652 = vmatprep.subr.mxu0 0.0
    %653 = vmatpush1.msra.mxu0 0.0
    %654 = vmatprep.subr.mxu0 0.0
    %655 = vmatpush1.msra.mxu0 0.0
    %656 = vmatprep.subr.mxu0 0.0
    %657 = vmatpush1.msra.mxu0 0.0
    %658 = vmatprep.subr.mxu0 0.0
    %659 = vmatpush1.msra.mxu0 0.0
    %660 = vmatprep.subr.mxu0 0.0
    %661 = vmatpush1.msra.mxu0 0.0
    %662 = vmatprep.subr.mxu0 0.0
    %663 = vmatpush1.msra.mxu0 0.0
    %664 = vmatprep.subr.mxu0 0.0
    %665 = vmatpush1.msra.mxu0 0.0
    %666 = vmatprep.subr.mxu0 0.0
    %667 = vmatpush1.msra.mxu0 0.0
    %668 = vmatprep.subr.mxu0 0.0
    %669 = vmatpush1.msra.mxu0 0.0
    %670 = vmatprep.mubr.f32.mxu0 0.0
    %671 = vmatmul.mubr.f32.gmra.mrb[0].mxu0 %v604
    %v672 = vpop.f32.mrb[0].mxu0
    %v673 = vadd.f32 0.0, %v672
    %v674 = vpop.f32.mrb[0].mxu0
    %675 = vdwg.mxu0
    %v676 = vadd.f32 %v527, %v673
    %v677 = vxor.u32 %v676, 2147483648
    %v678 = vmul.f32 %v677, 1.442695
    %v679 = vpow.pop %v678
    %v680 = vadd.f32 %v679, 1.0
    %v681 = vrcp.pop %v680
    %v682 = vmul.f32 1.0, %v681
    %v684 = vlaneseq
    %v685 = vshrl.u32 %v684, 7
    %v686 = vsub.s32 0, %v685
    %v687 = vrot.slane %v599, %v686
    %688 = vrot.lane.b32.xlu0 %v687, 64
    %v689 = vpop.permute.xlu0 %688
    %v691 = vadd.f32 %v673, %v689
    %693 = vrot.lane.b32.xlu0 %v691, 64
    %v694 = vpop.permute.xlu0 %693
    %v696 = vmul.f32 %v682, %v694
    %698 = vrot.lane.b32.xlu0 %v696, 64
    %v699 = vpop.permute.xlu0 %698
    %v701 = vadd.f32 %v527, %v699
    %v702 = vtanh.pop %v701
    %v703 = vsub.f32 1.0, %v682
    %705 = vrot.lane.b32.xlu0 %v702, 96
    %v706 = vpop.permute.xlu0 %705
    %v708 = vmul.f32 %v703, %v706
    %v709 = vmul.f32 %v682, 0.0
    %v710 = vadd.f32 %v708, %v709
    %712 = vrot.lane.b32.xlu0 %v710, 96
    %v713 = vpop.permute.xlu0 %712
    %v714 = vsel %vm602, %v713, 0
    %716 = vmatprep.subr.mxu0 0.0
    %717 = vmatpush1.msra.mxu0 %v595
    %718 = vmatprep.subr.mxu0 0.0
    %719 = vmatpush1.msra.mxu0 %v596
    %720 = vmatprep.subr.mxu0 0.0
    %721 = vmatpush1.msra.mxu0 %v597
    %722 = vmatprep.subr.mxu0 0.0
    %723 = vmatpush1.msra.mxu0 %v598
    %724 = vmatprep.subr.mxu0 0.0
    %725 = vmatpush1.msra.mxu0 0.0
    %726 = vmatprep.subr.mxu0 0.0
    %727 = vmatpush1.msra.mxu0 0.0
    %728 = vmatprep.subr.mxu0 0.0
    %729 = vmatpush1.msra.mxu0 0.0
    %730 = vmatprep.subr.mxu0 0.0
    %731 = vmatpush1.msra.mxu0 0.0
    %732 = vmatprep.subr.mxu0 0.0
    %733 = vmatpush1.msra.mxu0 0.0
    %734 = vmatprep.subr.mxu0 0.0
    %735 = vmatpush1.msra.mxu0 0.0
    %736 = vmatprep.subr.mxu0 0.0
    %737 = vmatpush1.msra.mxu0 0.0
    %738 = vmatprep.subr.mxu0 0.0
    %739 = vmatpush1.msra.mxu0 0.0
    %740 = vmatprep.subr.mxu0 0.0
    %741 = vmatpush1.msra.mxu0 0.0
    %742 = vmatprep.subr.mxu0 0.0
    %743 = vmatpush1.msra.mxu0 0.0
    %744 = vmatprep.subr.mxu0 0.0
    %745 = vmatpush1.msra.mxu0 0.0
    %746 = vmatprep.subr.mxu0 0.0
    %747 = vmatpush1.msra.mxu0 0.0
    %748 = vmatprep.subr.mxu0 0.0
    %749 = vmatpush1.msra.mxu0 0.0
    %750 = vmatprep.subr.mxu0 0.0
    %751 = vmatpush1.msra.mxu0 0.0
    %752 = vmatprep.subr.mxu0 0.0
    %753 = vmatpush1.msra.mxu0 0.0
    %754 = vmatprep.subr.mxu0 0.0
    %755 = vmatpush1.msra.mxu0 0.0
    %756 = vmatprep.subr.mxu0 0.0
    %757 = vmatpush1.msra.mxu0 0.0
    %758 = vmatprep.subr.mxu0 0.0
    %759 = vmatpush1.msra.mxu0 0.0
    %760 = vmatprep.subr.mxu0 0.0
    %761 = vmatpush1.msra.mxu0 0.0
    %762 = vmatprep.subr.mxu0 0.0
    %763 = vmatpush1.msra.mxu0 0.0
    %764 = vmatprep.subr.mxu0 0.0
    %765 = vmatpush1.msra.mxu0 0.0
    %766 = vmatprep.subr.mxu0 0.0
    %767 = vmatpush1.msra.mxu0 0.0
    %768 = vmatprep.subr.mxu0 0.0
    %769 = vmatpush1.msra.mxu0 0.0
    %770 = vmatprep.subr.mxu0 0.0
    %771 = vmatpush1.msra.mxu0 0.0
    %772 = vmatprep.subr.mxu0 0.0
    %773 = vmatpush1.msra.mxu0 0.0
    %774 = vmatprep.subr.mxu0 0.0
    %775 = vmatpush1.msra.mxu0 0.0
    %776 = vmatprep.subr.mxu0 0.0
    %777 = vmatpush1.msra.mxu0 0.0
    %778 = vmatprep.subr.mxu0 0.0
    %779 = vmatpush1.msra.mxu0 0.0
    %780 = vmatprep.mubr.f32.mxu0 0.0
    %781 = vmatmul.mubr.f32.gmra.mrb[0].mxu0 %v714
    %v782 = vpop.f32.mrb[0].mxu0
    %v783 = vadd.f32 0.0, %v782
    %v784 = vpop.f32.mrb[0].mxu0
    %785 = vdwg.mxu0
    %v786 = vadd.f32 %v532, %v783
    %v787 = vxor.u32 %v786, 2147483648
    %v788 = vmul.f32 %v787, 1.442695
    %v789 = vpow.pop %v788
    %v790 = vadd.f32 %v789, 1.0
    %v791 = vrcp.pop %v790
    %v792 = vmul.f32 1.0, %v791
    %v793 = vadd.f32 %v783, %v689
    %795 = vrot.lane.b32.xlu0 %v793, 64
    %v796 = vpop.permute.xlu0 %795
    %v798 = vmul.f32 %v792, %v796
    %800 = vrot.lane.b32.xlu0 %v798, 64
    %v801 = vpop.permute.xlu0 %800
    %v803 = vadd.f32 %v532, %v801
    %v804 = vtanh.pop %v803
    %v805 = vsub.f32 1.0, %v792
    %807 = vrot.lane.b32.xlu0 %v804, 96
    %v808 = vpop.permute.xlu0 %807
    %v810 = vmul.f32 %v805, %v808
    %v811 = vmul.f32 %v792, %v710
    %v812 = vadd.f32 %v810, %v811
    %814 = vrot.lane.b32.xlu0 %v812, 96
    %v815 = vpop.permute.xlu0 %814
    %v816 = vsel %vm602, %v815, 0
    %818 = vmatprep.subr.mxu0 0.0
    %819 = vmatpush1.msra.mxu0 %v595
    %820 = vmatprep.subr.mxu0 0.0
    %821 = vmatpush1.msra.mxu0 %v596
    %822 = vmatprep.subr.mxu0 0.0
    %823 = vmatpush1.msra.mxu0 %v597
    %824 = vmatprep.subr.mxu0 0.0
    %825 = vmatpush1.msra.mxu0 %v598
    %826 = vmatprep.subr.mxu0 0.0
    %827 = vmatpush1.msra.mxu0 0.0
    %828 = vmatprep.subr.mxu0 0.0
    %829 = vmatpush1.msra.mxu0 0.0
    %830 = vmatprep.subr.mxu0 0.0
    %831 = vmatpush1.msra.mxu0 0.0
    %832 = vmatprep.subr.mxu0 0.0
    %833 = vmatpush1.msra.mxu0 0.0
    %834 = vmatprep.subr.mxu0 0.0
    %835 = vmatpush1.msra.mxu0 0.0
    %836 = vmatprep.subr.mxu0 0.0
    %837 = vmatpush1.msra.mxu0 0.0
    %838 = vmatprep.subr.mxu0 0.0
    %839 = vmatpush1.msra.mxu0 0.0
    %840 = vmatprep.subr.mxu0 0.0
    %841 = vmatpush1.msra.mxu0 0.0
    %842 = vmatprep.subr.mxu0 0.0
    %843 = vmatpush1.msra.mxu0 0.0
    %844 = vmatprep.subr.mxu0 0.0
    %845 = vmatpush1.msra.mxu0 0.0
    %846 = vmatprep.subr.mxu0 0.0
    %847 = vmatpush1.msra.mxu0 0.0
    %848 = vmatprep.subr.mxu0 0.0
    %849 = vmatpush1.msra.mxu0 0.0
    %850 = vmatprep.subr.mxu0 0.0
    %851 = vmatpush1.msra.mxu0 0.0
    %852 = vmatprep.subr.mxu0 0.0
    %853 = vmatpush1.msra.mxu0 0.0
    %854 = vmatprep.subr.mxu0 0.0
    %855 = vmatpush1.msra.mxu0 0.0
    %856 = vmatprep.subr.mxu0 0.0
    %857 = vmatpush1.msra.mxu0 0.0
    %858 = vmatprep.subr.mxu0 0.0
    %859 = vmatpush1.msra.mxu0 0.0
    %860 = vmatprep.subr.mxu0 0.0
    %861 = vmatpush1.msra.mxu0 0.0
    %862 = vmatprep.subr.mxu0 0.0
    %863 = vmatpush1.msra.mxu0 0.0
    %864 = vmatprep.subr.mxu0 0.0
    %865 = vmatpush1.msra.mxu0 0.0
    %866 = vmatprep.subr.mxu0 0.0
    %867 = vmatpush1.msra.mxu0 0.0
    %868 = vmatprep.subr.mxu0 0.0
    %869 = vmatpush1.msra.mxu0 0.0
    %870 = vmatprep.subr.mxu0 0.0
    %871 = vmatpush1.msra.mxu0 0.0
    %872 = vmatprep.subr.mxu0 0.0
    %873 = vmatpush1.msra.mxu0 0.0
    %874 = vmatprep.subr.mxu0 0.0
    %875 = vmatpush1.msra.mxu0 0.0
    %876 = vmatprep.subr.mxu0 0.0
    %877 = vmatpush1.msra.mxu0 0.0
    %878 = vmatprep.subr.mxu0 0.0
    %879 = vmatpush1.msra.mxu0 0.0
    %880 = vmatprep.subr.mxu0 0.0
    %881 = vmatpush1.msra.mxu0 0.0
    %882 = vmatprep.mubr.f32.mxu0 0.0
    %883 = vmatmul.mubr.f32.gmra.mrb[0].mxu0 %v816
    %v884 = vpop.f32.mrb[0].mxu0
    %v885 = vadd.f32 0.0, %v884
    %v886 = vpop.f32.mrb[0].mxu0
    %887 = vdwg.mxu0
    %v888 = vadd.f32 %v537, %v885
    %v889 = vxor.u32 %v888, 2147483648
    %v890 = vmul.f32 %v889, 1.442695
    %v891 = vpow.pop %v890
    %v892 = vadd.f32 %v891, 1.0
    %v893 = vrcp.pop %v892
    %v894 = vmul.f32 1.0, %v893
    %v895 = vadd.f32 %v885, %v689
    %897 = vrot.lane.b32.xlu0 %v895, 64
    %v898 = vpop.permute.xlu0 %897
    %v900 = vmul.f32 %v894, %v898
    %902 = vrot.lane.b32.xlu0 %v900, 64
    %v903 = vpop.permute.xlu0 %902
    %v905 = vadd.f32 %v537, %v903
    %v906 = vtanh.pop %v905
    %v907 = vsub.f32 1.0, %v894
    %909 = vrot.lane.b32.xlu0 %v906, 96
    %v910 = vpop.permute.xlu0 %909
    %v912 = vmul.f32 %v907, %v910
    %v913 = vmul.f32 %v894, %v812
    %v914 = vadd.f32 %v912, %v913
    %916 = vrot.lane.b32.xlu0 %v914, 96
    %v917 = vpop.permute.xlu0 %916
    %v918 = vsel %vm602, %v917, 0
    %920 = vmatprep.subr.mxu0 0.0
    %921 = vmatpush1.msra.mxu0 %v595
    %922 = vmatprep.subr.mxu0 0.0
    %923 = vmatpush1.msra.mxu0 %v596
    %924 = vmatprep.subr.mxu0 0.0
    %925 = vmatpush1.msra.mxu0 %v597
    %926 = vmatprep.subr.mxu0 0.0
    %927 = vmatpush1.msra.mxu0 %v598
    %928 = vmatprep.subr.mxu0 0.0
    %929 = vmatpush1.msra.mxu0 0.0
    %930 = vmatprep.subr.mxu0 0.0
    %931 = vmatpush1.msra.mxu0 0.0
    %932 = vmatprep.subr.mxu0 0.0
    %933 = vmatpush1.msra.mxu0 0.0
    %934 = vmatprep.subr.mxu0 0.0
    %935 = vmatpush1.msra.mxu0 0.0
    %936 = vmatprep.subr.mxu0 0.0
    %937 = vmatpush1.msra.mxu0 0.0
    %938 = vmatprep.subr.mxu0 0.0
    %939 = vmatpush1.msra.mxu0 0.0
    %940 = vmatprep.subr.mxu0 0.0
    %941 = vmatpush1.msra.mxu0 0.0
    %942 = vmatprep.subr.mxu0 0.0
    %943 = vmatpush1.msra.mxu0 0.0
    %944 = vmatprep.subr.mxu0 0.0
    %945 = vmatpush1.msra.mxu0 0.0
    %946 = vmatprep.subr.mxu0 0.0
    %947 = vmatpush1.msra.mxu0 0.0
    %948 = vmatprep.subr.mxu0 0.0
    %949 = vmatpush1.msra.mxu0 0.0
    %950 = vmatprep.subr.mxu0 0.0
    %951 = vmatpush1.msra.mxu0 0.0
    %952 = vmatprep.subr.mxu0 0.0
    %953 = vmatpush1.msra.mxu0 0.0
    %954 = vmatprep.subr.mxu0 0.0
    %955 = vmatpush1.msra.mxu0 0.0
    %956 = vmatprep.subr.mxu0 0.0
    %957 = vmatpush1.msra.mxu0 0.0
    %958 = vmatprep.subr.mxu0 0.0
    %959 = vmatpush1.msra.mxu0 0.0
    %960 = vmatprep.subr.mxu0 0.0
    %961 = vmatpush1.msra.mxu0 0.0
    %962 = vmatprep.subr.mxu0 0.0
    %963 = vmatpush1.msra.mxu0 0.0
    %964 = vmatprep.subr.mxu0 0.0
    %965 = vmatpush1.msra.mxu0 0.0
    %966 = vmatprep.subr.mxu0 0.0
    %967 = vmatpush1.msra.mxu0 0.0
    %968 = vmatprep.subr.mxu0 0.0
    %969 = vmatpush1.msra.mxu0 0.0
    %970 = vmatprep.subr.mxu0 0.0
    %971 = vmatpush1.msra.mxu0 0.0
    %972 = vmatprep.subr.mxu0 0.0
    %973 = vmatpush1.msra.mxu0 0.0
    %974 = vmatprep.subr.mxu0 0.0
    %975 = vmatpush1.msra.mxu0 0.0
    %976 = vmatprep.subr.mxu0 0.0
    %977 = vmatpush1.msra.mxu0 0.0
    %978 = vmatprep.subr.mxu0 0.0
    %979 = vmatpush1.msra.mxu0 0.0
    %980 = vmatprep.subr.mxu0 0.0
    %981 = vmatpush1.msra.mxu0 0.0
    %982 = vmatprep.subr.mxu0 0.0
    %983 = vmatpush1.msra.mxu0 0.0
    %984 = vmatprep.mubr.f32.mxu0 0.0
    %985 = vmatmul.mubr.f32.gmra.mrb[0].mxu0 %v918
    %v986 = vpop.f32.mrb[0].mxu0
    %v987 = vadd.f32 0.0, %v986
    %v988 = vpop.f32.mrb[0].mxu0
    %989 = vdwg.mxu0
    %v990 = vadd.f32 %v542, %v987
    %v991 = vxor.u32 %v990, 2147483648
    %v992 = vmul.f32 %v991, 1.442695
    %v993 = vpow.pop %v992
    %v994 = vadd.f32 %v993, 1.0
    %v995 = vrcp.pop %v994
    %v996 = vmul.f32 1.0, %v995
    %v997 = vadd.f32 %v987, %v689
    %999 = vrot.lane.b32.xlu0 %v997, 64
    %v1000 = vpop.permute.xlu0 %999
    %v1002 = vmul.f32 %v996, %v1000
    %1004 = vrot.lane.b32.xlu0 %v1002, 64
    %v1005 = vpop.permute.xlu0 %1004
    %v1007 = vadd.f32 %v542, %v1005
    %v1008 = vtanh.pop %v1007
    %v1009 = vsub.f32 1.0, %v996
    %1011 = vrot.lane.b32.xlu0 %v1008, 96
    %v1012 = vpop.permute.xlu0 %1011
    %v1014 = vmul.f32 %v1009, %v1012
    %v1015 = vmul.f32 %v996, %v914
    %v1016 = vadd.f32 %v1014, %v1015
    %1018 = vrot.lane.b32.xlu0 %v1016, 96
    %v1019 = vpop.permute.xlu0 %1018
    %v1020 = vsel %vm602, %v1019, 0
    %1022 = vmatprep.subr.mxu0 0.0
    %1023 = vmatpush1.msra.mxu0 %v595
    %1024 = vmatprep.subr.mxu0 0.0
    %1025 = vmatpush1.msra.mxu0 %v596
    %1026 = vmatprep.subr.mxu0 0.0
    %1027 = vmatpush1.msra.mxu0 %v597
    %1028 = vmatprep.subr.mxu0 0.0
    %1029 = vmatpush1.msra.mxu0 %v598
    %1030 = vmatprep.subr.mxu0 0.0
    %1031 = vmatpush1.msra.mxu0 0.0
    %1032 = vmatprep.subr.mxu0 0.0
    %1033 = vmatpush1.msra.mxu0 0.0
    %1034 = vmatprep.subr.mxu0 0.0
    %1035 = vmatpush1.msra.mxu0 0.0
    %1036 = vmatprep.subr.mxu0 0.0
    %1037 = vmatpush1.msra.mxu0 0.0
    %1038 = vmatprep.subr.mxu0 0.0
    %1039 = vmatpush1.msra.mxu0 0.0
    %1040 = vmatprep.subr.mxu0 0.0
    %1041 = vmatpush1.msra.mxu0 0.0
    %1042 = vmatprep.subr.mxu0 0.0
    %1043 = vmatpush1.msra.mxu0 0.0
    %1044 = vmatprep.subr.mxu0 0.0
    %1045 = vmatpush1.msra.mxu0 0.0
    %1046 = vmatprep.subr.mxu0 0.0
    %1047 = vmatpush1.msra.mxu0 0.0
    %1048 = vmatprep.subr.mxu0 0.0
    %1049 = vmatpush1.msra.mxu0 0.0
    %1050 = vmatprep.subr.mxu0 0.0
    %1051 = vmatpush1.msra.mxu0 0.0
    %1052 = vmatprep.subr.mxu0 0.0
    %1053 = vmatpush1.msra.mxu0 0.0
    %1054 = vmatprep.subr.mxu0 0.0
    %1055 = vmatpush1.msra.mxu0 0.0
    %1056 = vmatprep.subr.mxu0 0.0
    %1057 = vmatpush1.msra.mxu0 0.0
    %1058 = vmatprep.subr.mxu0 0.0
    %1059 = vmatpush1.msra.mxu0 0.0
    %1060 = vmatprep.subr.mxu0 0.0
    %1061 = vmatpush1.msra.mxu0 0.0
    %1062 = vmatprep.subr.mxu0 0.0
    %1063 = vmatpush1.msra.mxu0 0.0
    %1064 = vmatprep.subr.mxu0 0.0
    %1065 = vmatpush1.msra.mxu0 0.0
    %1066 = vmatprep.subr.mxu0 0.0
    %1067 = vmatpush1.msra.mxu0 0.0
    %1068 = vmatprep.subr.mxu0 0.0
    %1069 = vmatpush1.msra.mxu0 0.0
    %1070 = vmatprep.subr.mxu0 0.0
    %1071 = vmatpush1.msra.mxu0 0.0
    %1072 = vmatprep.subr.mxu0 0.0
    %1073 = vmatpush1.msra.mxu0 0.0
    %1074 = vmatprep.subr.mxu0 0.0
    %1075 = vmatpush1.msra.mxu0 0.0
    %1076 = vmatprep.subr.mxu0 0.0
    %1077 = vmatpush1.msra.mxu0 0.0
    %1078 = vmatprep.subr.mxu0 0.0
    %1079 = vmatpush1.msra.mxu0 0.0
    %1080 = vmatprep.subr.mxu0 0.0
    %1081 = vmatpush1.msra.mxu0 0.0
    %1082 = vmatprep.subr.mxu0 0.0
    %1083 = vmatpush1.msra.mxu0 0.0
    %1084 = vmatprep.subr.mxu0 0.0
    %1085 = vmatpush1.msra.mxu0 0.0
    %1086 = vmatprep.mubr.f32.mxu0 0.0
    %1087 = vmatmul.mubr.f32.gmra.mrb[0].mxu0 %v1020
    %v1088 = vpop.f32.mrb[0].mxu0
    %v1089 = vadd.f32 0.0, %v1088
    %v1090 = vpop.f32.mrb[0].mxu0
    %1091 = vdwg.mxu0
    %v1092 = vadd.f32 %v547, %v1089
    %v1093 = vxor.u32 %v1092, 2147483648
    %v1094 = vmul.f32 %v1093, 1.442695
    %v1095 = vpow.pop %v1094
    %v1096 = vadd.f32 %v1095, 1.0
    %v1097 = vrcp.pop %v1096
    %v1098 = vmul.f32 1.0, %v1097
    %v1099 = vadd.f32 %v1089, %v689
    %1101 = vrot.lane.b32.xlu0 %v1099, 64
    %v1102 = vpop.permute.xlu0 %1101
    %v1104 = vmul.f32 %v1098, %v1102
    %1106 = vrot.lane.b32.xlu0 %v1104, 64
    %v1107 = vpop.permute.xlu0 %1106
    %v1109 = vadd.f32 %v547, %v1107
    %v1110 = vtanh.pop %v1109
    %v1111 = vsub.f32 1.0, %v1098
    %1113 = vrot.lane.b32.xlu0 %v1110, 96
    %v1114 = vpop.permute.xlu0 %1113
    %v1116 = vmul.f32 %v1111, %v1114
    %v1117 = vmul.f32 %v1098, %v1016
    %v1118 = vadd.f32 %v1116, %v1117
    %1120 = vrot.lane.b32.xlu0 %v1118, 96
    %v1121 = vpop.permute.xlu0 %1120
    %v1122 = vsel %vm602, %v1121, 0
    %1124 = vmatprep.subr.mxu0 0.0
    %1125 = vmatpush1.msra.mxu0 %v595
    %1126 = vmatprep.subr.mxu0 0.0
    %1127 = vmatpush1.msra.mxu0 %v596
    %1128 = vmatprep.subr.mxu0 0.0
    %1129 = vmatpush1.msra.mxu0 %v597
    %1130 = vmatprep.subr.mxu0 0.0
    %1131 = vmatpush1.msra.mxu0 %v598
    %1132 = vmatprep.subr.mxu0 0.0
    %1133 = vmatpush1.msra.mxu0 0.0
    %1134 = vmatprep.subr.mxu0 0.0
    %1135 = vmatpush1.msra.mxu0 0.0
    %1136 = vmatprep.subr.mxu0 0.0
    %1137 = vmatpush1.msra.mxu0 0.0
    %1138 = vmatprep.subr.mxu0 0.0
    %1139 = vmatpush1.msra.mxu0 0.0
    %1140 = vmatprep.subr.mxu0 0.0
    %1141 = vmatpush1.msra.mxu0 0.0
    %1142 = vmatprep.subr.mxu0 0.0
    %1143 = vmatpush1.msra.mxu0 0.0
    %1144 = vmatprep.subr.mxu0 0.0
    %1145 = vmatpush1.msra.mxu0 0.0
    %1146 = vmatprep.subr.mxu0 0.0
    %1147 = vmatpush1.msra.mxu0 0.0
    %1148 = vmatprep.subr.mxu0 0.0
    %1149 = vmatpush1.msra.mxu0 0.0
    %1150 = vmatprep.subr.mxu0 0.0
    %1151 = vmatpush1.msra.mxu0 0.0
    %1152 = vmatprep.subr.mxu0 0.0
    %1153 = vmatpush1.msra.mxu0 0.0
    %1154 = vmatprep.subr.mxu0 0.0
    %1155 = vmatpush1.msra.mxu0 0.0
    %1156 = vmatprep.subr.mxu0 0.0
    %1157 = vmatpush1.msra.mxu0 0.0
    %1158 = vmatprep.subr.mxu0 0.0
    %1159 = vmatpush1.msra.mxu0 0.0
    %1160 = vmatprep.subr.mxu0 0.0
    %1161 = vmatpush1.msra.mxu0 0.0
    %1162 = vmatprep.subr.mxu0 0.0
    %1163 = vmatpush1.msra.mxu0 0.0
    %1164 = vmatprep.subr.mxu0 0.0
    %1165 = vmatpush1.msra.mxu0 0.0
    %1166 = vmatprep.subr.mxu0 0.0
    %1167 = vmatpush1.msra.mxu0 0.0
    %1168 = vmatprep.subr.mxu0 0.0
    %1169 = vmatpush1.msra.mxu0 0.0
    %1170 = vmatprep.subr.mxu0 0.0
    %1171 = vmatpush1.msra.mxu0 0.0
    %1172 = vmatprep.subr.mxu0 0.0
    %1173 = vmatpush1.msra.mxu0 0.0
    %1174 = vmatprep.subr.mxu0 0.0
    %1175 = vmatpush1.msra.mxu0 0.0
    %1176 = vmatprep.subr.mxu0 0.0
    %1177 = vmatpush1.msra.mxu0 0.0
    %1178 = vmatprep.subr.mxu0 0.0
    %1179 = vmatpush1.msra.mxu0 0.0
    %1180 = vmatprep.subr.mxu0 0.0
    %1181 = vmatpush1.msra.mxu0 0.0
    %1182 = vmatprep.subr.mxu0 0.0
    %1183 = vmatpush1.msra.mxu0 0.0
    %1184 = vmatprep.subr.mxu0 0.0
    %1185 = vmatpush1.msra.mxu0 0.0
    %1186 = vmatprep.subr.mxu0 0.0
    %1187 = vmatpush1.msra.mxu0 0.0
    %1188 = vmatprep.mubr.f32.mxu0 0.0
    %1189 = vmatmul.mubr.f32.gmra.mrb[0].mxu0 %v1122
    %v1190 = vpop.f32.mrb[0].mxu0
    %v1191 = vadd.f32 0.0, %v1190
    %v1192 = vpop.f32.mrb[0].mxu0
    %1193 = vdwg.mxu0
    %v1194 = vadd.f32 %v552, %v1191
    %v1195 = vxor.u32 %v1194, 2147483648
    %v1196 = vmul.f32 %v1195, 1.442695
    %v1197 = vpow.pop %v1196
    %v1198 = vadd.f32 %v1197, 1.0
    %v1199 = vrcp.pop %v1198
    %v1200 = vmul.f32 1.0, %v1199
    %v1201 = vadd.f32 %v1191, %v689
    %1203 = vrot.lane.b32.xlu0 %v1201, 64
    %v1204 = vpop.permute.xlu0 %1203
    %v1206 = vmul.f32 %v1200, %v1204
    %1208 = vrot.lane.b32.xlu0 %v1206, 64
    %v1209 = vpop.permute.xlu0 %1208
    %v1211 = vadd.f32 %v552, %v1209
    %v1212 = vtanh.pop %v1211
    %v1213 = vsub.f32 1.0, %v1200
    %1215 = vrot.lane.b32.xlu0 %v1212, 96
    %v1216 = vpop.permute.xlu0 %1215
    %v1218 = vmul.f32 %v1213, %v1216
    %v1219 = vmul.f32 %v1200, %v1118
    %v1220 = vadd.f32 %v1218, %v1219
    %1222 = vrot.lane.b32.xlu0 %v1220, 96
    %v1223 = vpop.permute.xlu0 %1222
    %v1224 = vsel %vm602, %v1223, 0
    %1226 = vmatprep.subr.mxu0 0.0
    %1227 = vmatpush1.msra.mxu0 %v595
    %1228 = vmatprep.subr.mxu0 0.0
    %1229 = vmatpush1.msra.mxu0 %v596
    %1230 = vmatprep.subr.mxu0 0.0
    %1231 = vmatpush1.msra.mxu0 %v597
    %1232 = vmatprep.subr.mxu0 0.0
    %1233 = vmatpush1.msra.mxu0 %v598
    %1234 = vmatprep.subr.mxu0 0.0
    %1235 = vmatpush1.msra.mxu0 0.0
    %1236 = vmatprep.subr.mxu0 0.0
    %1237 = vmatpush1.msra.mxu0 0.0
    %1238 = vmatprep.subr.mxu0 0.0
    %1239 = vmatpush1.msra.mxu0 0.0
    %1240 = vmatprep.subr.mxu0 0.0
    %1241 = vmatpush1.msra.mxu0 0.0
    %1242 = vmatprep.subr.mxu0 0.0
    %1243 = vmatpush1.msra.mxu0 0.0
    %1244 = vmatprep.subr.mxu0 0.0
    %1245 = vmatpush1.msra.mxu0 0.0
    %1246 = vmatprep.subr.mxu0 0.0
    %1247 = vmatpush1.msra.mxu0 0.0
    %1248 = vmatprep.subr.mxu0 0.0
    %1249 = vmatpush1.msra.mxu0 0.0
    %1250 = vmatprep.subr.mxu0 0.0
    %1251 = vmatpush1.msra.mxu0 0.0
    %1252 = vmatprep.subr.mxu0 0.0
    %1253 = vmatpush1.msra.mxu0 0.0
    %1254 = vmatprep.subr.mxu0 0.0
    %1255 = vmatpush1.msra.mxu0 0.0
    %1256 = vmatprep.subr.mxu0 0.0
    %1257 = vmatpush1.msra.mxu0 0.0
    %1258 = vmatprep.subr.mxu0 0.0
    %1259 = vmatpush1.msra.mxu0 0.0
    %1260 = vmatprep.subr.mxu0 0.0
    %1261 = vmatpush1.msra.mxu0 0.0
    %1262 = vmatprep.subr.mxu0 0.0
    %1263 = vmatpush1.msra.mxu0 0.0
    %1264 = vmatprep.subr.mxu0 0.0
    %1265 = vmatpush1.msra.mxu0 0.0
    %1266 = vmatprep.subr.mxu0 0.0
    %1267 = vmatpush1.msra.mxu0 0.0
    %1268 = vmatprep.subr.mxu0 0.0
    %1269 = vmatpush1.msra.mxu0 0.0
    %1270 = vmatprep.subr.mxu0 0.0
    %1271 = vmatpush1.msra.mxu0 0.0
    %1272 = vmatprep.subr.mxu0 0.0
    %1273 = vmatpush1.msra.mxu0 0.0
    %1274 = vmatprep.subr.mxu0 0.0
    %1275 = vmatpush1.msra.mxu0 0.0
    %1276 = vmatprep.subr.mxu0 0.0
    %1277 = vmatpush1.msra.mxu0 0.0
    %1278 = vmatprep.subr.mxu0 0.0
    %1279 = vmatpush1.msra.mxu0 0.0
    %1280 = vmatprep.subr.mxu0 0.0
    %1281 = vmatpush1.msra.mxu0 0.0
    %1282 = vmatprep.subr.mxu0 0.0
    %1283 = vmatpush1.msra.mxu0 0.0
    %1284 = vmatprep.subr.mxu0 0.0
    %1285 = vmatpush1.msra.mxu0 0.0
    %1286 = vmatprep.subr.mxu0 0.0
    %1287 = vmatpush1.msra.mxu0 0.0
    %1288 = vmatprep.subr.mxu0 0.0
    %1289 = vmatpush1.msra.mxu0 0.0
    %1290 = vmatprep.mubr.f32.mxu0 0.0
    %1291 = vmatmul.mubr.f32.gmra.mrb[0].mxu0 %v1224
    %v1292 = vpop.f32.mrb[0].mxu0
    %v1293 = vadd.f32 0.0, %v1292
    %v1294 = vpop.f32.mrb[0].mxu0
    %1295 = vdwg.mxu0
    %v1296 = vadd.f32 %v557, %v1293
    %v1297 = vxor.u32 %v1296, 2147483648
    %v1298 = vmul.f32 %v1297, 1.442695
    %v1299 = vpow.pop %v1298
    %v1300 = vadd.f32 %v1299, 1.0
    %v1301 = vrcp.pop %v1300
    %v1302 = vmul.f32 1.0, %v1301
    %v1303 = vadd.f32 %v1293, %v689
    %1305 = vrot.lane.b32.xlu0 %v1303, 64
    %v1306 = vpop.permute.xlu0 %1305
    %v1308 = vmul.f32 %v1302, %v1306
    %1310 = vrot.lane.b32.xlu0 %v1308, 64
    %v1311 = vpop.permute.xlu0 %1310
    %v1313 = vadd.f32 %v557, %v1311
    %v1314 = vtanh.pop %v1313
    %v1315 = vsub.f32 1.0, %v1302
    %1317 = vrot.lane.b32.xlu0 %v1314, 96
    %v1318 = vpop.permute.xlu0 %1317
    %v1320 = vmul.f32 %v1315, %v1318
    %v1321 = vmul.f32 %v1302, %v1220
    %v1322 = vadd.f32 %v1320, %v1321
    %1324 = vrot.lane.b32.xlu0 %v1322, 96
    %v1325 = vpop.permute.xlu0 %1324
    %v1326 = vsel %vm602, %v1325, 0
    %1328 = vmatprep.subr.mxu0 0.0
    %1329 = vmatpush1.msra.mxu0 %v595
    %1330 = vmatprep.subr.mxu0 0.0
    %1331 = vmatpush1.msra.mxu0 %v596
    %1332 = vmatprep.subr.mxu0 0.0
    %1333 = vmatpush1.msra.mxu0 %v597
    %1334 = vmatprep.subr.mxu0 0.0
    %1335 = vmatpush1.msra.mxu0 %v598
    %1336 = vmatprep.subr.mxu0 0.0
    %1337 = vmatpush1.msra.mxu0 0.0
    %1338 = vmatprep.subr.mxu0 0.0
    %1339 = vmatpush1.msra.mxu0 0.0
    %1340 = vmatprep.subr.mxu0 0.0
    %1341 = vmatpush1.msra.mxu0 0.0
    %1342 = vmatprep.subr.mxu0 0.0
    %1343 = vmatpush1.msra.mxu0 0.0
    %1344 = vmatprep.subr.mxu0 0.0
    %1345 = vmatpush1.msra.mxu0 0.0
    %1346 = vmatprep.subr.mxu0 0.0
    %1347 = vmatpush1.msra.mxu0 0.0
    %1348 = vmatprep.subr.mxu0 0.0
    %1349 = vmatpush1.msra.mxu0 0.0
    %1350 = vmatprep.subr.mxu0 0.0
    %1351 = vmatpush1.msra.mxu0 0.0
    %1352 = vmatprep.subr.mxu0 0.0
    %1353 = vmatpush1.msra.mxu0 0.0
    %1354 = vmatprep.subr.mxu0 0.0
    %1355 = vmatpush1.msra.mxu0 0.0
    %1356 = vmatprep.subr.mxu0 0.0
    %1357 = vmatpush1.msra.mxu0 0.0
    %1358 = vmatprep.subr.mxu0 0.0
    %1359 = vmatpush1.msra.mxu0 0.0
    %1360 = vmatprep.subr.mxu0 0.0
    %1361 = vmatpush1.msra.mxu0 0.0
    %1362 = vmatprep.subr.mxu0 0.0
    %1363 = vmatpush1.msra.mxu0 0.0
    %1364 = vmatprep.subr.mxu0 0.0
    %1365 = vmatpush1.msra.mxu0 0.0
    %1366 = vmatprep.subr.mxu0 0.0
    %1367 = vmatpush1.msra.mxu0 0.0
    %1368 = vmatprep.subr.mxu0 0.0
    %1369 = vmatpush1.msra.mxu0 0.0
    %1370 = vmatprep.subr.mxu0 0.0
    %1371 = vmatpush1.msra.mxu0 0.0
    %1372 = vmatprep.subr.mxu0 0.0
    %1373 = vmatpush1.msra.mxu0 0.0
    %1374 = vmatprep.subr.mxu0 0.0
    %1375 = vmatpush1.msra.mxu0 0.0
    %1376 = vmatprep.subr.mxu0 0.0
    %1377 = vmatpush1.msra.mxu0 0.0
    %1378 = vmatprep.subr.mxu0 0.0
    %1379 = vmatpush1.msra.mxu0 0.0
    %1380 = vmatprep.subr.mxu0 0.0
    %1381 = vmatpush1.msra.mxu0 0.0
    %1382 = vmatprep.subr.mxu0 0.0
    %1383 = vmatpush1.msra.mxu0 0.0
    %1384 = vmatprep.subr.mxu0 0.0
    %1385 = vmatpush1.msra.mxu0 0.0
    %1386 = vmatprep.subr.mxu0 0.0
    %1387 = vmatpush1.msra.mxu0 0.0
    %1388 = vmatprep.subr.mxu0 0.0
    %1389 = vmatpush1.msra.mxu0 0.0
    %1390 = vmatprep.subr.mxu0 0.0
    %1391 = vmatpush1.msra.mxu0 0.0
    %1392 = vmatprep.mubr.f32.mxu0 0.0
    %1393 = vmatmul.mubr.f32.gmra.mrb[0].mxu0 %v1326
    %v1394 = vpop.f32.mrb[0].mxu0
    %v1395 = vadd.f32 0.0, %v1394
    %v1396 = vpop.f32.mrb[0].mxu0
    %1397 = vdwg.mxu0
    %v1398 = vadd.f32 %v562, %v1395
    %v1399 = vxor.u32 %v1398, 2147483648
    %v1400 = vmul.f32 %v1399, 1.442695
    %v1401 = vpow.pop %v1400
    %v1402 = vadd.f32 %v1401, 1.0
    %v1403 = vrcp.pop %v1402
    %v1404 = vmul.f32 1.0, %v1403
    %v1405 = vadd.f32 %v1395, %v689
    %1407 = vrot.lane.b32.xlu0 %v1405, 64
    %v1408 = vpop.permute.xlu0 %1407
    %v1410 = vmul.f32 %v1404, %v1408
    %1412 = vrot.lane.b32.xlu0 %v1410, 64
    %v1413 = vpop.permute.xlu0 %1412
    %v1415 = vadd.f32 %v562, %v1413
    %v1416 = vtanh.pop %v1415
    %v1417 = vsub.f32 1.0, %v1404
    %1419 = vrot.lane.b32.xlu0 %v1416, 96
    %v1420 = vpop.permute.xlu0 %1419
    %v1422 = vmul.f32 %v1417, %v1420
    %v1423 = vmul.f32 %v1404, %v1322
    %v1424 = vadd.f32 %v1422, %v1423
    %1426 = vrot.lane.b32.xlu0 %v1424, 96
    %v1427 = vpop.permute.xlu0 %1426
    %v1428 = vsel %vm602, %v1427, 0
    %1430 = vmatprep.subr.mxu0 0.0
    %1431 = vmatpush1.msra.mxu0 %v595
    %1432 = vmatprep.subr.mxu0 0.0
    %1433 = vmatpush1.msra.mxu0 %v596
    %1434 = vmatprep.subr.mxu0 0.0
    %1435 = vmatpush1.msra.mxu0 %v597
    %1436 = vmatprep.subr.mxu0 0.0
    %1437 = vmatpush1.msra.mxu0 %v598
    %1438 = vmatprep.subr.mxu0 0.0
    %1439 = vmatpush1.msra.mxu0 0.0
    %1440 = vmatprep.subr.mxu0 0.0
    %1441 = vmatpush1.msra.mxu0 0.0
    %1442 = vmatprep.subr.mxu0 0.0
    %1443 = vmatpush1.msra.mxu0 0.0
    %1444 = vmatprep.subr.mxu0 0.0
    %1445 = vmatpush1.msra.mxu0 0.0
    %1446 = vmatprep.subr.mxu0 0.0
    %1447 = vmatpush1.msra.mxu0 0.0
    %1448 = vmatprep.subr.mxu0 0.0
    %1449 = vmatpush1.msra.mxu0 0.0
    %1450 = vmatprep.subr.mxu0 0.0
    %1451 = vmatpush1.msra.mxu0 0.0
    %1452 = vmatprep.subr.mxu0 0.0
    %1453 = vmatpush1.msra.mxu0 0.0
    %1454 = vmatprep.subr.mxu0 0.0
    %1455 = vmatpush1.msra.mxu0 0.0
    %1456 = vmatprep.subr.mxu0 0.0
    %1457 = vmatpush1.msra.mxu0 0.0
    %1458 = vmatprep.subr.mxu0 0.0
    %1459 = vmatpush1.msra.mxu0 0.0
    %1460 = vmatprep.subr.mxu0 0.0
    %1461 = vmatpush1.msra.mxu0 0.0
    %1462 = vmatprep.subr.mxu0 0.0
    %1463 = vmatpush1.msra.mxu0 0.0
    %1464 = vmatprep.subr.mxu0 0.0
    %1465 = vmatpush1.msra.mxu0 0.0
    %1466 = vmatprep.subr.mxu0 0.0
    %1467 = vmatpush1.msra.mxu0 0.0
    %1468 = vmatprep.subr.mxu0 0.0
    %1469 = vmatpush1.msra.mxu0 0.0
    %1470 = vmatprep.subr.mxu0 0.0
    %1471 = vmatpush1.msra.mxu0 0.0
    %1472 = vmatprep.subr.mxu0 0.0
    %1473 = vmatpush1.msra.mxu0 0.0
    %1474 = vmatprep.subr.mxu0 0.0
    %1475 = vmatpush1.msra.mxu0 0.0
    %1476 = vmatprep.subr.mxu0 0.0
    %1477 = vmatpush1.msra.mxu0 0.0
    %1478 = vmatprep.subr.mxu0 0.0
    %1479 = vmatpush1.msra.mxu0 0.0
    %1480 = vmatprep.subr.mxu0 0.0
    %1481 = vmatpush1.msra.mxu0 0.0
    %1482 = vmatprep.subr.mxu0 0.0
    %1483 = vmatpush1.msra.mxu0 0.0
    %1484 = vmatprep.subr.mxu0 0.0
    %1485 = vmatpush1.msra.mxu0 0.0
    %1486 = vmatprep.subr.mxu0 0.0
    %1487 = vmatpush1.msra.mxu0 0.0
    %1488 = vmatprep.subr.mxu0 0.0
    %1489 = vmatpush1.msra.mxu0 0.0
    %1490 = vmatprep.subr.mxu0 0.0
    %1491 = vmatpush1.msra.mxu0 0.0
    %1492 = vmatprep.subr.mxu0 0.0
    %1493 = vmatpush1.msra.mxu0 0.0
    %1494 = vmatprep.mubr.f32.mxu0 0.0
    %1495 = vmatmul.mubr.f32.gmra.mrb[0].mxu0 %v1428
    %v1496 = vpop.f32.mrb[0].mxu0
    %v1497 = vadd.f32 0.0, %v1496
    %v1498 = vpop.f32.mrb[0].mxu0
    %1499 = vdwg.mxu0
    %v1500 = vadd.f32 %v567, %v1497
    %v1501 = vxor.u32 %v1500, 2147483648
    %v1502 = vmul.f32 %v1501, 1.442695
    %v1503 = vpow.pop %v1502
    %v1504 = vadd.f32 %v1503, 1.0
    %v1505 = vrcp.pop %v1504
    %v1506 = vmul.f32 1.0, %v1505
    %v1507 = vadd.f32 %v1497, %v689
    %1509 = vrot.lane.b32.xlu0 %v1507, 64
    %v1510 = vpop.permute.xlu0 %1509
    %v1512 = vmul.f32 %v1506, %v1510
    %1514 = vrot.lane.b32.xlu0 %v1512, 64
    %v1515 = vpop.permute.xlu0 %1514
    %v1517 = vadd.f32 %v567, %v1515
    %v1518 = vtanh.pop %v1517
    %v1519 = vsub.f32 1.0, %v1506
    %1521 = vrot.lane.b32.xlu0 %v1518, 96
    %v1522 = vpop.permute.xlu0 %1521
    %v1524 = vmul.f32 %v1519, %v1522
    %v1525 = vmul.f32 %v1506, %v1424
    %v1526 = vadd.f32 %v1524, %v1525
    %1528 = vrot.lane.b32.xlu0 %v1526, 96
    %v1529 = vpop.permute.xlu0 %1528
    %v1530 = vsel %vm602, %v1529, 0
    %1532 = vmatprep.subr.mxu0 0.0
    %1533 = vmatpush1.msra.mxu0 %v595
    %1534 = vmatprep.subr.mxu0 0.0
    %1535 = vmatpush1.msra.mxu0 %v596
    %1536 = vmatprep.subr.mxu0 0.0
    %1537 = vmatpush1.msra.mxu0 %v597
    %1538 = vmatprep.subr.mxu0 0.0
    %1539 = vmatpush1.msra.mxu0 %v598
    %1540 = vmatprep.subr.mxu0 0.0
    %1541 = vmatpush1.msra.mxu0 0.0
    %1542 = vmatprep.subr.mxu0 0.0
    %1543 = vmatpush1.msra.mxu0 0.0
    %1544 = vmatprep.subr.mxu0 0.0
    %1545 = vmatpush1.msra.mxu0 0.0
    %1546 = vmatprep.subr.mxu0 0.0
    %1547 = vmatpush1.msra.mxu0 0.0
    %1548 = vmatprep.subr.mxu0 0.0
    %1549 = vmatpush1.msra.mxu0 0.0
    %1550 = vmatprep.subr.mxu0 0.0
    %1551 = vmatpush1.msra.mxu0 0.0
    %1552 = vmatprep.subr.mxu0 0.0
    %1553 = vmatpush1.msra.mxu0 0.0
    %1554 = vmatprep.subr.mxu0 0.0
    %1555 = vmatpush1.msra.mxu0 0.0
    %1556 = vmatprep.subr.mxu0 0.0
    %1557 = vmatpush1.msra.mxu0 0.0
    %1558 = vmatprep.subr.mxu0 0.0
    %1559 = vmatpush1.msra.mxu0 0.0
    %1560 = vmatprep.subr.mxu0 0.0
    %1561 = vmatpush1.msra.mxu0 0.0
    %1562 = vmatprep.subr.mxu0 0.0
    %1563 = vmatpush1.msra.mxu0 0.0
    %1564 = vmatprep.subr.mxu0 0.0
    %1565 = vmatpush1.msra.mxu0 0.0
    %1566 = vmatprep.subr.mxu0 0.0
    %1567 = vmatpush1.msra.mxu0 0.0
    %1568 = vmatprep.subr.mxu0 0.0
    %1569 = vmatpush1.msra.mxu0 0.0
    %1570 = vmatprep.subr.mxu0 0.0
    %1571 = vmatpush1.msra.mxu0 0.0
    %1572 = vmatprep.subr.mxu0 0.0
    %1573 = vmatpush1.msra.mxu0 0.0
    %1574 = vmatprep.subr.mxu0 0.0
    %1575 = vmatpush1.msra.mxu0 0.0
    %1576 = vmatprep.subr.mxu0 0.0
    %1577 = vmatpush1.msra.mxu0 0.0
    %1578 = vmatprep.subr.mxu0 0.0
    %1579 = vmatpush1.msra.mxu0 0.0
    %1580 = vmatprep.subr.mxu0 0.0
    %1581 = vmatpush1.msra.mxu0 0.0
    %1582 = vmatprep.subr.mxu0 0.0
    %1583 = vmatpush1.msra.mxu0 0.0
    %1584 = vmatprep.subr.mxu0 0.0
    %1585 = vmatpush1.msra.mxu0 0.0
    %1586 = vmatprep.subr.mxu0 0.0
    %1587 = vmatpush1.msra.mxu0 0.0
    %1588 = vmatprep.subr.mxu0 0.0
    %1589 = vmatpush1.msra.mxu0 0.0
    %1590 = vmatprep.subr.mxu0 0.0
    %1591 = vmatpush1.msra.mxu0 0.0
    %1592 = vmatprep.subr.mxu0 0.0
    %1593 = vmatpush1.msra.mxu0 0.0
    %1594 = vmatprep.subr.mxu0 0.0
    %1595 = vmatpush1.msra.mxu0 0.0
    %1596 = vmatprep.mubr.f32.mxu0 0.0
    %1597 = vmatmul.mubr.f32.gmra.mrb[0].mxu0 %v1530
    %v1598 = vpop.f32.mrb[0].mxu0
    %v1599 = vadd.f32 0.0, %v1598
    %v1600 = vpop.f32.mrb[0].mxu0
    %1601 = vdwg.mxu0
    %v1602 = vadd.f32 %v572, %v1599
    %v1603 = vxor.u32 %v1602, 2147483648
    %v1604 = vmul.f32 %v1603, 1.442695
    %v1605 = vpow.pop %v1604
    %v1606 = vadd.f32 %v1605, 1.0
    %v1607 = vrcp.pop %v1606
    %v1608 = vmul.f32 1.0, %v1607
    %v1609 = vadd.f32 %v1599, %v689
    %1611 = vrot.lane.b32.xlu0 %v1609, 64
    %v1612 = vpop.permute.xlu0 %1611
    %v1614 = vmul.f32 %v1608, %v1612
    %1616 = vrot.lane.b32.xlu0 %v1614, 64
    %v1617 = vpop.permute.xlu0 %1616
    %v1619 = vadd.f32 %v572, %v1617
    %v1620 = vtanh.pop %v1619
    %v1621 = vsub.f32 1.0, %v1608
    %1623 = vrot.lane.b32.xlu0 %v1620, 96
    %v1624 = vpop.permute.xlu0 %1623
    %v1626 = vmul.f32 %v1621, %v1624
    %v1627 = vmul.f32 %v1608, %v1526
    %v1628 = vadd.f32 %v1626, %v1627
    %1630 = vrot.lane.b32.xlu0 %v1628, 96
    %v1631 = vpop.permute.xlu0 %1630
    %v1632 = vsel %vm602, %v1631, 0
    %1634 = vmatprep.subr.mxu0 0.0
    %1635 = vmatpush1.msra.mxu0 %v595
    %1636 = vmatprep.subr.mxu0 0.0
    %1637 = vmatpush1.msra.mxu0 %v596
    %1638 = vmatprep.subr.mxu0 0.0
    %1639 = vmatpush1.msra.mxu0 %v597
    %1640 = vmatprep.subr.mxu0 0.0
    %1641 = vmatpush1.msra.mxu0 %v598
    %1642 = vmatprep.subr.mxu0 0.0
    %1643 = vmatpush1.msra.mxu0 0.0
    %1644 = vmatprep.subr.mxu0 0.0
    %1645 = vmatpush1.msra.mxu0 0.0
    %1646 = vmatprep.subr.mxu0 0.0
    %1647 = vmatpush1.msra.mxu0 0.0
    %1648 = vmatprep.subr.mxu0 0.0
    %1649 = vmatpush1.msra.mxu0 0.0
    %1650 = vmatprep.subr.mxu0 0.0
    %1651 = vmatpush1.msra.mxu0 0.0
    %1652 = vmatprep.subr.mxu0 0.0
    %1653 = vmatpush1.msra.mxu0 0.0
    %1654 = vmatprep.subr.mxu0 0.0
    %1655 = vmatpush1.msra.mxu0 0.0
    %1656 = vmatprep.subr.mxu0 0.0
    %1657 = vmatpush1.msra.mxu0 0.0
    %1658 = vmatprep.subr.mxu0 0.0
    %1659 = vmatpush1.msra.mxu0 0.0
    %1660 = vmatprep.subr.mxu0 0.0
    %1661 = vmatpush1.msra.mxu0 0.0
    %1662 = vmatprep.subr.mxu0 0.0
    %1663 = vmatpush1.msra.mxu0 0.0
    %1664 = vmatprep.subr.mxu0 0.0
    %1665 = vmatpush1.msra.mxu0 0.0
    %1666 = vmatprep.subr.mxu0 0.0
    %1667 = vmatpush1.msra.mxu0 0.0
    %1668 = vmatprep.subr.mxu0 0.0
    %1669 = vmatpush1.msra.mxu0 0.0
    %1670 = vmatprep.subr.mxu0 0.0
    %1671 = vmatpush1.msra.mxu0 0.0
    %1672 = vmatprep.subr.mxu0 0.0
    %1673 = vmatpush1.msra.mxu0 0.0
    %1674 = vmatprep.subr.mxu0 0.0
    %1675 = vmatpush1.msra.mxu0 0.0
    %1676 = vmatprep.subr.mxu0 0.0
    %1677 = vmatpush1.msra.mxu0 0.0
    %1678 = vmatprep.subr.mxu0 0.0
    %1679 = vmatpush1.msra.mxu0 0.0
    %1680 = vmatprep.subr.mxu0 0.0
    %1681 = vmatpush1.msra.mxu0 0.0
    %1682 = vmatprep.subr.mxu0 0.0
    %1683 = vmatpush1.msra.mxu0 0.0
    %1684 = vmatprep.subr.mxu0 0.0
    %1685 = vmatpush1.msra.mxu0 0.0
    %1686 = vmatprep.subr.mxu0 0.0
    %1687 = vmatpush1.msra.mxu0 0.0
    %1688 = vmatprep.subr.mxu0 0.0
    %1689 = vmatpush1.msra.mxu0 0.0
    %1690 = vmatprep.subr.mxu0 0.0
    %1691 = vmatpush1.msra.mxu0 0.0
    %1692 = vmatprep.subr.mxu0 0.0
    %1693 = vmatpush1.msra.mxu0 0.0
    %1694 = vmatprep.subr.mxu0 0.0
    %1695 = vmatpush1.msra.mxu0 0.0
    %1696 = vmatprep.subr.mxu0 0.0
    %1697 = vmatpush1.msra.mxu0 0.0
    %1698 = vmatprep.mubr.f32.mxu0 0.0
    %1699 = vmatmul.mubr.f32.gmra.mrb[0].mxu0 %v1632
    %v1700 = vpop.f32.mrb[0].mxu0
    %v1701 = vadd.f32 0.0, %v1700
    %v1702 = vpop.f32.mrb[0].mxu0
    %1703 = vdwg.mxu0
    %v1704 = vadd.f32 %v577, %v1701
    %v1705 = vxor.u32 %v1704, 2147483648
    %v1706 = vmul.f32 %v1705, 1.442695
    %v1707 = vpow.pop %v1706
    %v1708 = vadd.f32 %v1707, 1.0
    %v1709 = vrcp.pop %v1708
    %v1710 = vmul.f32 1.0, %v1709
    %v1711 = vadd.f32 %v1701, %v689
    %1713 = vrot.lane.b32.xlu0 %v1711, 64
    %v1714 = vpop.permute.xlu0 %1713
    %v1716 = vmul.f32 %v1710, %v1714
    %1718 = vrot.lane.b32.xlu0 %v1716, 64
    %v1719 = vpop.permute.xlu0 %1718
    %v1721 = vadd.f32 %v577, %v1719
    %v1722 = vtanh.pop %v1721
    %v1723 = vsub.f32 1.0, %v1710
    %1725 = vrot.lane.b32.xlu0 %v1722, 96
    %v1726 = vpop.permute.xlu0 %1725
    %v1728 = vmul.f32 %v1723, %v1726
    %v1729 = vmul.f32 %v1710, %v1628
    %v1730 = vadd.f32 %v1728, %v1729
    %1732 = vrot.lane.b32.xlu0 %v1730, 96
    %v1733 = vpop.permute.xlu0 %1732
    %v1734 = vsel %vm602, %v1733, 0
    %1736 = vmatprep.subr.mxu0 0.0
    %1737 = vmatpush1.msra.mxu0 %v595
    %1738 = vmatprep.subr.mxu0 0.0
    %1739 = vmatpush1.msra.mxu0 %v596
    %1740 = vmatprep.subr.mxu0 0.0
    %1741 = vmatpush1.msra.mxu0 %v597
    %1742 = vmatprep.subr.mxu0 0.0
    %1743 = vmatpush1.msra.mxu0 %v598
    %1744 = vmatprep.subr.mxu0 0.0
    %1745 = vmatpush1.msra.mxu0 0.0
    %1746 = vmatprep.subr.mxu0 0.0
    %1747 = vmatpush1.msra.mxu0 0.0
    %1748 = vmatprep.subr.mxu0 0.0
    %1749 = vmatpush1.msra.mxu0 0.0
    %1750 = vmatprep.subr.mxu0 0.0
    %1751 = vmatpush1.msra.mxu0 0.0
    %1752 = vmatprep.subr.mxu0 0.0
    %1753 = vmatpush1.msra.mxu0 0.0
    %1754 = vmatprep.subr.mxu0 0.0
    %1755 = vmatpush1.msra.mxu0 0.0
    %1756 = vmatprep.subr.mxu0 0.0
    %1757 = vmatpush1.msra.mxu0 0.0
    %1758 = vmatprep.subr.mxu0 0.0
    %1759 = vmatpush1.msra.mxu0 0.0
    %1760 = vmatprep.subr.mxu0 0.0
    %1761 = vmatpush1.msra.mxu0 0.0
    %1762 = vmatprep.subr.mxu0 0.0
    %1763 = vmatpush1.msra.mxu0 0.0
    %1764 = vmatprep.subr.mxu0 0.0
    %1765 = vmatpush1.msra.mxu0 0.0
    %1766 = vmatprep.subr.mxu0 0.0
    %1767 = vmatpush1.msra.mxu0 0.0
    %1768 = vmatprep.subr.mxu0 0.0
    %1769 = vmatpush1.msra.mxu0 0.0
    %1770 = vmatprep.subr.mxu0 0.0
    %1771 = vmatpush1.msra.mxu0 0.0
    %1772 = vmatprep.subr.mxu0 0.0
    %1773 = vmatpush1.msra.mxu0 0.0
    %1774 = vmatprep.subr.mxu0 0.0
    %1775 = vmatpush1.msra.mxu0 0.0
    %1776 = vmatprep.subr.mxu0 0.0
    %1777 = vmatpush1.msra.mxu0 0.0
    %1778 = vmatprep.subr.mxu0 0.0
    %1779 = vmatpush1.msra.mxu0 0.0
    %1780 = vmatprep.subr.mxu0 0.0
    %1781 = vmatpush1.msra.mxu0 0.0
    %1782 = vmatprep.subr.mxu0 0.0
    %1783 = vmatpush1.msra.mxu0 0.0
    %1784 = vmatprep.subr.mxu0 0.0
    %1785 = vmatpush1.msra.mxu0 0.0
    %1786 = vmatprep.subr.mxu0 0.0
    %1787 = vmatpush1.msra.mxu0 0.0
    %1788 = vmatprep.subr.mxu0 0.0
    %1789 = vmatpush1.msra.mxu0 0.0
    %1790 = vmatprep.subr.mxu0 0.0
    %1791 = vmatpush1.msra.mxu0 0.0
    %1792 = vmatprep.subr.mxu0 0.0
    %1793 = vmatpush1.msra.mxu0 0.0
    %1794 = vmatprep.subr.mxu0 0.0
    %1795 = vmatpush1.msra.mxu0 0.0
    %1796 = vmatprep.subr.mxu0 0.0
    %1797 = vmatpush1.msra.mxu0 0.0
    %1798 = vmatprep.subr.mxu0 0.0
    %1799 = vmatpush1.msra.mxu0 0.0
    %1800 = vmatprep.mubr.f32.mxu0 0.0
    %1801 = vmatmul.mubr.f32.gmra.mrb[0].mxu0 %v1734
    %v1802 = vpop.f32.mrb[0].mxu0
    %v1803 = vadd.f32 0.0, %v1802
    %v1804 = vpop.f32.mrb[0].mxu0
    %1805 = vdwg.mxu0
    %v1806 = vadd.f32 %v582, %v1803
    %v1807 = vxor.u32 %v1806, 2147483648
    %v1808 = vmul.f32 %v1807, 1.442695
    %v1809 = vpow.pop %v1808
    %v1810 = vadd.f32 %v1809, 1.0
    %v1811 = vrcp.pop %v1810
    %v1812 = vmul.f32 1.0, %v1811
    %v1813 = vadd.f32 %v1803, %v689
    %1815 = vrot.lane.b32.xlu0 %v1813, 64
    %v1816 = vpop.permute.xlu0 %1815
    %v1818 = vmul.f32 %v1812, %v1816
    %1820 = vrot.lane.b32.xlu0 %v1818, 64
    %v1821 = vpop.permute.xlu0 %1820
    %v1823 = vadd.f32 %v582, %v1821
    %v1824 = vtanh.pop %v1823
    %v1825 = vsub.f32 1.0, %v1812
    %1827 = vrot.lane.b32.xlu0 %v1824, 96
    %v1828 = vpop.permute.xlu0 %1827
    %v1830 = vmul.f32 %v1825, %v1828
    %v1831 = vmul.f32 %v1812, %v1730
    %v1832 = vadd.f32 %v1830, %v1831
    %1834 = vrot.lane.b32.xlu0 %v1832, 96
    %v1835 = vpop.permute.xlu0 %1834
    %v1836 = vsel %vm602, %v1835, 0
    %1838 = vmatprep.subr.mxu0 0.0
    %1839 = vmatpush1.msra.mxu0 %v595
    %1840 = vmatprep.subr.mxu0 0.0
    %1841 = vmatpush1.msra.mxu0 %v596
    %1842 = vmatprep.subr.mxu0 0.0
    %1843 = vmatpush1.msra.mxu0 %v597
    %1844 = vmatprep.subr.mxu0 0.0
    %1845 = vmatpush1.msra.mxu0 %v598
    %1846 = vmatprep.subr.mxu0 0.0
    %1847 = vmatpush1.msra.mxu0 0.0
    %1848 = vmatprep.subr.mxu0 0.0
    %1849 = vmatpush1.msra.mxu0 0.0
    %1850 = vmatprep.subr.mxu0 0.0
    %1851 = vmatpush1.msra.mxu0 0.0
    %1852 = vmatprep.subr.mxu0 0.0
    %1853 = vmatpush1.msra.mxu0 0.0
    %1854 = vmatprep.subr.mxu0 0.0
    %1855 = vmatpush1.msra.mxu0 0.0
    %1856 = vmatprep.subr.mxu0 0.0
    %1857 = vmatpush1.msra.mxu0 0.0
    %1858 = vmatprep.subr.mxu0 0.0
    %1859 = vmatpush1.msra.mxu0 0.0
    %1860 = vmatprep.subr.mxu0 0.0
    %1861 = vmatpush1.msra.mxu0 0.0
    %1862 = vmatprep.subr.mxu0 0.0
    %1863 = vmatpush1.msra.mxu0 0.0
    %1864 = vmatprep.subr.mxu0 0.0
    %1865 = vmatpush1.msra.mxu0 0.0
    %1866 = vmatprep.subr.mxu0 0.0
    %1867 = vmatpush1.msra.mxu0 0.0
    %1868 = vmatprep.subr.mxu0 0.0
    %1869 = vmatpush1.msra.mxu0 0.0
    %1870 = vmatprep.subr.mxu0 0.0
    %1871 = vmatpush1.msra.mxu0 0.0
    %1872 = vmatprep.subr.mxu0 0.0
    %1873 = vmatpush1.msra.mxu0 0.0
    %1874 = vmatprep.subr.mxu0 0.0
    %1875 = vmatpush1.msra.mxu0 0.0
    %1876 = vmatprep.subr.mxu0 0.0
    %1877 = vmatpush1.msra.mxu0 0.0
    %1878 = vmatprep.subr.mxu0 0.0
    %1879 = vmatpush1.msra.mxu0 0.0
    %1880 = vmatprep.subr.mxu0 0.0
    %1881 = vmatpush1.msra.mxu0 0.0
    %1882 = vmatprep.subr.mxu0 0.0
    %1883 = vmatpush1.msra.mxu0 0.0
    %1884 = vmatprep.subr.mxu0 0.0
    %1885 = vmatpush1.msra.mxu0 0.0
    %1886 = vmatprep.subr.mxu0 0.0
    %1887 = vmatpush1.msra.mxu0 0.0
    %1888 = vmatprep.subr.mxu0 0.0
    %1889 = vmatpush1.msra.mxu0 0.0
    %1890 = vmatprep.subr.mxu0 0.0
    %1891 = vmatpush1.msra.mxu0 0.0
    %1892 = vmatprep.subr.mxu0 0.0
    %1893 = vmatpush1.msra.mxu0 0.0
    %1894 = vmatprep.subr.mxu0 0.0
    %1895 = vmatpush1.msra.mxu0 0.0
    %1896 = vmatprep.subr.mxu0 0.0
    %1897 = vmatpush1.msra.mxu0 0.0
    %1898 = vmatprep.subr.mxu0 0.0
    %1899 = vmatpush1.msra.mxu0 0.0
    %1900 = vmatprep.subr.mxu0 0.0
    %1901 = vmatpush1.msra.mxu0 0.0
    %1902 = vmatprep.mubr.f32.mxu0 0.0
    %1903 = vmatmul.mubr.f32.gmra.mrb[0].mxu0 %v1836
    %v1904 = vpop.f32.mrb[0].mxu0
    %v1905 = vadd.f32 0.0, %v1904
    %v1906 = vpop.f32.mrb[0].mxu0
    %1907 = vdwg.mxu0
    %v1908 = vadd.f32 %v587, %v1905
    %v1909 = vxor.u32 %v1908, 2147483648
    %v1910 = vmul.f32 %v1909, 1.442695
    %v1911 = vpow.pop %v1910
    %v1912 = vadd.f32 %v1911, 1.0
    %v1913 = vrcp.pop %v1912
    %v1914 = vmul.f32 1.0, %v1913
    %v1915 = vadd.f32 %v1905, %v689
    %1917 = vrot.lane.b32.xlu0 %v1915, 64
    %v1918 = vpop.permute.xlu0 %1917
    %v1920 = vmul.f32 %v1914, %v1918
    %1922 = vrot.lane.b32.xlu0 %v1920, 64
    %v1923 = vpop.permute.xlu0 %1922
    %v1925 = vadd.f32 %v587, %v1923
    %v1926 = vtanh.pop %v1925
    %v1927 = vsub.f32 1.0, %v1914
    %1929 = vrot.lane.b32.xlu0 %v1926, 96
    %v1930 = vpop.permute.xlu0 %1929
    %v1932 = vmul.f32 %v1927, %v1930
    %v1933 = vmul.f32 %v1914, %v1832
    %v1934 = vadd.f32 %v1932, %v1933
    %1936 = vrot.lane.b32.xlu0 %v1934, 96
    %v1937 = vpop.permute.xlu0 %1936
    %v1938 = vsel %vm602, %v1937, 0
    %1940 = vmatprep.subr.mxu0 0.0
    %1941 = vmatpush1.msra.mxu0 %v595
    %1942 = vmatprep.subr.mxu0 0.0
    %1943 = vmatpush1.msra.mxu0 %v596
    %1944 = vmatprep.subr.mxu0 0.0
    %1945 = vmatpush1.msra.mxu0 %v597
    %1946 = vmatprep.subr.mxu0 0.0
    %1947 = vmatpush1.msra.mxu0 %v598
    %1948 = vmatprep.subr.mxu0 0.0
    %1949 = vmatpush1.msra.mxu0 0.0
    %1950 = vmatprep.subr.mxu0 0.0
    %1951 = vmatpush1.msra.mxu0 0.0
    %1952 = vmatprep.subr.mxu0 0.0
    %1953 = vmatpush1.msra.mxu0 0.0
    %1954 = vmatprep.subr.mxu0 0.0
    %1955 = vmatpush1.msra.mxu0 0.0
    %1956 = vmatprep.subr.mxu0 0.0
    %1957 = vmatpush1.msra.mxu0 0.0
    %1958 = vmatprep.subr.mxu0 0.0
    %1959 = vmatpush1.msra.mxu0 0.0
    %1960 = vmatprep.subr.mxu0 0.0
    %1961 = vmatpush1.msra.mxu0 0.0
    %1962 = vmatprep.subr.mxu0 0.0
    %1963 = vmatpush1.msra.mxu0 0.0
    %1964 = vmatprep.subr.mxu0 0.0
    %1965 = vmatpush1.msra.mxu0 0.0
    %1966 = vmatprep.subr.mxu0 0.0
    %1967 = vmatpush1.msra.mxu0 0.0
    %1968 = vmatprep.subr.mxu0 0.0
    %1969 = vmatpush1.msra.mxu0 0.0
    %1970 = vmatprep.subr.mxu0 0.0
    %1971 = vmatpush1.msra.mxu0 0.0
    %1972 = vmatprep.subr.mxu0 0.0
    %1973 = vmatpush1.msra.mxu0 0.0
    %1974 = vmatprep.subr.mxu0 0.0
    %1975 = vmatpush1.msra.mxu0 0.0
    %1976 = vmatprep.subr.mxu0 0.0
    %1977 = vmatpush1.msra.mxu0 0.0
    %1978 = vmatprep.subr.mxu0 0.0
    %1979 = vmatpush1.msra.mxu0 0.0
    %1980 = vmatprep.subr.mxu0 0.0
    %1981 = vmatpush1.msra.mxu0 0.0
    %1982 = vmatprep.subr.mxu0 0.0
    %1983 = vmatpush1.msra.mxu0 0.0
    %1984 = vmatprep.subr.mxu0 0.0
    %1985 = vmatpush1.msra.mxu0 0.0
    %1986 = vmatprep.subr.mxu0 0.0
    %1987 = vmatpush1.msra.mxu0 0.0
    %1988 = vmatprep.subr.mxu0 0.0
    %1989 = vmatpush1.msra.mxu0 0.0
    %1990 = vmatprep.subr.mxu0 0.0
    %1991 = vmatpush1.msra.mxu0 0.0
    %1992 = vmatprep.subr.mxu0 0.0
    %1993 = vmatpush1.msra.mxu0 0.0
    %1994 = vmatprep.subr.mxu0 0.0
    %1995 = vmatpush1.msra.mxu0 0.0
    %1996 = vmatprep.subr.mxu0 0.0
    %1997 = vmatpush1.msra.mxu0 0.0
    %1998 = vmatprep.subr.mxu0 0.0
    %1999 = vmatpush1.msra.mxu0 0.0
    %2000 = vmatprep.subr.mxu0 0.0
    %2001 = vmatpush1.msra.mxu0 0.0
    %2002 = vmatprep.subr.mxu0 0.0
    %2003 = vmatpush1.msra.mxu0 0.0
    %2004 = vmatprep.mubr.f32.mxu0 0.0
    %2005 = vmatmul.mubr.f32.gmra.mrb[0].mxu0 %v1938
    %v2006 = vpop.f32.mrb[0].mxu0
    %v2007 = vadd.f32 0.0, %v2006
    %v2008 = vpop.f32.mrb[0].mxu0
    %2009 = vdwg.mxu0
    %v2010 = vadd.f32 %v592, %v2007
    %v2011 = vxor.u32 %v2010, 2147483648
    %v2012 = vmul.f32 %v2011, 1.442695
    %v2013 = vpow.pop %v2012
    %v2014 = vadd.f32 %v2013, 1.0
    %v2015 = vrcp.pop %v2014
    %v2016 = vmul.f32 1.0, %v2015
    %v2017 = vadd.f32 %v2007, %v689
    %2019 = vrot.lane.b32.xlu0 %v2017, 64
    %v2020 = vpop.permute.xlu0 %2019
    %v2022 = vmul.f32 %v2016, %v2020
    %2024 = vrot.lane.b32.xlu0 %v2022, 64
    %v2025 = vpop.permute.xlu0 %2024
    %v2027 = vadd.f32 %v592, %v2025
    %v2028 = vtanh.pop %v2027
    %v2029 = vsub.f32 1.0, %v2016
    %2031 = vrot.lane.b32.xlu0 %v2028, 96
    %v2032 = vpop.permute.xlu0 %2031
    %v2034 = vmul.f32 %v2029, %v2032
    %v2035 = vmul.f32 %v2016, %v1934
    %v2036 = vadd.f32 %v2034, %v2035
    %vm2037 = vcmask 31744
    %v2038 = vsel %vm2037, 0.0, 0
    %vm2040 = vcmask 1043456
    %v2042 = vsel %vm2040, %v600, 0
    %2044 = vmatprep.subr.mxu0 0.0
    %2045 = vmatpush1.msra.mxu0 %v2042
    %2046 = vmatprep.subr.mxu0 0.0
    %2047 = vmatpush1.msra.mxu0 0.0
    %2048 = vmatprep.subr.mxu0 0.0
    %2049 = vmatpush1.msra.mxu0 0.0
    %2050 = vmatprep.subr.mxu0 0.0
    %2051 = vmatpush1.msra.mxu0 0.0
    %2052 = vmatprep.subr.mxu0 0.0
    %2053 = vmatpush1.msra.mxu0 0.0
    %2054 = vmatprep.subr.mxu0 0.0
    %2055 = vmatpush1.msra.mxu0 0.0
    %2056 = vmatprep.subr.mxu0 0.0
    %2057 = vmatpush1.msra.mxu0 0.0
    %2058 = vmatprep.subr.mxu0 0.0
    %2059 = vmatpush1.msra.mxu0 0.0
    %2060 = vmatprep.subr.mxu0 0.0
    %2061 = vmatpush1.msra.mxu0 0.0
    %2062 = vmatprep.subr.mxu0 0.0
    %2063 = vmatpush1.msra.mxu0 0.0
    %2064 = vmatprep.subr.mxu0 0.0
    %2065 = vmatpush1.msra.mxu0 0.0
    %2066 = vmatprep.subr.mxu0 0.0
    %2067 = vmatpush1.msra.mxu0 0.0
    %2068 = vmatprep.subr.mxu0 0.0
    %2069 = vmatpush1.msra.mxu0 0.0
    %2070 = vmatprep.subr.mxu0 0.0
    %2071 = vmatpush1.msra.mxu0 0.0
    %2072 = vmatprep.subr.mxu0 0.0
    %2073 = vmatpush1.msra.mxu0 0.0
    %2074 = vmatprep.subr.mxu0 0.0
    %2075 = vmatpush1.msra.mxu0 0.0
    %2076 = vmatprep.subr.mxu0 0.0
    %2077 = vmatpush1.msra.mxu0 0.0
    %2078 = vmatprep.subr.mxu0 0.0
    %2079 = vmatpush1.msra.mxu0 0.0
    %2080 = vmatprep.subr.mxu0 0.0
    %2081 = vmatpush1.msra.mxu0 0.0
    %2082 = vmatprep.subr.mxu0 0.0
    %2083 = vmatpush1.msra.mxu0 0.0
    %2084 = vmatprep.subr.mxu0 0.0
    %2085 = vmatpush1.msra.mxu0 0.0
    %2086 = vmatprep.subr.mxu0 0.0
    %2087 = vmatpush1.msra.mxu0 0.0
    %2088 = vmatprep.subr.mxu0 0.0
    %2089 = vmatpush1.msra.mxu0 0.0
    %2090 = vmatprep.subr.mxu0 0.0
    %2091 = vmatpush1.msra.mxu0 0.0
    %2092 = vmatprep.subr.mxu0 0.0
    %2093 = vmatpush1.msra.mxu0 0.0
    %2094 = vmatprep.subr.mxu0 0.0
    %2095 = vmatpush1.msra.mxu0 0.0
    %2096 = vmatprep.subr.mxu0 0.0
    %2097 = vmatpush1.msra.mxu0 0.0
    %2098 = vmatprep.subr.mxu0 0.0
    %2099 = vmatpush1.msra.mxu0 0.0
    %2100 = vmatprep.subr.mxu0 0.0
    %2101 = vmatpush1.msra.mxu0 0.0
    %2102 = vmatprep.subr.mxu0 0.0
    %2103 = vmatpush1.msra.mxu0 0.0
    %2104 = vmatprep.subr.mxu0 0.0
    %2105 = vmatpush1.msra.mxu0 0.0
    %2106 = vmatprep.subr.mxu0 0.0
    %2107 = vmatpush1.msra.mxu0 0.0
    %2108 = vmatprep.mubr.f32.mxu0 0.0
    %2109 = vmatmul.mubr.f32.gmra.mrb[0].mxu0 %v2038
    %v2110 = vpop.f32.mrb[0].mxu0
    %v2111 = vadd.f32 0.0, %v2110
    %v2112 = vpop.f32.mrb[0].mxu0
    %2113 = vmatprep.mubr.f32.mxu0 0.0
    %2114 = vmatmul.mubr.f32.gmra.mrb[0].mxu0 %v2038
    %v2115 = vpop.f32.mrb[0].mxu0
    %v2116 = vadd.f32 0.0, %v2115
    %v2117 = vpop.f32.mrb[0].mxu0
    %2118 = vmatprep.mubr.f32.mxu0 0.0
    %2119 = vmatmul.mubr.f32.gmra.mrb[0].mxu0 %v2038
    %v2120 = vpop.f32.mrb[0].mxu0
    %v2121 = vadd.f32 0.0, %v2120
    %v2122 = vpop.f32.mrb[0].mxu0
    %2123 = vmatprep.mubr.f32.mxu0 0.0
    %2124 = vmatmul.mubr.f32.gmra.mrb[0].mxu0 %v2038
    %v2125 = vpop.f32.mrb[0].mxu0
    %v2126 = vadd.f32 0.0, %v2125
    %v2127 = vpop.f32.mrb[0].mxu0
    %2128 = vdwg.mxu0
    %2133 = vrot.lane.b32.xlu0 %v2111, 96
    %v2134 = vpop.permute.xlu0 %2133
    %2135 = vrot.lane.b32.xlu0 %v2116, 96
    %v2136 = vpop.permute.xlu0 %2135
    %2137 = vrot.lane.b32.xlu0 %v2121, 96
    %v2138 = vpop.permute.xlu0 %2137
    %2139 = vrot.lane.b32.xlu0 %v2126, 96
    %v2140 = vpop.permute.xlu0 %2139
    %v2145 = vadd.f32 %v537, %v2134
    %v2146 = vadd.f32 %v542, %v2136
    %v2147 = vadd.f32 %v547, %v2138
    %v2148 = vadd.f32 %v552, %v2140
    %v2149 = vxor.u32 %v2145, 2147483648
    %v2150 = vxor.u32 %v2146, 2147483648
    %v2151 = vxor.u32 %v2147, 2147483648
    %v2152 = vxor.u32 %v2148, 2147483648
    %v2153 = vmul.f32 %v2149, 1.442695
    %v2154 = vpow.pop %v2153
    %v2155 = vmul.f32 %v2150, 1.442695
    %v2156 = vpow.pop %v2155
    %v2157 = vmul.f32 %v2151, 1.442695
    %v2158 = vpow.pop %v2157
    %v2159 = vmul.f32 %v2152, 1.442695
    %v2160 = vpow.pop %v2159
    %v2161 = vadd.f32 %v2154, 1.0
    %v2162 = vadd.f32 %v2156, 1.0
    %v2163 = vadd.f32 %v2158, 1.0
    %v2164 = vadd.f32 %v2160, 1.0
    %v2165 = vrcp.pop %v2161
    %v2166 = vmul.f32 1.0, %v2165
    %v2167 = vrcp.pop %v2162
    %v2168 = vmul.f32 1.0, %v2167
    %v2169 = vrcp.pop %v2163
    %v2170 = vmul.f32 1.0, %v2169
    %v2171 = vrcp.pop %v2164
    %v2172 = vmul.f32 1.0, %v2171
    %v2174 = vlaneseq
    %v2175 = vshrl.u32 %v2174, 7
    %v2176 = vsub.s32 0, %v2175
    %v2177 = vrot.slane %v601, %v2176
    %2178 = vrot.lane.b32.xlu0 %v2177, 8
    %v2179 = vpop.permute.xlu0 %2178
    %v2181 = vadd.f32 %v2111, %v2179
    %v2182 = vadd.f32 %v2116, %v2179
    %v2183 = vadd.f32 %v2121, %v2179
    %v2184 = vadd.f32 %v2126, %v2179
    %2189 = vrot.lane.b32.xlu0 %v2181, 88
    %v2190 = vpop.permute.xlu0 %2189
    %2191 = vrot.lane.b32.xlu0 %v2182, 88
    %v2192 = vpop.permute.xlu0 %2191
    %2193 = vrot.lane.b32.xlu0 %v2183, 88
    %v2194 = vpop.permute.xlu0 %2193
    %2195 = vrot.lane.b32.xlu0 %v2184, 88
    %v2196 = vpop.permute.xlu0 %2195
    %v2201 = vmul.f32 %v2166, %v2190
    %v2202 = vmul.f32 %v2168, %v2192
    %v2203 = vmul.f32 %v2170, %v2194
    %v2204 = vmul.f32 %v2172, %v2196
    %2209 = vrot.lane.b32.xlu0 %v2201, 8
    %v2210 = vpop.permute.xlu0 %2209
    %2211 = vrot.lane.b32.xlu0 %v2202, 8
    %v2212 = vpop.permute.xlu0 %2211
    %2213 = vrot.lane.b32.xlu0 %v2203, 8
    %v2214 = vpop.permute.xlu0 %2213
    %2215 = vrot.lane.b32.xlu0 %v2204, 8
    %v2216 = vpop.permute.xlu0 %2215
    %v2221 = vadd.f32 %v537, %v2210
    %v2222 = vadd.f32 %v542, %v2212
    %v2223 = vadd.f32 %v547, %v2214
    %v2224 = vadd.f32 %v552, %v2216
    %v2225 = vtanh.pop %v2221
    %v2226 = vtanh.pop %v2222
    %v2227 = vtanh.pop %v2223
    %v2228 = vtanh.pop %v2224
    %v2229 = vsub.f32 1.0, %v2166
    %v2230 = vsub.f32 1.0, %v2168
    %v2231 = vsub.f32 1.0, %v2170
    %v2232 = vsub.f32 1.0, %v2172
    %2237 = vrot.lane.b32.xlu0 %v2225, 124
    %v2238 = vpop.permute.xlu0 %2237
    %2239 = vrot.lane.b32.xlu0 %v2226, 124
    %v2240 = vpop.permute.xlu0 %2239
    %2241 = vrot.lane.b32.xlu0 %v2227, 124
    %v2242 = vpop.permute.xlu0 %2241
    %2243 = vrot.lane.b32.xlu0 %v2228, 124
    %v2244 = vpop.permute.xlu0 %2243
    %v2249 = vmul.f32 %v2229, %v2238
    %v2250 = vmul.f32 %v2230, %v2240
    %v2251 = vmul.f32 %v2231, %v2242
    %v2252 = vmul.f32 %v2232, %v2244
    %v2253 = vmul.f32 %v2166, 0.0
    %v2254 = vmul.f32 %v2168, 0.0
    %v2255 = vmul.f32 %v2170, 0.0
    %v2256 = vmul.f32 %v2172, 0.0
    %v2257 = vadd.f32 %v2249, %v2253
    %v2258 = vadd.f32 %v2250, %v2254
    %v2259 = vadd.f32 %v2251, %v2255
    %v2260 = vadd.f32 %v2252, %v2256
    %2265 = vrot.lane.b32.xlu0 %v2257, 28
    %v2266 = vpop.permute.xlu0 %2265
    %2267 = vrot.lane.b32.xlu0 %v2258, 28
    %v2268 = vpop.permute.xlu0 %2267
    %2269 = vrot.lane.b32.xlu0 %v2259, 28
    %v2270 = vpop.permute.xlu0 %2269
    %2271 = vrot.lane.b32.xlu0 %v2260, 28
    %v2272 = vpop.permute.xlu0 %2271
    %v2273 = vsel %vm2037, %v2266, 0
    %v2275 = vsel %vm2037, %v2268, 0
    %v2277 = vsel %vm2037, %v2270, 0
    %v2279 = vsel %vm2037, %v2272, 0
    %2281 = vmatprep.subr.mxu0 0.0
    %2282 = vmatpush1.msra.mxu0 %v2042
    %2283 = vmatprep.subr.mxu0 0.0
    %2284 = vmatpush1.msra.mxu0 0.0
    %2285 = vmatprep.subr.mxu0 0.0
    %2286 = vmatpush1.msra.mxu0 0.0
    %2287 = vmatprep.subr.mxu0 0.0
    %2288 = vmatpush1.msra.mxu0 0.0
    %2289 = vmatprep.subr.mxu0 0.0
    %2290 = vmatpush1.msra.mxu0 0.0
    %2291 = vmatprep.subr.mxu0 0.0
    %2292 = vmatpush1.msra.mxu0 0.0
    %2293 = vmatprep.subr.mxu0 0.0
    %2294 = vmatpush1.msra.mxu0 0.0
    %2295 = vmatprep.subr.mxu0 0.0
    %2296 = vmatpush1.msra.mxu0 0.0
    %2297 = vmatprep.subr.mxu0 0.0
    %2298 = vmatpush1.msra.mxu0 0.0
    %2299 = vmatprep.subr.mxu0 0.0
    %2300 = vmatpush1.msra.mxu0 0.0
    %2301 = vmatprep.subr.mxu0 0.0
    %2302 = vmatpush1.msra.mxu0 0.0
    %2303 = vmatprep.subr.mxu0 0.0
    %2304 = vmatpush1.msra.mxu0 0.0
    %2305 = vmatprep.subr.mxu0 0.0
    %2306 = vmatpush1.msra.mxu0 0.0
    %2307 = vmatprep.subr.mxu0 0.0
    %2308 = vmatpush1.msra.mxu0 0.0
    %2309 = vmatprep.subr.mxu0 0.0
    %2310 = vmatpush1.msra.mxu0 0.0
    %2311 = vmatprep.subr.mxu0 0.0
    %2312 = vmatpush1.msra.mxu0 0.0
    %2313 = vmatprep.subr.mxu0 0.0
    %2314 = vmatpush1.msra.mxu0 0.0
    %2315 = vmatprep.subr.mxu0 0.0
    %2316 = vmatpush1.msra.mxu0 0.0
    %2317 = vmatprep.subr.mxu0 0.0
    %2318 = vmatpush1.msra.mxu0 0.0
    %2319 = vmatprep.subr.mxu0 0.0
    %2320 = vmatpush1.msra.mxu0 0.0
    %2321 = vmatprep.subr.mxu0 0.0
    %2322 = vmatpush1.msra.mxu0 0.0
    %2323 = vmatprep.subr.mxu0 0.0
    %2324 = vmatpush1.msra.mxu0 0.0
    %2325 = vmatprep.subr.mxu0 0.0
    %2326 = vmatpush1.msra.mxu0 0.0
    %2327 = vmatprep.subr.mxu0 0.0
    %2328 = vmatpush1.msra.mxu0 0.0
    %2329 = vmatprep.subr.mxu0 0.0
    %2330 = vmatpush1.msra.mxu0 0.0
    %2331 = vmatprep.subr.mxu0 0.0
    %2332 = vmatpush1.msra.mxu0 0.0
    %2333 = vmatprep.subr.mxu0 0.0
    %2334 = vmatpush1.msra.mxu0 0.0
    %2335 = vmatprep.subr.mxu0 0.0
    %2336 = vmatpush1.msra.mxu0 0.0
    %2337 = vmatprep.subr.mxu0 0.0
    %2338 = vmatpush1.msra.mxu0 0.0
    %2339 = vmatprep.subr.mxu0 0.0
    %2340 = vmatpush1.msra.mxu0 0.0
    %2341 = vmatprep.subr.mxu0 0.0
    %2342 = vmatpush1.msra.mxu0 0.0
    %2343 = vmatprep.subr.mxu0 0.0
    %2344 = vmatpush1.msra.mxu0 0.0
    %2345 = vmatprep.mubr.f32.mxu0 0.0
    %2346 = vmatmul.mubr.f32.gmra.mrb[0].mxu0 %v2273
    %v2347 = vpop.f32.mrb[0].mxu0
    %v2348 = vadd.f32 0.0, %v2347
    %v2349 = vpop.f32.mrb[0].mxu0
    %2350 = vmatprep.mubr.f32.mxu0 0.0
    %2351 = vmatmul.mubr.f32.gmra.mrb[0].mxu0 %v2275
    %v2352 = vpop.f32.mrb[0].mxu0
    %v2353 = vadd.f32 0.0, %v2352
    %v2354 = vpop.f32.mrb[0].mxu0
    %2355 = vmatprep.mubr.f32.mxu0 0.0
    %2356 = vmatmul.mubr.f32.gmra.mrb[0].mxu0 %v2277
    %v2357 = vpop.f32.mrb[0].mxu0
    %v2358 = vadd.f32 0.0, %v2357
    %v2359 = vpop.f32.mrb[0].mxu0
    %2360 = vmatprep.mubr.f32.mxu0 0.0
    %2361 = vmatmul.mubr.f32.gmra.mrb[0].mxu0 %v2279
    %v2362 = vpop.f32.mrb[0].mxu0
    %v2363 = vadd.f32 0.0, %v2362
    %v2364 = vpop.f32.mrb[0].mxu0
    %2365 = vdwg.mxu0
    %2370 = vrot.lane.b32.xlu0 %v2348, 96
    %v2371 = vpop.permute.xlu0 %2370
    %2372 = vrot.lane.b32.xlu0 %v2353, 96
    %v2373 = vpop.permute.xlu0 %2372
    %2374 = vrot.lane.b32.xlu0 %v2358, 96
    %v2375 = vpop.permute.xlu0 %2374
    %2376 = vrot.lane.b32.xlu0 %v2363, 96
    %v2377 = vpop.permute.xlu0 %2376
    %v2382 = vadd.f32 %v557, %v2371
    %v2383 = vadd.f32 %v562, %v2373
    %v2384 = vadd.f32 %v567, %v2375
    %v2385 = vadd.f32 %v572, %v2377
    %v2386 = vxor.u32 %v2382, 2147483648
    %v2387 = vxor.u32 %v2383, 2147483648
    %v2388 = vxor.u32 %v2384, 2147483648
    %v2389 = vxor.u32 %v2385, 2147483648
    %v2390 = vmul.f32 %v2386, 1.442695
    %v2391 = vpow.pop %v2390
    %v2392 = vmul.f32 %v2387, 1.442695
    %v2393 = vpow.pop %v2392
    %v2394 = vmul.f32 %v2388, 1.442695
    %v2395 = vpow.pop %v2394
    %v2396 = vmul.f32 %v2389, 1.442695
    %v2397 = vpow.pop %v2396
    %v2398 = vadd.f32 %v2391, 1.0
    %v2399 = vadd.f32 %v2393, 1.0
    %v2400 = vadd.f32 %v2395, 1.0
    %v2401 = vadd.f32 %v2397, 1.0
    %v2402 = vrcp.pop %v2398
    %v2403 = vmul.f32 1.0, %v2402
    %v2404 = vrcp.pop %v2399
    %v2405 = vmul.f32 1.0, %v2404
    %v2406 = vrcp.pop %v2400
    %v2407 = vmul.f32 1.0, %v2406
    %v2408 = vrcp.pop %v2401
    %v2409 = vmul.f32 1.0, %v2408
    %v2410 = vadd.f32 %v2348, %v2179
    %v2411 = vadd.f32 %v2353, %v2179
    %v2412 = vadd.f32 %v2358, %v2179
    %v2413 = vadd.f32 %v2363, %v2179
    %2418 = vrot.lane.b32.xlu0 %v2410, 88
    %v2419 = vpop.permute.xlu0 %2418
    %2420 = vrot.lane.b32.xlu0 %v2411, 88
    %v2421 = vpop.permute.xlu0 %2420
    %2422 = vrot.lane.b32.xlu0 %v2412, 88
    %v2423 = vpop.permute.xlu0 %2422
    %2424 = vrot.lane.b32.xlu0 %v2413, 88
    %v2425 = vpop.permute.xlu0 %2424
    %v2430 = vmul.f32 %v2403, %v2419
    %v2431 = vmul.f32 %v2405, %v2421
    %v2432 = vmul.f32 %v2407, %v2423
    %v2433 = vmul.f32 %v2409, %v2425
    %2438 = vrot.lane.b32.xlu0 %v2430, 8
    %v2439 = vpop.permute.xlu0 %2438
    %2440 = vrot.lane.b32.xlu0 %v2431, 8
    %v2441 = vpop.permute.xlu0 %2440
    %2442 = vrot.lane.b32.xlu0 %v2432, 8
    %v2443 = vpop.permute.xlu0 %2442
    %2444 = vrot.lane.b32.xlu0 %v2433, 8
    %v2445 = vpop.permute.xlu0 %2444
    %v2450 = vadd.f32 %v557, %v2439
    %v2451 = vadd.f32 %v562, %v2441
    %v2452 = vadd.f32 %v567, %v2443
    %v2453 = vadd.f32 %v572, %v2445
    %v2454 = vtanh.pop %v2450
    %v2455 = vtanh.pop %v2451
    %v2456 = vtanh.pop %v2452
    %v2457 = vtanh.pop %v2453
    %v2458 = vsub.f32 1.0, %v2403
    %v2459 = vsub.f32 1.0, %v2405
    %v2460 = vsub.f32 1.0, %v2407
    %v2461 = vsub.f32 1.0, %v2409
    %2466 = vrot.lane.b32.xlu0 %v2454, 124
    %v2467 = vpop.permute.xlu0 %2466
    %2468 = vrot.lane.b32.xlu0 %v2455, 124
    %v2469 = vpop.permute.xlu0 %2468
    %2470 = vrot.lane.b32.xlu0 %v2456, 124
    %v2471 = vpop.permute.xlu0 %2470
    %2472 = vrot.lane.b32.xlu0 %v2457, 124
    %v2473 = vpop.permute.xlu0 %2472
    %v2478 = vmul.f32 %v2458, %v2467
    %v2479 = vmul.f32 %v2459, %v2469
    %v2480 = vmul.f32 %v2460, %v2471
    %v2481 = vmul.f32 %v2461, %v2473
    %v2482 = vmul.f32 %v2403, %v2257
    %v2483 = vmul.f32 %v2405, %v2258
    %v2484 = vmul.f32 %v2407, %v2259
    %v2485 = vmul.f32 %v2409, %v2260
    %v2486 = vadd.f32 %v2478, %v2482
    %v2487 = vadd.f32 %v2479, %v2483
    %v2488 = vadd.f32 %v2480, %v2484
    %v2489 = vadd.f32 %v2481, %v2485
    %2494 = vrot.lane.b32.xlu0 %v2486, 28
    %v2495 = vpop.permute.xlu0 %2494
    %2496 = vrot.lane.b32.xlu0 %v2487, 28
    %v2497 = vpop.permute.xlu0 %2496
    %2498 = vrot.lane.b32.xlu0 %v2488, 28
    %v2499 = vpop.permute.xlu0 %2498
    %2500 = vrot.lane.b32.xlu0 %v2489, 28
    %v2501 = vpop.permute.xlu0 %2500
    %v2502 = vsel %vm2037, %v2495, 0
    %v2504 = vsel %vm2037, %v2497, 0
    %v2506 = vsel %vm2037, %v2499, 0
    %v2508 = vsel %vm2037, %v2501, 0
    %2510 = vmatprep.subr.mxu0 0.0
    %2511 = vmatpush1.msra.mxu0 %v2042
    %2512 = vmatprep.subr.mxu0 0.0
    %2513 = vmatpush1.msra.mxu0 0.0
    %2514 = vmatprep.subr.mxu0 0.0
    %2515 = vmatpush1.msra.mxu0 0.0
    %2516 = vmatprep.subr.mxu0 0.0
    %2517 = vmatpush1.msra.mxu0 0.0
    %2518 = vmatprep.subr.mxu0 0.0
    %2519 = vmatpush1.msra.mxu0 0.0
    %2520 = vmatprep.subr.mxu0 0.0
    %2521 = vmatpush1.msra.mxu0 0.0
    %2522 = vmatprep.subr.mxu0 0.0
    %2523 = vmatpush1.msra.mxu0 0.0
    %2524 = vmatprep.subr.mxu0 0.0
    %2525 = vmatpush1.msra.mxu0 0.0
    %2526 = vmatprep.subr.mxu0 0.0
    %2527 = vmatpush1.msra.mxu0 0.0
    %2528 = vmatprep.subr.mxu0 0.0
    %2529 = vmatpush1.msra.mxu0 0.0
    %2530 = vmatprep.subr.mxu0 0.0
    %2531 = vmatpush1.msra.mxu0 0.0
    %2532 = vmatprep.subr.mxu0 0.0
    %2533 = vmatpush1.msra.mxu0 0.0
    %2534 = vmatprep.subr.mxu0 0.0
    %2535 = vmatpush1.msra.mxu0 0.0
    %2536 = vmatprep.subr.mxu0 0.0
    %2537 = vmatpush1.msra.mxu0 0.0
    %2538 = vmatprep.subr.mxu0 0.0
    %2539 = vmatpush1.msra.mxu0 0.0
    %2540 = vmatprep.subr.mxu0 0.0
    %2541 = vmatpush1.msra.mxu0 0.0
    %2542 = vmatprep.subr.mxu0 0.0
    %2543 = vmatpush1.msra.mxu0 0.0
    %2544 = vmatprep.subr.mxu0 0.0
    %2545 = vmatpush1.msra.mxu0 0.0
    %2546 = vmatprep.subr.mxu0 0.0
    %2547 = vmatpush1.msra.mxu0 0.0
    %2548 = vmatprep.subr.mxu0 0.0
    %2549 = vmatpush1.msra.mxu0 0.0
    %2550 = vmatprep.subr.mxu0 0.0
    %2551 = vmatpush1.msra.mxu0 0.0
    %2552 = vmatprep.subr.mxu0 0.0
    %2553 = vmatpush1.msra.mxu0 0.0
    %2554 = vmatprep.subr.mxu0 0.0
    %2555 = vmatpush1.msra.mxu0 0.0
    %2556 = vmatprep.subr.mxu0 0.0
    %2557 = vmatpush1.msra.mxu0 0.0
    %2558 = vmatprep.subr.mxu0 0.0
    %2559 = vmatpush1.msra.mxu0 0.0
    %2560 = vmatprep.subr.mxu0 0.0
    %2561 = vmatpush1.msra.mxu0 0.0
    %2562 = vmatprep.subr.mxu0 0.0
    %2563 = vmatpush1.msra.mxu0 0.0
    %2564 = vmatprep.subr.mxu0 0.0
    %2565 = vmatpush1.msra.mxu0 0.0
    %2566 = vmatprep.subr.mxu0 0.0
    %2567 = vmatpush1.msra.mxu0 0.0
    %2568 = vmatprep.subr.mxu0 0.0
    %2569 = vmatpush1.msra.mxu0 0.0
    %2570 = vmatprep.subr.mxu0 0.0
    %2571 = vmatpush1.msra.mxu0 0.0
    %2572 = vmatprep.subr.mxu0 0.0
    %2573 = vmatpush1.msra.mxu0 0.0
    %2574 = vmatprep.mubr.f32.mxu0 0.0
    %2575 = vmatmul.mubr.f32.gmra.mrb[0].mxu0 %v2502
    %v2576 = vpop.f32.mrb[0].mxu0
    %v2577 = vadd.f32 0.0, %v2576
    %v2578 = vpop.f32.mrb[0].mxu0
    %2579 = vmatprep.mubr.f32.mxu0 0.0
    %2580 = vmatmul.mubr.f32.gmra.mrb[0].mxu0 %v2504
    %v2581 = vpop.f32.mrb[0].mxu0
    %v2582 = vadd.f32 0.0, %v2581
    %v2583 = vpop.f32.mrb[0].mxu0
    %2584 = vmatprep.mubr.f32.mxu0 0.0
    %2585 = vmatmul.mubr.f32.gmra.mrb[0].mxu0 %v2506
    %v2586 = vpop.f32.mrb[0].mxu0
    %v2587 = vadd.f32 0.0, %v2586
    %v2588 = vpop.f32.mrb[0].mxu0
    %2589 = vmatprep.mubr.f32.mxu0 0.0
    %2590 = vmatmul.mubr.f32.gmra.mrb[0].mxu0 %v2508
    %v2591 = vpop.f32.mrb[0].mxu0
    %v2592 = vadd.f32 0.0, %v2591
    %v2593 = vpop.f32.mrb[0].mxu0
    %2594 = vdwg.mxu0
    %2599 = vrot.lane.b32.xlu0 %v2577, 96
    %v2600 = vpop.permute.xlu0 %2599
    %2601 = vrot.lane.b32.xlu0 %v2582, 96
    %v2602 = vpop.permute.xlu0 %2601
    %2603 = vrot.lane.b32.xlu0 %v2587, 96
    %v2604 = vpop.permute.xlu0 %2603
    %2605 = vrot.lane.b32.xlu0 %v2592, 96
    %v2606 = vpop.permute.xlu0 %2605
    %v2611 = vadd.f32 %v577, %v2600
    %v2612 = vadd.f32 %v582, %v2602
    %v2613 = vadd.f32 %v587, %v2604
    %v2614 = vadd.f32 %v592, %v2606
    %v2615 = vxor.u32 %v2611, 2147483648
    %v2616 = vxor.u32 %v2612, 2147483648
    %v2617 = vxor.u32 %v2613, 2147483648
    %v2618 = vxor.u32 %v2614, 2147483648
    %v2619 = vmul.f32 %v2615, 1.442695
    %v2620 = vpow.pop %v2619
    %v2621 = vmul.f32 %v2616, 1.442695
    %v2622 = vpow.pop %v2621
    %v2623 = vmul.f32 %v2617, 1.442695
    %v2624 = vpow.pop %v2623
    %v2625 = vmul.f32 %v2618, 1.442695
    %v2626 = vpow.pop %v2625
    %v2627 = vadd.f32 %v2620, 1.0
    %v2628 = vadd.f32 %v2622, 1.0
    %v2629 = vadd.f32 %v2624, 1.0
    %v2630 = vadd.f32 %v2626, 1.0
    %v2631 = vrcp.pop %v2627
    %v2632 = vmul.f32 1.0, %v2631
    %v2633 = vrcp.pop %v2628
    %v2634 = vmul.f32 1.0, %v2633
    %v2635 = vrcp.pop %v2629
    %v2636 = vmul.f32 1.0, %v2635
    %v2637 = vrcp.pop %v2630
    %v2638 = vmul.f32 1.0, %v2637
    %v2639 = vadd.f32 %v2577, %v2179
    %v2640 = vadd.f32 %v2582, %v2179
    %v2641 = vadd.f32 %v2587, %v2179
    %v2642 = vadd.f32 %v2592, %v2179
    %2647 = vrot.lane.b32.xlu0 %v2639, 88
    %v2648 = vpop.permute.xlu0 %2647
    %2649 = vrot.lane.b32.xlu0 %v2640, 88
    %v2650 = vpop.permute.xlu0 %2649
    %2651 = vrot.lane.b32.xlu0 %v2641, 88
    %v2652 = vpop.permute.xlu0 %2651
    %2653 = vrot.lane.b32.xlu0 %v2642, 88
    %v2654 = vpop.permute.xlu0 %2653
    %v2659 = vmul.f32 %v2632, %v2648
    %v2660 = vmul.f32 %v2634, %v2650
    %v2661 = vmul.f32 %v2636, %v2652
    %v2662 = vmul.f32 %v2638, %v2654
    %2667 = vrot.lane.b32.xlu0 %v2659, 8
    %v2668 = vpop.permute.xlu0 %2667
    %2669 = vrot.lane.b32.xlu0 %v2660, 8
    %v2670 = vpop.permute.xlu0 %2669
    %2671 = vrot.lane.b32.xlu0 %v2661, 8
    %v2672 = vpop.permute.xlu0 %2671
    %2673 = vrot.lane.b32.xlu0 %v2662, 8
    %v2674 = vpop.permute.xlu0 %2673
    %v2679 = vadd.f32 %v577, %v2668
    %v2680 = vadd.f32 %v582, %v2670
    %v2681 = vadd.f32 %v587, %v2672
    %v2682 = vadd.f32 %v592, %v2674
    %v2683 = vtanh.pop %v2679
    %v2684 = vtanh.pop %v2680
    %v2685 = vtanh.pop %v2681
    %v2686 = vtanh.pop %v2682
    %v2687 = vsub.f32 1.0, %v2632
    %v2688 = vsub.f32 1.0, %v2634
    %v2689 = vsub.f32 1.0, %v2636
    %v2690 = vsub.f32 1.0, %v2638
    %2695 = vrot.lane.b32.xlu0 %v2683, 124
    %v2696 = vpop.permute.xlu0 %2695
    %2697 = vrot.lane.b32.xlu0 %v2684, 124
    %v2698 = vpop.permute.xlu0 %2697
    %2699 = vrot.lane.b32.xlu0 %v2685, 124
    %v2700 = vpop.permute.xlu0 %2699
    %2701 = vrot.lane.b32.xlu0 %v2686, 124
    %v2702 = vpop.permute.xlu0 %2701
    %v2707 = vmul.f32 %v2687, %v2696
    %v2708 = vmul.f32 %v2688, %v2698
    %v2709 = vmul.f32 %v2689, %v2700
    %v2710 = vmul.f32 %v2690, %v2702
    %v2711 = vmul.f32 %v2632, %v2486
    %v2712 = vmul.f32 %v2634, %v2487
    %v2713 = vmul.f32 %v2636, %v2488
    %v2714 = vmul.f32 %v2638, %v2489
    %v2715 = vadd.f32 %v2707, %v2711
    %v2716 = vadd.f32 %v2708, %v2712
    %v2717 = vadd.f32 %v2709, %v2713
    %v2718 = vadd.f32 %v2710, %v2714
    %v2719 = vld [vmem:[%s9] sm:$0xff]
    %v2720 = vld [vmem:[%s9 + $0x8] sm:$0xff]
    %v2721 = vld [vmem:[%s9 + $0x10] sm:$0xff]
    %v2722 = vld [vmem:[%s9 + $0x18] sm:$0xff]
    %v2723 = vld [vmem:[%s11] sm:$0x1]
    %v2725 = vlaneseq
    %v2726 = vshrl.u32 %v2725, 7
    %v2727 = vsub.s32 0, %v2726
    %v2728 = vrot.slane %v2723, %v2727
    %2731 = vrot.lane.b32.xlu0 %v2036, 96
    %v2732 = vpop.permute.xlu0 %2731
    %v2733 = vsel %vm602, %v2732, 0
    %2735 = vmatprep.subr.mxu0 0.0
    %2736 = vmatpush1.msra.mxu0 %v2719
    %2737 = vmatprep.subr.mxu0 0.0
    %2738 = vmatpush1.msra.mxu0 %v2720
    %2739 = vmatprep.subr.mxu0 0.0
    %2740 = vmatpush1.msra.mxu0 %v2721
    %2741 = vmatprep.subr.mxu0 0.0
    %2742 = vmatpush1.msra.mxu0 %v2722
    %2743 = vmatprep.subr.mxu0 0.0
    %2744 = vmatpush1.msra.mxu0 0.0
    %2745 = vmatprep.subr.mxu0 0.0
    %2746 = vmatpush1.msra.mxu0 0.0
    %2747 = vmatprep.subr.mxu0 0.0
    %2748 = vmatpush1.msra.mxu0 0.0
    %2749 = vmatprep.subr.mxu0 0.0
    %2750 = vmatpush1.msra.mxu0 0.0
    %2751 = vmatprep.subr.mxu0 0.0
    %2752 = vmatpush1.msra.mxu0 0.0
    %2753 = vmatprep.subr.mxu0 0.0
    %2754 = vmatpush1.msra.mxu0 0.0
    %2755 = vmatprep.subr.mxu0 0.0
    %2756 = vmatpush1.msra.mxu0 0.0
    %2757 = vmatprep.subr.mxu0 0.0
    %2758 = vmatpush1.msra.mxu0 0.0
    %2759 = vmatprep.subr.mxu0 0.0
    %2760 = vmatpush1.msra.mxu0 0.0
    %2761 = vmatprep.subr.mxu0 0.0
    %2762 = vmatpush1.msra.mxu0 0.0
    %2763 = vmatprep.subr.mxu0 0.0
    %2764 = vmatpush1.msra.mxu0 0.0
    %2765 = vmatprep.subr.mxu0 0.0
    %2766 = vmatpush1.msra.mxu0 0.0
    %2767 = vmatprep.subr.mxu0 0.0
    %2768 = vmatpush1.msra.mxu0 0.0
    %2769 = vmatprep.subr.mxu0 0.0
    %2770 = vmatpush1.msra.mxu0 0.0
    %2771 = vmatprep.subr.mxu0 0.0
    %2772 = vmatpush1.msra.mxu0 0.0
    %2773 = vmatprep.subr.mxu0 0.0
    %2774 = vmatpush1.msra.mxu0 0.0
    %2775 = vmatprep.subr.mxu0 0.0
    %2776 = vmatpush1.msra.mxu0 0.0
    %2777 = vmatprep.subr.mxu0 0.0
    %2778 = vmatpush1.msra.mxu0 0.0
    %2779 = vmatprep.subr.mxu0 0.0
    %2780 = vmatpush1.msra.mxu0 0.0
    %2781 = vmatprep.subr.mxu0 0.0
    %2782 = vmatpush1.msra.mxu0 0.0
    %2783 = vmatprep.subr.mxu0 0.0
    %2784 = vmatpush1.msra.mxu0 0.0
    %2785 = vmatprep.subr.mxu0 0.0
    %2786 = vmatpush1.msra.mxu0 0.0
    %2787 = vmatprep.subr.mxu0 0.0
    %2788 = vmatpush1.msra.mxu0 0.0
    %2789 = vmatprep.subr.mxu0 0.0
    %2790 = vmatpush1.msra.mxu0 0.0
    %2791 = vmatprep.subr.mxu0 0.0
    %2792 = vmatpush1.msra.mxu0 0.0
    %2793 = vmatprep.subr.mxu0 0.0
    %2794 = vmatpush1.msra.mxu0 0.0
    %2795 = vmatprep.subr.mxu0 0.0
    %2796 = vmatpush1.msra.mxu0 0.0
    %2797 = vmatprep.subr.mxu0 0.0
    %2798 = vmatpush1.msra.mxu0 0.0
    %2799 = vmatprep.mubr.f32.mxu0 0.0
    %2800 = vmatmul.mubr.f32.gmra.mrb[0].mxu0 %v2733
    %v2801 = vpop.f32.mrb[0].mxu0
    %v2802 = vadd.f32 %v2728, %v2801
    %v2803 = vpop.f32.mrb[0].mxu0
    %2804 = vdwg.mxu0
    %v2805 = vld [vmem:[%s10] sm:$0xf]
    %2807 = vrot.lane.b32.xlu0 %v2715, 28
    %v2808 = vpop.permute.xlu0 %2807
    %v2809 = vsel %vm2037, %v2808, 0
    %v2812 = vsel %vm2040, %v2805, 0
    %2814 = vmatprep.subr.mxu0 0.0
    %2815 = vmatpush1.msra.mxu0 %v2812
    %2816 = vmatprep.subr.mxu0 0.0
    %2817 = vmatpush1.msra.mxu0 0.0
    %2818 = vmatprep.subr.mxu0 0.0
    %2819 = vmatpush1.msra.mxu0 0.0
    %2820 = vmatprep.subr.mxu0 0.0
    %2821 = vmatpush1.msra.mxu0 0.0
    %2822 = vmatprep.subr.mxu0 0.0
    %2823 = vmatpush1.msra.mxu0 0.0
    %2824 = vmatprep.subr.mxu0 0.0
    %2825 = vmatpush1.msra.mxu0 0.0
    %2826 = vmatprep.subr.mxu0 0.0
    %2827 = vmatpush1.msra.mxu0 0.0
    %2828 = vmatprep.subr.mxu0 0.0
    %2829 = vmatpush1.msra.mxu0 0.0
    %2830 = vmatprep.subr.mxu0 0.0
    %2831 = vmatpush1.msra.mxu0 0.0
    %2832 = vmatprep.subr.mxu0 0.0
    %2833 = vmatpush1.msra.mxu0 0.0
    %2834 = vmatprep.subr.mxu0 0.0
    %2835 = vmatpush1.msra.mxu0 0.0
    %2836 = vmatprep.subr.mxu0 0.0
    %2837 = vmatpush1.msra.mxu0 0.0
    %2838 = vmatprep.subr.mxu0 0.0
    %2839 = vmatpush1.msra.mxu0 0.0
    %2840 = vmatprep.subr.mxu0 0.0
    %2841 = vmatpush1.msra.mxu0 0.0
    %2842 = vmatprep.subr.mxu0 0.0
    %2843 = vmatpush1.msra.mxu0 0.0
    %2844 = vmatprep.subr.mxu0 0.0
    %2845 = vmatpush1.msra.mxu0 0.0
    %2846 = vmatprep.subr.mxu0 0.0
    %2847 = vmatpush1.msra.mxu0 0.0
    %2848 = vmatprep.subr.mxu0 0.0
    %2849 = vmatpush1.msra.mxu0 0.0
    %2850 = vmatprep.subr.mxu0 0.0
    %2851 = vmatpush1.msra.mxu0 0.0
    %2852 = vmatprep.subr.mxu0 0.0
    %2853 = vmatpush1.msra.mxu0 0.0
    %2854 = vmatprep.subr.mxu0 0.0
    %2855 = vmatpush1.msra.mxu0 0.0
    %2856 = vmatprep.subr.mxu0 0.0
    %2857 = vmatpush1.msra.mxu0 0.0
    %2858 = vmatprep.subr.mxu0 0.0
    %2859 = vmatpush1.msra.mxu0 0.0
    %2860 = vmatprep.subr.mxu0 0.0
    %2861 = vmatpush1.msra.mxu0 0.0
    %2862 = vmatprep.subr.mxu0 0.0
    %2863 = vmatpush1.msra.mxu0 0.0
    %2864 = vmatprep.subr.mxu0 0.0
    %2865 = vmatpush1.msra.mxu0 0.0
    %2866 = vmatprep.subr.mxu0 0.0
    %2867 = vmatpush1.msra.mxu0 0.0
    %2868 = vmatprep.subr.mxu0 0.0
    %2869 = vmatpush1.msra.mxu0 0.0
    %2870 = vmatprep.subr.mxu0 0.0
    %2871 = vmatpush1.msra.mxu0 0.0
    %2872 = vmatprep.subr.mxu0 0.0
    %2873 = vmatpush1.msra.mxu0 0.0
    %2874 = vmatprep.subr.mxu0 0.0
    %2875 = vmatpush1.msra.mxu0 0.0
    %2876 = vmatprep.subr.mxu0 0.0
    %2877 = vmatpush1.msra.mxu0 0.0
    %2878 = vmatprep.mubr.f32.mxu0 0.0
    %2879 = vmatmul.mubr.f32.gmra.mrb[0].mxu0 %v2809
    %v2880 = vpop.f32.mrb[0].mxu0
    %v2881 = vadd.f32 0.0, %v2880
    %v2882 = vpop.f32.mrb[0].mxu0
    %2883 = vdwg.mxu0
    %v2884 = vadd.f32 %v2802, %v2881
    %s2885 = scalar_lea.vmem %s10, 4
    %v2886 = vld [vmem:[%s2885] sm:$0xf]
    %2888 = vrot.lane.b32.xlu0 %v2716, 28
    %v2889 = vpop.permute.xlu0 %2888
    %v2890 = vsel %vm2037, %v2889, 0
    %v2893 = vsel %vm2040, %v2886, 0
    %2895 = vmatprep.subr.mxu0 0.0
    %2896 = vmatpush1.msra.mxu0 %v2893
    %2897 = vmatprep.subr.mxu0 0.0
    %2898 = vmatpush1.msra.mxu0 0.0
    %2899 = vmatprep.subr.mxu0 0.0
    %2900 = vmatpush1.msra.mxu0 0.0
    %2901 = vmatprep.subr.mxu0 0.0
    %2902 = vmatpush1.msra.mxu0 0.0
    %2903 = vmatprep.subr.mxu0 0.0
    %2904 = vmatpush1.msra.mxu0 0.0
    %2905 = vmatprep.subr.mxu0 0.0
    %2906 = vmatpush1.msra.mxu0 0.0
    %2907 = vmatprep.subr.mxu0 0.0
    %2908 = vmatpush1.msra.mxu0 0.0
    %2909 = vmatprep.subr.mxu0 0.0
    %2910 = vmatpush1.msra.mxu0 0.0
    %2911 = vmatprep.subr.mxu0 0.0
    %2912 = vmatpush1.msra.mxu0 0.0
    %2913 = vmatprep.subr.mxu0 0.0
    %2914 = vmatpush1.msra.mxu0 0.0
    %2915 = vmatprep.subr.mxu0 0.0
    %2916 = vmatpush1.msra.mxu0 0.0
    %2917 = vmatprep.subr.mxu0 0.0
    %2918 = vmatpush1.msra.mxu0 0.0
    %2919 = vmatprep.subr.mxu0 0.0
    %2920 = vmatpush1.msra.mxu0 0.0
    %2921 = vmatprep.subr.mxu0 0.0
    %2922 = vmatpush1.msra.mxu0 0.0
    %2923 = vmatprep.subr.mxu0 0.0
    %2924 = vmatpush1.msra.mxu0 0.0
    %2925 = vmatprep.subr.mxu0 0.0
    %2926 = vmatpush1.msra.mxu0 0.0
    %2927 = vmatprep.subr.mxu0 0.0
    %2928 = vmatpush1.msra.mxu0 0.0
    %2929 = vmatprep.subr.mxu0 0.0
    %2930 = vmatpush1.msra.mxu0 0.0
    %2931 = vmatprep.subr.mxu0 0.0
    %2932 = vmatpush1.msra.mxu0 0.0
    %2933 = vmatprep.subr.mxu0 0.0
    %2934 = vmatpush1.msra.mxu0 0.0
    %2935 = vmatprep.subr.mxu0 0.0
    %2936 = vmatpush1.msra.mxu0 0.0
    %2937 = vmatprep.subr.mxu0 0.0
    %2938 = vmatpush1.msra.mxu0 0.0
    %2939 = vmatprep.subr.mxu0 0.0
    %2940 = vmatpush1.msra.mxu0 0.0
    %2941 = vmatprep.subr.mxu0 0.0
    %2942 = vmatpush1.msra.mxu0 0.0
    %2943 = vmatprep.subr.mxu0 0.0
    %2944 = vmatpush1.msra.mxu0 0.0
    %2945 = vmatprep.subr.mxu0 0.0
    %2946 = vmatpush1.msra.mxu0 0.0
    %2947 = vmatprep.subr.mxu0 0.0
    %2948 = vmatpush1.msra.mxu0 0.0
    %2949 = vmatprep.subr.mxu0 0.0
    %2950 = vmatpush1.msra.mxu0 0.0
    %2951 = vmatprep.subr.mxu0 0.0
    %2952 = vmatpush1.msra.mxu0 0.0
    %2953 = vmatprep.subr.mxu0 0.0
    %2954 = vmatpush1.msra.mxu0 0.0
    %2955 = vmatprep.subr.mxu0 0.0
    %2956 = vmatpush1.msra.mxu0 0.0
    %2957 = vmatprep.subr.mxu0 0.0
    %2958 = vmatpush1.msra.mxu0 0.0
    %2959 = vmatprep.mubr.f32.mxu0 0.0
    %2960 = vmatmul.mubr.f32.gmra.mrb[0].mxu0 %v2890
    %v2961 = vpop.f32.mrb[0].mxu0
    %v2962 = vadd.f32 0.0, %v2961
    %v2963 = vpop.f32.mrb[0].mxu0
    %2964 = vdwg.mxu0
    %v2965 = vadd.f32 %v2884, %v2962
    %s2966 = scalar_lea.vmem %s10, 8
    %v2967 = vld [vmem:[%s2966] sm:$0xf]
    %2969 = vrot.lane.b32.xlu0 %v2717, 28
    %v2970 = vpop.permute.xlu0 %2969
    %v2971 = vsel %vm2037, %v2970, 0
    %v2974 = vsel %vm2040, %v2967, 0
    %2976 = vmatprep.subr.mxu0 0.0
    %2977 = vmatpush1.msra.mxu0 %v2974
    %2978 = vmatprep.subr.mxu0 0.0
    %2979 = vmatpush1.msra.mxu0 0.0
    %2980 = vmatprep.subr.mxu0 0.0
    %2981 = vmatpush1.msra.mxu0 0.0
    %2982 = vmatprep.subr.mxu0 0.0
    %2983 = vmatpush1.msra.mxu0 0.0
    %2984 = vmatprep.subr.mxu0 0.0
    %2985 = vmatpush1.msra.mxu0 0.0
    %2986 = vmatprep.subr.mxu0 0.0
    %2987 = vmatpush1.msra.mxu0 0.0
    %2988 = vmatprep.subr.mxu0 0.0
    %2989 = vmatpush1.msra.mxu0 0.0
    %2990 = vmatprep.subr.mxu0 0.0
    %2991 = vmatpush1.msra.mxu0 0.0
    %2992 = vmatprep.subr.mxu0 0.0
    %2993 = vmatpush1.msra.mxu0 0.0
    %2994 = vmatprep.subr.mxu0 0.0
    %2995 = vmatpush1.msra.mxu0 0.0
    %2996 = vmatprep.subr.mxu0 0.0
    %2997 = vmatpush1.msra.mxu0 0.0
    %2998 = vmatprep.subr.mxu0 0.0
    %2999 = vmatpush1.msra.mxu0 0.0
    %3000 = vmatprep.subr.mxu0 0.0
    %3001 = vmatpush1.msra.mxu0 0.0
    %3002 = vmatprep.subr.mxu0 0.0
    %3003 = vmatpush1.msra.mxu0 0.0
    %3004 = vmatprep.subr.mxu0 0.0
    %3005 = vmatpush1.msra.mxu0 0.0
    %3006 = vmatprep.subr.mxu0 0.0
    %3007 = vmatpush1.msra.mxu0 0.0
    %3008 = vmatprep.subr.mxu0 0.0
    %3009 = vmatpush1.msra.mxu0 0.0
    %3010 = vmatprep.subr.mxu0 0.0
    %3011 = vmatpush1.msra.mxu0 0.0
    %3012 = vmatprep.subr.mxu0 0.0
    %3013 = vmatpush1.msra.mxu0 0.0
    %3014 = vmatprep.subr.mxu0 0.0
    %3015 = vmatpush1.msra.mxu0 0.0
    %3016 = vmatprep.subr.mxu0 0.0
    %3017 = vmatpush1.msra.mxu0 0.0
    %3018 = vmatprep.subr.mxu0 0.0
    %3019 = vmatpush1.msra.mxu0 0.0
    %3020 = vmatprep.subr.mxu0 0.0
    %3021 = vmatpush1.msra.mxu0 0.0
    %3022 = vmatprep.subr.mxu0 0.0
    %3023 = vmatpush1.msra.mxu0 0.0
    %3024 = vmatprep.subr.mxu0 0.0
    %3025 = vmatpush1.msra.mxu0 0.0
    %3026 = vmatprep.subr.mxu0 0.0
    %3027 = vmatpush1.msra.mxu0 0.0
    %3028 = vmatprep.subr.mxu0 0.0
    %3029 = vmatpush1.msra.mxu0 0.0
    %3030 = vmatprep.subr.mxu0 0.0
    %3031 = vmatpush1.msra.mxu0 0.0
    %3032 = vmatprep.subr.mxu0 0.0
    %3033 = vmatpush1.msra.mxu0 0.0
    %3034 = vmatprep.subr.mxu0 0.0
    %3035 = vmatpush1.msra.mxu0 0.0
    %3036 = vmatprep.subr.mxu0 0.0
    %3037 = vmatpush1.msra.mxu0 0.0
    %3038 = vmatprep.subr.mxu0 0.0
    %3039 = vmatpush1.msra.mxu0 0.0
    %3040 = vmatprep.mubr.f32.mxu0 0.0
    %3041 = vmatmul.mubr.f32.gmra.mrb[0].mxu0 %v2971
    %v3042 = vpop.f32.mrb[0].mxu0
    %v3043 = vadd.f32 0.0, %v3042
    %v3044 = vpop.f32.mrb[0].mxu0
    %3045 = vdwg.mxu0
    %v3046 = vadd.f32 %v2965, %v3043
    %s3047 = scalar_lea.vmem %s10, 12
    %v3048 = vld [vmem:[%s3047] sm:$0xf]
    %3050 = vrot.lane.b32.xlu0 %v2718, 28
    %v3051 = vpop.permute.xlu0 %3050
    %v3052 = vsel %vm2037, %v3051, 0
    %v3055 = vsel %vm2040, %v3048, 0
    %3057 = vmatprep.subr.mxu0 0.0
    %3058 = vmatpush1.msra.mxu0 %v3055
    %3059 = vmatprep.subr.mxu0 0.0
    %3060 = vmatpush1.msra.mxu0 0.0
    %3061 = vmatprep.subr.mxu0 0.0
    %3062 = vmatpush1.msra.mxu0 0.0
    %3063 = vmatprep.subr.mxu0 0.0
    %3064 = vmatpush1.msra.mxu0 0.0
    %3065 = vmatprep.subr.mxu0 0.0
    %3066 = vmatpush1.msra.mxu0 0.0
    %3067 = vmatprep.subr.mxu0 0.0
    %3068 = vmatpush1.msra.mxu0 0.0
    %3069 = vmatprep.subr.mxu0 0.0
    %3070 = vmatpush1.msra.mxu0 0.0
    %3071 = vmatprep.subr.mxu0 0.0
    %3072 = vmatpush1.msra.mxu0 0.0
    %3073 = vmatprep.subr.mxu0 0.0
    %3074 = vmatpush1.msra.mxu0 0.0
    %3075 = vmatprep.subr.mxu0 0.0
    %3076 = vmatpush1.msra.mxu0 0.0
    %3077 = vmatprep.subr.mxu0 0.0
    %3078 = vmatpush1.msra.mxu0 0.0
    %3079 = vmatprep.subr.mxu0 0.0
    %3080 = vmatpush1.msra.mxu0 0.0
    %3081 = vmatprep.subr.mxu0 0.0
    %3082 = vmatpush1.msra.mxu0 0.0
    %3083 = vmatprep.subr.mxu0 0.0
    %3084 = vmatpush1.msra.mxu0 0.0
    %3085 = vmatprep.subr.mxu0 0.0
    %3086 = vmatpush1.msra.mxu0 0.0
    %3087 = vmatprep.subr.mxu0 0.0
    %3088 = vmatpush1.msra.mxu0 0.0
    %3089 = vmatprep.subr.mxu0 0.0
    %3090 = vmatpush1.msra.mxu0 0.0
    %3091 = vmatprep.subr.mxu0 0.0
    %3092 = vmatpush1.msra.mxu0 0.0
    %3093 = vmatprep.subr.mxu0 0.0
    %3094 = vmatpush1.msra.mxu0 0.0
    %3095 = vmatprep.subr.mxu0 0.0
    %3096 = vmatpush1.msra.mxu0 0.0
    %3097 = vmatprep.subr.mxu0 0.0
    %3098 = vmatpush1.msra.mxu0 0.0
    %3099 = vmatprep.subr.mxu0 0.0
    %3100 = vmatpush1.msra.mxu0 0.0
    %3101 = vmatprep.subr.mxu0 0.0
    %3102 = vmatpush1.msra.mxu0 0.0
    %3103 = vmatprep.subr.mxu0 0.0
    %3104 = vmatpush1.msra.mxu0 0.0
    %3105 = vmatprep.subr.mxu0 0.0
    %3106 = vmatpush1.msra.mxu0 0.0
    %3107 = vmatprep.subr.mxu0 0.0
    %3108 = vmatpush1.msra.mxu0 0.0
    %3109 = vmatprep.subr.mxu0 0.0
    %3110 = vmatpush1.msra.mxu0 0.0
    %3111 = vmatprep.subr.mxu0 0.0
    %3112 = vmatpush1.msra.mxu0 0.0
    %3113 = vmatprep.subr.mxu0 0.0
    %3114 = vmatpush1.msra.mxu0 0.0
    %3115 = vmatprep.subr.mxu0 0.0
    %3116 = vmatpush1.msra.mxu0 0.0
    %3117 = vmatprep.subr.mxu0 0.0
    %3118 = vmatpush1.msra.mxu0 0.0
    %3119 = vmatprep.subr.mxu0 0.0
    %3120 = vmatpush1.msra.mxu0 0.0
    %3121 = vmatprep.mubr.f32.mxu0 0.0
    %3122 = vmatmul.mubr.f32.gmra.mrb[0].mxu0 %v3052
    %v3123 = vpop.f32.mrb[0].mxu0
    %v3124 = vadd.f32 0.0, %v3123
    %v3125 = vpop.f32.mrb[0].mxu0
    %3126 = vdwg.mxu0
    %v3127 = vadd.f32 %v3046, %v3124
    %s3128 = sld [smem:[#allocation3]]
    %v3129 = vstv %s3128
    %v3130 = vmul.f32 %v74, %v3129
    %s3131 = sld [smem:[#allocation3 + $0x1]]
    %v3132 = vstv %s3131
    %v3133 = vmul.f32 %v75, %v3132
    %v3134 = vadd.f32 %v3130, %v3133
    %s3135 = sld [smem:[#allocation3 + $0x2]]
    %v3136 = vstv %s3135
    %v3137 = vmul.f32 %v76, %v3136
    %v3138 = vadd.f32 %v3134, %v3137
    %s3139 = sld [smem:[#allocation3 + $0x3]]
    %v3140 = vstv %s3139
    %v3141 = vmul.f32 %v77, %v3140
    %v3142 = vadd.f32 %v3138, %v3141
    %v3143 = vadd.f32 %v3127, %v3142
    %s3144 = sld [smem:[#allocation2]]
    %v3145 = vstv %s3144
    %v3146 = vadd.f32 %v3143, %v3145
    %3147 = vst.msk [vmem:[#allocation6] sm:$0xff] %vm177, %v3146
    // Predicated region
    $region62: #{tpu_custom_call.1} parent=1 // pred_check
      _
    $region63: #{tpu_custom_call.1} parent=1 // pred_check_branch
      %3149 = sbr.rel (0) target = $region65
    $region64: #{tpu_custom_call.1} parent=1 // pred_region
      %s3151 = ssub.s32 128, 128
      %3152 = vsyncadd [#allocation4], %s3151
      %s3154 = sshll.u32 [#allocation6], 4
      %s3155 = int_to_ptr.vmem [resolvable:$true] %s3154
      %3157 = dma.vmem_to_hbm [thread:$0]  %s3155, 128, %s14, [#allocation4]
    $region65: #{tpu_custom_call.1} parent=1 // pred_fallthru
      _
    // Predicated region
    $region66: #{tpu_custom_call.1} parent=1 // pred_check
      _
    $region67: #{tpu_custom_call.1} parent=1 // pred_check_branch
      %3159 = sbr.rel (0) target = $region69
    $region68: #{tpu_custom_call.1} parent=1 // pred_region
      %3160 = dma.done [#allocation4], 128
    $region69: #{tpu_custom_call.1} parent=1 // pred_fallthru
      _
    %3161 = vsyncpa [#allocation4], 1
    %3162 = vsyncpa [#allocation5], 1

</llo_original>
